<compile_context>
chip_gen: v7x
topology: tpu7x:2x2x1
jax: 0.10.0
libtpu: 0.0.40
codegen_flags: <defaults>
</compile_context>

<pallas_src>
import functools

import numpy as np
import jax
import jax.numpy as jnp
from jax.experimental import pallas as pl
from jax.experimental.pallas import tpu as pltpu

BN_EPS = 1e-5


# --------------------------------------------------------------------------- #
# Pallas kernels
# --------------------------------------------------------------------------- #
def conv_block_kernel(x_ref, w_ref, p_ref, pt_ref, rsel_ref, csel_ref,
                      rowmask_ref, gamma_ref, beta_ref, o_ref, *, inv_cnt):
    """Fused Conv2d(3x3, pad=1, no bias) + BatchNorm2d(train batch stats) + ReLU + MaxPool2d(2,2).

    Batch-stacked layout: rows = (image, padded height), lanes = (channel, padded width).
      x_ref:       (T, K)       bf16, T = N*(H+2), K = Ci*(W+2); zero-padded input
      w_ref:       (3, K, M)    bf16 banded conv weights (dx taps + W-padding folded in), M = Co*W
      p_ref:       (M, Co)      f32 one-hot lane->channel projection for BN stats
      pt_ref:      (Co, M)      f32 transpose of p (channel->lane spread)
      rsel_ref:    (2, To, T-2) bf16 even/odd height-pool selection; skips cross-image garbage
                                rows and inserts the next layer's zero-pad rows
      csel_ref:    (2, M, Mo)   bf16 even/odd width-pool selection + lane remap into the next
                                layer's zero-padded lane layout
      rowmask_ref: (T-2, 1)     f32 1.0 on valid conv-output rows, 0.0 on cross-image rows
      gamma_ref:   (1, M)       f32 channel-tiled BN gamma
      beta_ref:    (1, M)       f32 channel-tiled BN beta
      o_ref:       (To, Mo)     bf16 pooled output == the next layer's padded input verbatim
    """
    T = x_ref.shape[0]
    xv = x_ref[...]

    # ---- conv: one batched banded matmul per row tap (rows stacked over the batch) -------
    s = jnp.dot(xv[0:T - 2, :], w_ref[0], preferred_element_type=jnp.float32)
    s = s + jnp.dot(xv[1:T - 1, :], w_ref[1], preferred_element_type=jnp.float32)
    s = s + jnp.dot(xv[2:T, :], w_ref[2], preferred_element_type=jnp.float32)

    # ---- BatchNorm2d training statistics folded into one per-lane affine -----------------
    # TODO(synk): at the real 224x224 / large-batch config accumulate sum/sumsq across a batch
    # grid (two passes) and use the shifted-variance formulation to avoid cancellation.
    sm = s * rowmask_ref[...]
    stats = jnp.concatenate(
        [jnp.sum(sm, axis=0, keepdims=True),
         jnp.sum(sm * s, axis=0, keepdims=True)], axis=0)                   # (2, M)
    tot = jnp.dot(jnp.dot(stats, p_ref[...], preferred_element_type=jnp.float32),
                  pt_ref[...], preferred_element_type=jnp.float32)          # (2, M)
    mean = tot[0:1, :] * inv_cnt
    var = tot[1:2, :] * inv_cnt - mean * mean        # biased variance (PyTorch training BN)
    scale = gamma_ref[...] * jax.lax.rsqrt(var + BN_EPS)
    shift = beta_ref[...] - mean * scale

    # ---- BN affine + ReLU (f32 on the VPU; v5e has no bf16 VPU) ---------------------------
    a = jnp.maximum(s * scale + shift, 0.0).astype(jnp.bfloat16)

    # ---- 2x2 stride-2 max-pool via precomputed 0/1 selection matmuls ----------------------
    # (the MXU is otherwise idle here; the same dots drop garbage rows and emit the next
    #  layer's zero-pad rows/lanes, so o_ref is that layer's input with no XLA fixup)
    rmax = jnp.maximum(
        jnp.dot(rsel_ref[0], a, preferred_element_type=jnp.float32),
        jnp.dot(rsel_ref[1], a, preferred_element_type=jnp.float32)).astype(jnp.bfloat16)
    out = jnp.maximum(
        jnp.dot(rmax, csel_ref[0], preferred_element_type=jnp.float32),
        jnp.dot(rmax, csel_ref[1], preferred_element_type=jnp.float32))
    o_ref[...] = out.astype(o_ref.dtype)


def mlp_kernel(x_ref, w1_ref, b1_ref, w2_ref, b2_ref, o_ref):
    """Classifier: Linear -> Linear (no activation in between, as in the module)."""
    h = jnp.dot(x_ref[...], w1_ref[...], preferred_element_type=jnp.float32) + b1_ref[...]
    o_ref[...] = jnp.dot(h.astype(jnp.bfloat16), w2_ref[...],
                         preferred_element_type=jnp.float32) + b2_ref[...]


# --------------------------------------------------------------------------- #
# pallas_call wrappers (whole-array blocks; everything fits easily in VMEM here)
# --------------------------------------------------------------------------- #
def _full_spec(shape):
    return pl.BlockSpec(shape, lambda i: (0,) * len(shape))


_COMPILER_PARAMS = pltpu.CompilerParams(
    dimension_semantics=("arbitrary",),
    vmem_limit_bytes=32 * 1024 * 1024,
)


def conv_block(x2, lyr, N):
    """x2: (N*(H+2), Ci*(W+2)) bf16 padded batch-stacked input -> next layer's input."""
    T, K = x2.shape
    M = lyr["wb"].shape[2]
    Co = lyr["p"].shape[1]
    W = M // Co
    H = T // N - 2
    To = lyr["rsel"].shape[1]
    Mo = lyr["csel"].shape[2]
    inv_cnt = 1.0 / float(N * H * W)
    kernel = functools.partial(conv_block_kernel, inv_cnt=inv_cnt)
    # TODO(synk): at 224x224 / large batch, tile the batch on a "parallel" grid axis (megacore)
    # with two-pass BN stats instead of one whole-batch block.
    return pl.pallas_call(
        kernel,
        out_shape=jax.ShapeDtypeStruct((To, Mo), jnp.bfloat16),
        grid=(1,),
        in_specs=[
            _full_spec((T, K)),
            _full_spec((3, K, M)),
            _full_spec((M, Co)),
            _full_spec((Co, M)),
            _full_spec((2, To, T - 2)),
            _full_spec((2, M, Mo)),
            _full_spec((T - 2, 1)),
            _full_spec((1, M)),
            _full_spec((1, M)),
        ],
        out_specs=_full_spec((To, Mo)),
        compiler_params=_COMPILER_PARAMS,
    )(x2, lyr["wb"], lyr["p"], lyr["pt"], lyr["rsel"], lyr["csel"],
      lyr["rowmask"], lyr["gamma_w"], lyr["beta_w"])


def classifier(feats, w1t, b1, w2t, b2):
    """feats: (N, F) bf16; w1t: (F, H1) bf16; b1: (1, H1) f32; w2t: (H1, C) bf16; b2: (1, C) f32."""
    N, F = feats.shape
    H1 = w1t.shape[1]
    C = w2t.shape[1]
    # TODO(synk): for the real 9408x1024 first layer, K-tile w1 with an "arbitrary" grid axis
    # and an f32 acc scratch so the bf16 weight DMA pipelines (whole-array won't fit v7x VMEM).
    return pl.pallas_call(
        mlp_kernel,
        out_shape=jax.ShapeDtypeStruct((N, C), jnp.float32),
        grid=(1,),
        in_specs=[
            _full_spec((N, F)),
            _full_spec((F, H1)),
            _full_spec((1, H1)),
            _full_spec((H1, C)),
            _full_spec((1, C)),
        ],
        out_specs=_full_spec((N, C)),
        compiler_params=_COMPILER_PARAMS,
    )(feats, w1t, b1, w2t, b2)


@jax.jit
def convnet_forward(x_nchw, params):
    """Reproduces ConvNet.forward: features -> flatten -> classifier (training-mode BN)."""
    N = x_nchw.shape[0]
    # First layer's input, built once from NCHW: rows = (image, padded height) stacked,
    # lanes = (channel, padded width).  Every later layer gets this layout directly from the
    # previous conv block's output (no inter-layer XLA pad / transpose HBM round trip).
    x = jnp.transpose(x_nchw, (0, 2, 1, 3))                    # (N, H, C, W)
    x = jnp.pad(x, ((0, 0), (1, 1), (0, 0), (1, 1)))           # (N, H+2, C, W+2)
    x2 = x.reshape(N * x.shape[1], x.shape[2] * x.shape[3]).astype(jnp.bfloat16)
    for lyr in params["convs"]:
        x2 = conv_block(x2, lyr, N)
    feats = x2.reshape(N, -1)     # (h, c, w) flatten order; w1 rows pre-permuted to match
    w1t, b1, w2t, b2 = params["fc"]
    return classifier(feats, w1t, b1, w2t, b2)


# --------------------------------------------------------------------------- #
# Parameter / constant construction (all layout transforms done here, outside jit)
# --------------------------------------------------------------------------- #
def banded_conv_weight(wt, W):
    """wt: (Co, Ci, 3, 3) torch-layout conv weight -> (3, Ci*(W+2), Co*W) banded weights.

    Wb[dy, ci*(W+2) + (w+dx), co*W + w] = wt[co, ci, dy, dx], so the 3x3/pad-1 conv becomes
    three accumulated (rows, Ci*(W+2)) @ (Ci*(W+2), Co*W) matmuls (one per row tap dy).
    """
    wt = np.asarray(wt, dtype=np.float32)
    Co, Ci = wt.shape[0], wt.shape[1]
    Wp = W + 2
    wb = np.zeros((3, Ci * Wp, Co * W), np.float32)
    w_idx = np.arange(W)
    for dy in range(3):
        for dx in range(3):
            for ci in range(Ci):
                for co in range(Co):
                    wb[dy, ci * Wp + w_idx + dx, co * W + w_idx] = wt[co, ci, dy, dx]
    return wb


def make_block_constants(N, H, W, Ci, Co, pad_out):
    """Host-side 0/1 selection matrices + masks for one fused conv block (batch-stacked rows)."""
    del Ci  # lane layout of the input is handled by the banded weights
    Hp = H + 2
    Ho, Wo = H // 2, W // 2
    T, M = N * Hp, Co * W
    Hpo, Wpo = (Ho + 2, Wo + 2) if pad_out else (Ho, Wo)
    off = 1 if pad_out else 0
    To, Mo = N * Hpo, Co * Wpo

    rowmask = np.zeros((T - 2, 1), np.float32)
    rsel = np.zeros((2, To, T - 2), np.float32)
    for n in range(N):
        rowmask[n * Hp:n * Hp + H, 0] = 1.0
        for ho in range(Ho):
            dst, src = n * Hpo + off + ho, n * Hp + 2 * ho
            rsel[0, dst, src] = 1.0
            rsel[1, dst, src + 1] = 1.0

    csel = np.zeros((2, M, Mo), np.float32)
    p = np.zeros((M, Co), np.float32)
    for co in range(Co):
        p[co * W:(co + 1) * W, co] = 1.0
        for wo in range(Wo):
            dst, src = co * Wpo + off + wo, co * W + 2 * wo
            csel[0, src, dst] = 1.0
            csel[1, src + 1, dst] = 1.0
    return rowmask, rsel, csel, p


def make_params(key, cnn_layers, linear_layers, feat_dim=1, hw=32, batch=2):
    """Random weights + all precomputed layouts.  Selection matrices are built for the
    batch-stacked layout (per batch block at real scale)."""
    convs = []
    in_c = feat_dim
    H = W = hw
    i = 0
    while i < len(cnn_layers):
        elem = cnn_layers[i]
        assert elem != "P", "expected a conv layer"
        assert i + 1 < len(cnn_layers) and cnn_layers[i + 1] == "P", (
            "this demo fuses each Conv+BN+ReLU with its following MaxPool")
        Co = int(elem)
        is_last = (i + 2 >= len(cnn_layers))
        key, kw, kg, kb = jax.random.split(key, 4)
        wt = 0.1 * jax.random.normal(kw, (Co, in_c, 3, 3), jnp.float32)   # torch layout
        gamma = 1.0 + 0.05 * jax.random.normal(kg, (Co,), jnp.float32)
        beta = 0.05 * jax.random.normal(kb, (Co,), jnp.float32)
        rowmask, rsel, csel, p = make_block_constants(batch, H, W, in_c, Co,
                                                      pad_out=not is_last)
        convs.append(dict(
            wb=jnp.asarray(banded_conv_weight(np.asarray(wt), W)).astype(jnp.bfloat16),
            p=jnp.asarray(p),
            pt=jnp.asarray(np.ascontiguousarray(p.T)),
            rsel=jnp.asarray(rsel).astype(jnp.bfloat16),
            csel=jnp.asarray(csel).astype(jnp.bfloat16),
            rowmask=jnp.asarray(rowmask),
            gamma_w=jnp.asarray(np.repeat(np.asarray(gamma), W)[None, :]),   # (1, Co*W) f32
            beta_w=jnp.asarray(np.repeat(np.asarray(beta), W)[None, :]),
        ))
        in_c = Co
        H //= 2
        W //= 2
        i += 2
    assert linear_layers[0] == in_c * H * W, (linear_layers[0], in_c, H, W)

    # Permute w1's input rows from torch's (c, h, w) flatten order to the kernel's (h, c, w).
    Cf, Hf, Wf = in_c, H, W
    perm = np.empty((Cf * Hf * Wf,), np.int64)
    for h in range(Hf):
        for c in range(Cf):
            for w_ in range(Wf):
                perm[(h * Cf + c) * Wf + w_] = (c * Hf + h) * Wf + w_

    fcs = []
    for j in range(len(linear_layers) - 1):
        fin, fout = linear_layers[j], linear_layers[j + 1]
        key, kw, kb = jax.random.split(key, 3)
        w = (1.0 / np.sqrt(fin)) * jax.random.normal(kw, (fout, fin), jnp.float32)
        b = 0.01 * jax.random.normal(kb, (fout,), jnp.float32)
        wt = jnp.transpose(w)                                   # (fin, fout)
        if j == 0:
            wt = wt[jnp.asarray(perm), :]
        fcs.extend([wt.astype(jnp.bfloat16), b.reshape(1, fout)])  # bf16 weight, f32 bias
    return {"convs": convs, "fc": tuple(fcs)}


if __name__ == "__main__":
    cnn_layers = [3, "P", 12, "P", 12, "P"]
    # scaled-down classifier: 12 * (32/8) * (32/8) = 192 flattened features
    linear_layers = [192, 64, 17]

    N, HW = 2, 32
    key = jax.random.PRNGKey(0)
    key, kx = jax.random.split(key)
    x = jax.random.normal(kx, (N, 1, HW, HW), jnp.float32)   # NCHW, feat_dim=1

    params = make_params(key, cnn_layers, linear_layers, feat_dim=1, hw=HW, batch=N)

    logits = convnet_forward(x, params)
    jax.block_until_ready(logits)
    assert logits.shape == (N, 17) and logits.dtype == jnp.float32
    assert bool(jnp.all(jnp.isfinite(logits)))
    print("KERNEL_OK")
</pallas_src>

<mosaic_0001>
module attributes {stable_mosaic.version = 11 : i64} {
  func.func @conv_block_kernel(%arg0: i32, %arg1: memref<68x34xbf16, #tpu.memory_space<vmem>>, %arg2: memref<3x34x96xbf16, #tpu.memory_space<vmem>>, %arg3: memref<96x3xf32, #tpu.memory_space<vmem>>, %arg4: memref<3x96xf32, #tpu.memory_space<vmem>>, %arg5: memref<2x36x66xbf16, #tpu.memory_space<vmem>>, %arg6: memref<2x96x54xbf16, #tpu.memory_space<vmem>>, %arg7: memref<66x1xf32, #tpu.memory_space<vmem>>, %arg8: memref<1x96xf32, #tpu.memory_space<vmem>>, %arg9: memref<1x96xf32, #tpu.memory_space<vmem>>, %arg10: memref<36x54xbf16, #tpu.memory_space<vmem>>) attributes {dimension_semantics = [#tpu.dimension_semantics<arbitrary>], iteration_bounds = array<i64: 1>, scalar_prefetch = 0 : i64, scratch_operands = 0 : i64, tpu.core_type = #tpu.core_type<tc>, window_params = [{pipeline_mode = #tpu.pipeline_mode<synchronous>, transform_indices = @transform_0, window_bounds = array<i64: 68, 34>}, {pipeline_mode = #tpu.pipeline_mode<synchronous>, transform_indices = @transform_1, window_bounds = array<i64: 3, 34, 96>}, {pipeline_mode = #tpu.pipeline_mode<synchronous>, transform_indices = @transform_2, window_bounds = array<i64: 96, 3>}, {pipeline_mode = #tpu.pipeline_mode<synchronous>, transform_indices = @transform_3, window_bounds = array<i64: 3, 96>}, {pipeline_mode = #tpu.pipeline_mode<synchronous>, transform_indices = @transform_4, window_bounds = array<i64: 2, 36, 66>}, {pipeline_mode = #tpu.pipeline_mode<synchronous>, transform_indices = @transform_5, window_bounds = array<i64: 2, 96, 54>}, {pipeline_mode = #tpu.pipeline_mode<synchronous>, transform_indices = @transform_6, window_bounds = array<i64: 66, 1>}, {pipeline_mode = #tpu.pipeline_mode<synchronous>, transform_indices = @transform_7, window_bounds = array<i64: 1, 96>}, {pipeline_mode = #tpu.pipeline_mode<synchronous>, transform_indices = @transform_8, window_bounds = array<i64: 1, 96>}, {pipeline_mode = #tpu.pipeline_mode<synchronous>, transform_indices = @transform_9, window_bounds = array<i64: 36, 54>}]} {
    %c0 = arith.constant 0 : index
    %c0_0 = arith.constant 0 : index
    %0 = vector.load %arg1[%c0, %c0_0] : memref<68x34xbf16, #tpu.memory_space<vmem>>, vector<68x34xbf16>
    %1 = vector.extract_strided_slice %0 {offsets = [0, 0], sizes = [66, 34], strides = [1, 1]} : vector<68x34xbf16> to vector<66x34xbf16>
    %c0_1 = arith.constant 0 : index
    %c0_2 = arith.constant 0 : index
    %c0_3 = arith.constant 0 : index
    %2 = vector.load %arg2[%c0_1, %c0_2, %c0_3] : memref<3x34x96xbf16, #tpu.memory_space<vmem>>, vector<1x34x96xbf16>
    %3 = vector.shape_cast %2 : vector<1x34x96xbf16> to vector<34x96xbf16>
    %cst = arith.constant dense<0.000000e+00> : vector<66x96xf32>
    %4 = tpu.matmul %1, %3, %cst {dimension_numbers = #tpu.dot_dimension_numbers<[1], [0], [0], [1], [0, 0, 1, 1], [], []>} : vector<66x34xbf16>, vector<34x96xbf16>, vector<66x96xf32> -> vector<66x96xf32>
    %5 = vector.extract_strided_slice %0 {offsets = [1, 0], sizes = [66, 34], strides = [1, 1]} : vector<68x34xbf16> to vector<66x34xbf16>
    %c1 = arith.constant 1 : index
    %c0_4 = arith.constant 0 : index
    %c0_5 = arith.constant 0 : index
    %6 = vector.load %arg2[%c1, %c0_4, %c0_5] : memref<3x34x96xbf16, #tpu.memory_space<vmem>>, vector<1x34x96xbf16>
    %7 = vector.shape_cast %6 : vector<1x34x96xbf16> to vector<34x96xbf16>
    %cst_6 = arith.constant dense<0.000000e+00> : vector<66x96xf32>
    %8 = tpu.matmul %5, %7, %cst_6 {dimension_numbers = #tpu.dot_dimension_numbers<[1], [0], [0], [1], [0, 0, 1, 1], [], []>} : vector<66x34xbf16>, vector<34x96xbf16>, vector<66x96xf32> -> vector<66x96xf32>
    %9 = arith.addf %4, %8 : vector<66x96xf32>
    %10 = vector.extract_strided_slice %0 {offsets = [2, 0], sizes = [66, 34], strides = [1, 1]} : vector<68x34xbf16> to vector<66x34xbf16>
    %c2 = arith.constant 2 : index
    %c0_7 = arith.constant 0 : index
    %c0_8 = arith.constant 0 : index
    %11 = vector.load %arg2[%c2, %c0_7, %c0_8] : memref<3x34x96xbf16, #tpu.memory_space<vmem>>, vector<1x34x96xbf16>
    %12 = vector.shape_cast %11 : vector<1x34x96xbf16> to vector<34x96xbf16>
    %cst_9 = arith.constant dense<0.000000e+00> : vector<66x96xf32>
    %13 = tpu.matmul %10, %12, %cst_9 {dimension_numbers = #tpu.dot_dimension_numbers<[1], [0], [0], [1], [0, 0, 1, 1], [], []>} : vector<66x34xbf16>, vector<34x96xbf16>, vector<66x96xf32> -> vector<66x96xf32>
    %14 = arith.addf %9, %13 : vector<66x96xf32>
    %c0_10 = arith.constant 0 : index
    %c0_11 = arith.constant 0 : index
    %15 = vector.load %arg7[%c0_10, %c0_11] : memref<66x1xf32, #tpu.memory_space<vmem>>, vector<66x1xf32>
    %16 = vector.broadcast %15 : vector<66x1xf32> to vector<66x96xf32>
    %17 = arith.mulf %14, %16 : vector<66x96xf32>
    %cst_12 = arith.constant dense<0.000000e+00> : vector<96xf32>
    %18 = vector.multi_reduction <add>, %17, %cst_12 [0] : vector<66x96xf32> to vector<96xf32>
    %19 = vector.shape_cast %18 : vector<96xf32> to vector<1x96xf32>
    %20 = arith.mulf %17, %14 : vector<66x96xf32>
    %cst_13 = arith.constant dense<0.000000e+00> : vector<96xf32>
    %21 = vector.multi_reduction <add>, %20, %cst_13 [0] : vector<66x96xf32> to vector<96xf32>
    %22 = vector.shape_cast %21 : vector<96xf32> to vector<1x96xf32>
    %23 = tpu.concatenate %19, %22 in 0 : vector<1x96xf32>, vector<1x96xf32> -> vector<2x96xf32>
    %c0_14 = arith.constant 0 : index
    %c0_15 = arith.constant 0 : index
    %24 = vector.load %arg3[%c0_14, %c0_15] : memref<96x3xf32, #tpu.memory_space<vmem>>, vector<96x3xf32>
    %cst_16 = arith.constant dense<0.000000e+00> : vector<2x3xf32>
    %25 = tpu.matmul %23, %24, %cst_16 {dimension_numbers = #tpu.dot_dimension_numbers<[1], [0], [0], [1], [0, 0, 1, 1], [], []>} : vector<2x96xf32>, vector<96x3xf32>, vector<2x3xf32> -> vector<2x3xf32>
    %c0_17 = arith.constant 0 : index
    %c0_18 = arith.constant 0 : index
    %26 = vector.load %arg4[%c0_17, %c0_18] : memref<3x96xf32, #tpu.memory_space<vmem>>, vector<3x96xf32>
    %cst_19 = arith.constant dense<0.000000e+00> : vector<2x96xf32>
    %27 = tpu.matmul %25, %26, %cst_19 {dimension_numbers = #tpu.dot_dimension_numbers<[1], [0], [0], [1], [0, 0, 1, 1], [], []>} : vector<2x3xf32>, vector<3x96xf32>, vector<2x96xf32> -> vector<2x96xf32>
    %28 = vector.extract_strided_slice %27 {offsets = [0, 0], sizes = [1, 96], strides = [1, 1]} : vector<2x96xf32> to vector<1x96xf32>
    %cst_20 = arith.constant 4.8828125E-4 : f32
    %29 = vector.broadcast %cst_20 : f32 to vector<1x96xf32>
    %30 = arith.mulf %28, %29 : vector<1x96xf32>
    %31 = vector.extract_strided_slice %27 {offsets = [1, 0], sizes = [1, 96], strides = [1, 1]} : vector<2x96xf32> to vector<1x96xf32>
    %cst_21 = arith.constant 4.8828125E-4 : f32
    %32 = vector.broadcast %cst_21 : f32 to vector<1x96xf32>
    %33 = arith.mulf %31, %32 : vector<1x96xf32>
    %34 = arith.mulf %30, %30 : vector<1x96xf32>
    %35 = arith.subf %33, %34 : vector<1x96xf32>
    %c0_22 = arith.constant 0 : index
    %c0_23 = arith.constant 0 : index
    %36 = vector.load %arg8[%c0_22, %c0_23] : memref<1x96xf32, #tpu.memory_space<vmem>>, vector<1x96xf32>
    %cst_24 = arith.constant 9.99999974E-6 : f32
    %37 = vector.broadcast %cst_24 : f32 to vector<1x96xf32>
    %38 = arith.addf %35, %37 : vector<1x96xf32>
    %39 = math.rsqrt %38 : vector<1x96xf32>
    %40 = arith.mulf %36, %39 : vector<1x96xf32>
    %c0_25 = arith.constant 0 : index
    %c0_26 = arith.constant 0 : index
    %41 = vector.load %arg9[%c0_25, %c0_26] : memref<1x96xf32, #tpu.memory_space<vmem>>, vector<1x96xf32>
    %42 = arith.mulf %30, %40 : vector<1x96xf32>
    %43 = arith.subf %41, %42 : vector<1x96xf32>
    %44 = vector.broadcast %40 : vector<1x96xf32> to vector<66x96xf32>
    %45 = arith.mulf %14, %44 : vector<66x96xf32>
    %46 = vector.broadcast %43 : vector<1x96xf32> to vector<66x96xf32>
    %47 = arith.addf %45, %46 : vector<66x96xf32>
    %cst_27 = arith.constant 0.000000e+00 : f32
    %48 = vector.broadcast %cst_27 : f32 to vector<66x96xf32>
    %49 = arith.maximumf %47, %48 : vector<66x96xf32>
    %50 = arith.truncf %49 : vector<66x96xf32> to vector<66x96xbf16>
    %c0_28 = arith.constant 0 : index
    %c0_29 = arith.constant 0 : index
    %c0_30 = arith.constant 0 : index
    %51 = vector.load %arg5[%c0_28, %c0_29, %c0_30] : memref<2x36x66xbf16, #tpu.memory_space<vmem>>, vector<1x36x66xbf16>
    %52 = vector.shape_cast %51 : vector<1x36x66xbf16> to vector<36x66xbf16>
    %cst_31 = arith.constant dense<0.000000e+00> : vector<36x96xf32>
    %53 = tpu.matmul %52, %50, %cst_31 {dimension_numbers = #tpu.dot_dimension_numbers<[1], [0], [0], [1], [0, 0, 1, 1], [], []>} : vector<36x66xbf16>, vector<66x96xbf16>, vector<36x96xf32> -> vector<36x96xf32>
    %c1_32 = arith.constant 1 : index
    %c0_33 = arith.constant 0 : index
    %c0_34 = arith.constant 0 : index
    %54 = vector.load %arg5[%c1_32, %c0_33, %c0_34] : memref<2x36x66xbf16, #tpu.memory_space<vmem>>, vector<1x36x66xbf16>
    %55 = vector.shape_cast %54 : vector<1x36x66xbf16> to vector<36x66xbf16>
    %cst_35 = arith.constant dense<0.000000e+00> : vector<36x96xf32>
    %56 = tpu.matmul %55, %50, %cst_35 {dimension_numbers = #tpu.dot_dimension_numbers<[1], [0], [0], [1], [0, 0, 1, 1], [], []>} : vector<36x66xbf16>, vector<66x96xbf16>, vector<36x96xf32> -> vector<36x96xf32>
    %57 = arith.maximumf %53, %56 : vector<36x96xf32>
    %58 = arith.truncf %57 : vector<36x96xf32> to vector<36x96xbf16>
    %c0_36 = arith.constant 0 : index
    %c0_37 = arith.constant 0 : index
    %c0_38 = arith.constant 0 : index
    %59 = vector.load %arg6[%c0_36, %c0_37, %c0_38] : memref<2x96x54xbf16, #tpu.memory_space<vmem>>, vector<1x96x54xbf16>
    %60 = vector.shape_cast %59 : vector<1x96x54xbf16> to vector<96x54xbf16>
    %cst_39 = arith.constant dense<0.000000e+00> : vector<36x54xf32>
    %61 = tpu.matmul %58, %60, %cst_39 {dimension_numbers = #tpu.dot_dimension_numbers<[1], [0], [0], [1], [0, 0, 1, 1], [], []>} : vector<36x96xbf16>, vector<96x54xbf16>, vector<36x54xf32> -> vector<36x54xf32>
    %c1_40 = arith.constant 1 : index
    %c0_41 = arith.constant 0 : index
    %c0_42 = arith.constant 0 : index
    %62 = vector.load %arg6[%c1_40, %c0_41, %c0_42] : memref<2x96x54xbf16, #tpu.memory_space<vmem>>, vector<1x96x54xbf16>
    %63 = vector.shape_cast %62 : vector<1x96x54xbf16> to vector<96x54xbf16>
    %cst_43 = arith.constant dense<0.000000e+00> : vector<36x54xf32>
    %64 = tpu.matmul %58, %63, %cst_43 {dimension_numbers = #tpu.dot_dimension_numbers<[1], [0], [0], [1], [0, 0, 1, 1], [], []>} : vector<36x96xbf16>, vector<96x54xbf16>, vector<36x54xf32> -> vector<36x54xf32>
    %65 = arith.maximumf %61, %64 : vector<36x54xf32>
    %66 = arith.truncf %65 : vector<36x54xf32> to vector<36x54xbf16>
    %c0_44 = arith.constant 0 : index
    %c0_45 = arith.constant 0 : index
    %67 = vector.load %arg10[%c0_44, %c0_45] : memref<36x54xbf16, #tpu.memory_space<vmem>>, vector<36x54xbf16>
    tpu.vector_store %arg10[%c0_44, %c0_45], %66 {strides = array<i32>} : memref<36x54xbf16, #tpu.memory_space<vmem>>, vector<36x54xbf16>,
    return
  }
  func.func @transform_0(%arg0: i32) -> (i32, i32) {
    %c0_i32 = arith.constant 0 : i32
    %c0_i32_0 = arith.constant 0 : i32
    %c0_i32_1 = arith.constant 0 : i32
    return %c0_i32, %c0_i32_0 : i32, i32
  }
  func.func @transform_1(%arg0: i32) -> (i32, i32, i32) {
    %c0_i32 = arith.constant 0 : i32
    %c0_i32_0 = arith.constant 0 : i32
    %c0_i32_1 = arith.constant 0 : i32
    %c0_i32_2 = arith.constant 0 : i32
    return %c0_i32, %c0_i32_0, %c0_i32_1 : i32, i32, i32
  }
  func.func @transform_2(%arg0: i32) -> (i32, i32) {
    %c0_i32 = arith.constant 0 : i32
    %c0_i32_0 = arith.constant 0 : i32
    %c0_i32_1 = arith.constant 0 : i32
    return %c0_i32, %c0_i32_0 : i32, i32
  }
  func.func @transform_3(%arg0: i32) -> (i32, i32) {
    %c0_i32 = arith.constant 0 : i32
    %c0_i32_0 = arith.constant 0 : i32
    %c0_i32_1 = arith.constant 0 : i32
    return %c0_i32, %c0_i32_0 : i32, i32
  }
  func.func @transform_4(%arg0: i32) -> (i32, i32, i32) {
    %c0_i32 = arith.constant 0 : i32
    %c0_i32_0 = arith.constant 0 : i32
    %c0_i32_1 = arith.constant 0 : i32
    %c0_i32_2 = arith.constant 0 : i32
    return %c0_i32, %c0_i32_0, %c0_i32_1 : i32, i32, i32
  }
  func.func @transform_5(%arg0: i32) -> (i32, i32, i32) {
    %c0_i32 = arith.constant 0 : i32
    %c0_i32_0 = arith.constant 0 : i32
    %c0_i32_1 = arith.constant 0 : i32
    %c0_i32_2 = arith.constant 0 : i32
    return %c0_i32, %c0_i32_0, %c0_i32_1 : i32, i32, i32
  }
  func.func @transform_6(%arg0: i32) -> (i32, i32) {
    %c0_i32 = arith.constant 0 : i32
    %c0_i32_0 = arith.constant 0 : i32
    %c0_i32_1 = arith.constant 0 : i32
    return %c0_i32, %c0_i32_0 : i32, i32
  }
  func.func @transform_7(%arg0: i32) -> (i32, i32) {
    %c0_i32 = arith.constant 0 : i32
    %c0_i32_0 = arith.constant 0 : i32
    %c0_i32_1 = arith.constant 0 : i32
    return %c0_i32, %c0_i32_0 : i32, i32
  }
  func.func @transform_8(%arg0: i32) -> (i32, i32) {
    %c0_i32 = arith.constant 0 : i32
    %c0_i32_0 = arith.constant 0 : i32
    %c0_i32_1 = arith.constant 0 : i32
    return %c0_i32, %c0_i32_0 : i32, i32
  }
  func.func @transform_9(%arg0: i32) -> (i32, i32) {
    %c0_i32 = arith.constant 0 : i32
    %c0_i32_0 = arith.constant 0 : i32
    %c0_i32_1 = arith.constant 0 : i32
    return %c0_i32, %c0_i32_0 : i32, i32
  }
}

module attributes {stable_mosaic.version = 11 : i64} {
  func.func @conv_block_kernel(%arg0: i32, %arg1: memref<36x54xbf16, #tpu.memory_space<vmem>>, %arg2: memref<3x54x192xbf16, #tpu.memory_space<vmem>>, %arg3: memref<192x12xf32, #tpu.memory_space<vmem>>, %arg4: memref<12x192xf32, #tpu.memory_space<vmem>>, %arg5: memref<2x20x34xbf16, #tpu.memory_space<vmem>>, %arg6: memref<2x192x120xbf16, #tpu.memory_space<vmem>>, %arg7: memref<34x1xf32, #tpu.memory_space<vmem>>, %arg8: memref<1x192xf32, #tpu.memory_space<vmem>>, %arg9: memref<1x192xf32, #tpu.memory_space<vmem>>, %arg10: memref<20x120xbf16, #tpu.memory_space<vmem>>) attributes {dimension_semantics = [#tpu.dimension_semantics<arbitrary>], iteration_bounds = array<i64: 1>, scalar_prefetch = 0 : i64, scratch_operands = 0 : i64, tpu.core_type = #tpu.core_type<tc>, window_params = [{pipeline_mode = #tpu.pipeline_mode<synchronous>, transform_indices = @transform_0, window_bounds = array<i64: 36, 54>}, {pipeline_mode = #tpu.pipeline_mode<synchronous>, transform_indices = @transform_1, window_bounds = array<i64: 3, 54, 192>}, {pipeline_mode = #tpu.pipeline_mode<synchronous>, transform_indices = @transform_2, window_bounds = array<i64: 192, 12>}, {pipeline_mode = #tpu.pipeline_mode<synchronous>, transform_indices = @transform_3, window_bounds = array<i64: 12, 192>}, {pipeline_mode = #tpu.pipeline_mode<synchronous>, transform_indices = @transform_4, window_bounds = array<i64: 2, 20, 34>}, {pipeline_mode = #tpu.pipeline_mode<synchronous>, transform_indices = @transform_5, window_bounds = array<i64: 2, 192, 120>}, {pipeline_mode = #tpu.pipeline_mode<synchronous>, transform_indices = @transform_6, window_bounds = array<i64: 34, 1>}, {pipeline_mode = #tpu.pipeline_mode<synchronous>, transform_indices = @transform_7, window_bounds = array<i64: 1, 192>}, {pipeline_mode = #tpu.pipeline_mode<synchronous>, transform_indices = @transform_8, window_bounds = array<i64: 1, 192>}, {pipeline_mode = #tpu.pipeline_mode<synchronous>, transform_indices = @transform_9, window_bounds = array<i64: 20, 120>}]} {
    %c0 = arith.constant 0 : index
    %c0_0 = arith.constant 0 : index
    %0 = vector.load %arg1[%c0, %c0_0] : memref<36x54xbf16, #tpu.memory_space<vmem>>, vector<36x54xbf16>
    %1 = vector.extract_strided_slice %0 {offsets = [0, 0], sizes = [34, 54], strides = [1, 1]} : vector<36x54xbf16> to vector<34x54xbf16>
    %c0_1 = arith.constant 0 : index
    %c0_2 = arith.constant 0 : index
    %c0_3 = arith.constant 0 : index
    %2 = vector.load %arg2[%c0_1, %c0_2, %c0_3] : memref<3x54x192xbf16, #tpu.memory_space<vmem>>, vector<1x54x192xbf16>
    %3 = vector.shape_cast %2 : vector<1x54x192xbf16> to vector<54x192xbf16>
    %cst = arith.constant dense<0.000000e+00> : vector<34x192xf32>
    %4 = tpu.matmul %1, %3, %cst {dimension_numbers = #tpu.dot_dimension_numbers<[1], [0], [0], [1], [0, 0, 1, 1], [], []>} : vector<34x54xbf16>, vector<54x192xbf16>, vector<34x192xf32> -> vector<34x192xf32>
    %5 = vector.extract_strided_slice %0 {offsets = [1, 0], sizes = [34, 54], strides = [1, 1]} : vector<36x54xbf16> to vector<34x54xbf16>
    %c1 = arith.constant 1 : index
    %c0_4 = arith.constant 0 : index
    %c0_5 = arith.constant 0 : index
    %6 = vector.load %arg2[%c1, %c0_4, %c0_5] : memref<3x54x192xbf16, #tpu.memory_space<vmem>>, vector<1x54x192xbf16>
    %7 = vector.shape_cast %6 : vector<1x54x192xbf16> to vector<54x192xbf16>
    %cst_6 = arith.constant dense<0.000000e+00> : vector<34x192xf32>
    %8 = tpu.matmul %5, %7, %cst_6 {dimension_numbers = #tpu.dot_dimension_numbers<[1], [0], [0], [1], [0, 0, 1, 1], [], []>} : vector<34x54xbf16>, vector<54x192xbf16>, vector<34x192xf32> -> vector<34x192xf32>
    %9 = arith.addf %4, %8 : vector<34x192xf32>
    %10 = vector.extract_strided_slice %0 {offsets = [2, 0], sizes = [34, 54], strides = [1, 1]} : vector<36x54xbf16> to vector<34x54xbf16>
    %c2 = arith.constant 2 : index
    %c0_7 = arith.constant 0 : index
    %c0_8 = arith.constant 0 : index
    %11 = vector.load %arg2[%c2, %c0_7, %c0_8] : memref<3x54x192xbf16, #tpu.memory_space<vmem>>, vector<1x54x192xbf16>
    %12 = vector.shape_cast %11 : vector<1x54x192xbf16> to vector<54x192xbf16>
    %cst_9 = arith.constant dense<0.000000e+00> : vector<34x192xf32>
    %13 = tpu.matmul %10, %12, %cst_9 {dimension_numbers = #tpu.dot_dimension_numbers<[1], [0], [0], [1], [0, 0, 1, 1], [], []>} : vector<34x54xbf16>, vector<54x192xbf16>, vector<34x192xf32> -> vector<34x192xf32>
    %14 = arith.addf %9, %13 : vector<34x192xf32>
    %c0_10 = arith.constant 0 : index
    %c0_11 = arith.constant 0 : index
    %15 = vector.load %arg7[%c0_10, %c0_11] : memref<34x1xf32, #tpu.memory_space<vmem>>, vector<34x1xf32>
    %16 = vector.broadcast %15 : vector<34x1xf32> to vector<34x192xf32>
    %17 = arith.mulf %14, %16 : vector<34x192xf32>
    %cst_12 = arith.constant dense<0.000000e+00> : vector<192xf32>
    %18 = vector.multi_reduction <add>, %17, %cst_12 [0] : vector<34x192xf32> to vector<192xf32>
    %19 = vector.shape_cast %18 : vector<192xf32> to vector<1x192xf32>
    %20 = arith.mulf %17, %14 : vector<34x192xf32>
    %cst_13 = arith.constant dense<0.000000e+00> : vector<192xf32>
    %21 = vector.multi_reduction <add>, %20, %cst_13 [0] : vector<34x192xf32> to vector<192xf32>
    %22 = vector.shape_cast %21 : vector<192xf32> to vector<1x192xf32>
    %23 = tpu.concatenate %19, %22 in 0 : vector<1x192xf32>, vector<1x192xf32> -> vector<2x192xf32>
    %c0_14 = arith.constant 0 : index
    %c0_15 = arith.constant 0 : index
    %24 = vector.load %arg3[%c0_14, %c0_15] : memref<192x12xf32, #tpu.memory_space<vmem>>, vector<192x12xf32>
    %cst_16 = arith.constant dense<0.000000e+00> : vector<2x12xf32>
    %25 = tpu.matmul %23, %24, %cst_16 {dimension_numbers = #tpu.dot_dimension_numbers<[1], [0], [0], [1], [0, 0, 1, 1], [], []>} : vector<2x192xf32>, vector<192x12xf32>, vector<2x12xf32> -> vector<2x12xf32>
    %c0_17 = arith.constant 0 : index
    %c0_18 = arith.constant 0 : index
    %26 = vector.load %arg4[%c0_17, %c0_18] : memref<12x192xf32, #tpu.memory_space<vmem>>, vector<12x192xf32>
    %cst_19 = arith.constant dense<0.000000e+00> : vector<2x192xf32>
    %27 = tpu.matmul %25, %26, %cst_19 {dimension_numbers = #tpu.dot_dimension_numbers<[1], [0], [0], [1], [0, 0, 1, 1], [], []>} : vector<2x12xf32>, vector<12x192xf32>, vector<2x192xf32> -> vector<2x192xf32>
    %28 = vector.extract_strided_slice %27 {offsets = [0, 0], sizes = [1, 192], strides = [1, 1]} : vector<2x192xf32> to vector<1x192xf32>
    %cst_20 = arith.constant 0.001953125 : f32
    %29 = vector.broadcast %cst_20 : f32 to vector<1x192xf32>
    %30 = arith.mulf %28, %29 : vector<1x192xf32>
    %31 = vector.extract_strided_slice %27 {offsets = [1, 0], sizes = [1, 192], strides = [1, 1]} : vector<2x192xf32> to vector<1x192xf32>
    %cst_21 = arith.constant 0.001953125 : f32
    %32 = vector.broadcast %cst_21 : f32 to vector<1x192xf32>
    %33 = arith.mulf %31, %32 : vector<1x192xf32>
    %34 = arith.mulf %30, %30 : vector<1x192xf32>
    %35 = arith.subf %33, %34 : vector<1x192xf32>
    %c0_22 = arith.constant 0 : index
    %c0_23 = arith.constant 0 : index
    %36 = vector.load %arg8[%c0_22, %c0_23] : memref<1x192xf32, #tpu.memory_space<vmem>>, vector<1x192xf32>
    %cst_24 = arith.constant 9.99999974E-6 : f32
    %37 = vector.broadcast %cst_24 : f32 to vector<1x192xf32>
    %38 = arith.addf %35, %37 : vector<1x192xf32>
    %39 = math.rsqrt %38 : vector<1x192xf32>
    %40 = arith.mulf %36, %39 : vector<1x192xf32>
    %c0_25 = arith.constant 0 : index
    %c0_26 = arith.constant 0 : index
    %41 = vector.load %arg9[%c0_25, %c0_26] : memref<1x192xf32, #tpu.memory_space<vmem>>, vector<1x192xf32>
    %42 = arith.mulf %30, %40 : vector<1x192xf32>
    %43 = arith.subf %41, %42 : vector<1x192xf32>
    %44 = vector.broadcast %40 : vector<1x192xf32> to vector<34x192xf32>
    %45 = arith.mulf %14, %44 : vector<34x192xf32>
    %46 = vector.broadcast %43 : vector<1x192xf32> to vector<34x192xf32>
    %47 = arith.addf %45, %46 : vector<34x192xf32>
    %cst_27 = arith.constant 0.000000e+00 : f32
    %48 = vector.broadcast %cst_27 : f32 to vector<34x192xf32>
    %49 = arith.maximumf %47, %48 : vector<34x192xf32>
    %50 = arith.truncf %49 : vector<34x192xf32> to vector<34x192xbf16>
    %c0_28 = arith.constant 0 : index
    %c0_29 = arith.constant 0 : index
    %c0_30 = arith.constant 0 : index
    %51 = vector.load %arg5[%c0_28, %c0_29, %c0_30] : memref<2x20x34xbf16, #tpu.memory_space<vmem>>, vector<1x20x34xbf16>
    %52 = vector.shape_cast %51 : vector<1x20x34xbf16> to vector<20x34xbf16>
    %cst_31 = arith.constant dense<0.000000e+00> : vector<20x192xf32>
    %53 = tpu.matmul %52, %50, %cst_31 {dimension_numbers = #tpu.dot_dimension_numbers<[1], [0], [0], [1], [0, 0, 1, 1], [], []>} : vector<20x34xbf16>, vector<34x192xbf16>, vector<20x192xf32> -> vector<20x192xf32>
    %c1_32 = arith.constant 1 : index
    %c0_33 = arith.constant 0 : index
    %c0_34 = arith.constant 0 : index
    %54 = vector.load %arg5[%c1_32, %c0_33, %c0_34] : memref<2x20x34xbf16, #tpu.memory_space<vmem>>, vector<1x20x34xbf16>
    %55 = vector.shape_cast %54 : vector<1x20x34xbf16> to vector<20x34xbf16>
    %cst_35 = arith.constant dense<0.000000e+00> : vector<20x192xf32>
    %56 = tpu.matmul %55, %50, %cst_35 {dimension_numbers = #tpu.dot_dimension_numbers<[1], [0], [0], [1], [0, 0, 1, 1], [], []>} : vector<20x34xbf16>, vector<34x192xbf16>, vector<20x192xf32> -> vector<20x192xf32>
    %57 = arith.maximumf %53, %56 : vector<20x192xf32>
    %58 = arith.truncf %57 : vector<20x192xf32> to vector<20x192xbf16>
    %c0_36 = arith.constant 0 : index
    %c0_37 = arith.constant 0 : index
    %c0_38 = arith.constant 0 : index
    %59 = vector.load %arg6[%c0_36, %c0_37, %c0_38] : memref<2x192x120xbf16, #tpu.memory_space<vmem>>, vector<1x192x120xbf16>
    %60 = vector.shape_cast %59 : vector<1x192x120xbf16> to vector<192x120xbf16>
    %cst_39 = arith.constant dense<0.000000e+00> : vector<20x120xf32>
    %61 = tpu.matmul %58, %60, %cst_39 {dimension_numbers = #tpu.dot_dimension_numbers<[1], [0], [0], [1], [0, 0, 1, 1], [], []>} : vector<20x192xbf16>, vector<192x120xbf16>, vector<20x120xf32> -> vector<20x120xf32>
    %c1_40 = arith.constant 1 : index
    %c0_41 = arith.constant 0 : index
    %c0_42 = arith.constant 0 : index
    %62 = vector.load %arg6[%c1_40, %c0_41, %c0_42] : memref<2x192x120xbf16, #tpu.memory_space<vmem>>, vector<1x192x120xbf16>
    %63 = vector.shape_cast %62 : vector<1x192x120xbf16> to vector<192x120xbf16>
    %cst_43 = arith.constant dense<0.000000e+00> : vector<20x120xf32>
    %64 = tpu.matmul %58, %63, %cst_43 {dimension_numbers = #tpu.dot_dimension_numbers<[1], [0], [0], [1], [0, 0, 1, 1], [], []>} : vector<20x192xbf16>, vector<192x120xbf16>, vector<20x120xf32> -> vector<20x120xf32>
    %65 = arith.maximumf %61, %64 : vector<20x120xf32>
    %66 = arith.truncf %65 : vector<20x120xf32> to vector<20x120xbf16>
    %c0_44 = arith.constant 0 : index
    %c0_45 = arith.constant 0 : index
    %67 = vector.load %arg10[%c0_44, %c0_45] : memref<20x120xbf16, #tpu.memory_space<vmem>>, vector<20x120xbf16>
    tpu.vector_store %arg10[%c0_44, %c0_45], %66 {strides = array<i32>} : memref<20x120xbf16, #tpu.memory_space<vmem>>, vector<20x120xbf16>,
    return
  }
  func.func @transform_0(%arg0: i32) -> (i32, i32) {
    %c0_i32 = arith.constant 0 : i32
    %c0_i32_0 = arith.constant 0 : i32
    %c0_i32_1 = arith.constant 0 : i32
    return %c0_i32, %c0_i32_0 : i32, i32
  }
  func.func @transform_1(%arg0: i32) -> (i32, i32, i32) {
    %c0_i32 = arith.constant 0 : i32
    %c0_i32_0 = arith.constant 0 : i32
    %c0_i32_1 = arith.constant 0 : i32
    %c0_i32_2 = arith.constant 0 : i32
    return %c0_i32, %c0_i32_0, %c0_i32_1 : i32, i32, i32
  }
  func.func @transform_2(%arg0: i32) -> (i32, i32) {
    %c0_i32 = arith.constant 0 : i32
    %c0_i32_0 = arith.constant 0 : i32
    %c0_i32_1 = arith.constant 0 : i32
    return %c0_i32, %c0_i32_0 : i32, i32
  }
  func.func @transform_3(%arg0: i32) -> (i32, i32) {
    %c0_i32 = arith.constant 0 : i32
    %c0_i32_0 = arith.constant 0 : i32
    %c0_i32_1 = arith.constant 0 : i32
    return %c0_i32, %c0_i32_0 : i32, i32
  }
  func.func @transform_4(%arg0: i32) -> (i32, i32, i32) {
    %c0_i32 = arith.constant 0 : i32
    %c0_i32_0 = arith.constant 0 : i32
    %c0_i32_1 = arith.constant 0 : i32
    %c0_i32_2 = arith.constant 0 : i32
    return %c0_i32, %c0_i32_0, %c0_i32_1 : i32, i32, i32
  }
  func.func @transform_5(%arg0: i32) -> (i32, i32, i32) {
    %c0_i32 = arith.constant 0 : i32
    %c0_i32_0 = arith.constant 0 : i32
    %c0_i32_1 = arith.constant 0 : i32
    %c0_i32_2 = arith.constant 0 : i32
    return %c0_i32, %c0_i32_0, %c0_i32_1 : i32, i32, i32
  }
  func.func @transform_6(%arg0: i32) -> (i32, i32) {
    %c0_i32 = arith.constant 0 : i32
    %c0_i32_0 = arith.constant 0 : i32
    %c0_i32_1 = arith.constant 0 : i32
    return %c0_i32, %c0_i32_0 : i32, i32
  }
  func.func @transform_7(%arg0: i32) -> (i32, i32) {
    %c0_i32 = arith.constant 0 : i32
    %c0_i32_0 = arith.constant 0 : i32
    %c0_i32_1 = arith.constant 0 : i32
    return %c0_i32, %c0_i32_0 : i32, i32
  }
  func.func @transform_8(%arg0: i32) -> (i32, i32) {
    %c0_i32 = arith.constant 0 : i32
    %c0_i32_0 = arith.constant 0 : i32
    %c0_i32_1 = arith.constant 0 : i32
    return %c0_i32, %c0_i32_0 : i32, i32
  }
  func.func @transform_9(%arg0: i32) -> (i32, i32) {
    %c0_i32 = arith.constant 0 : i32
    %c0_i32_0 = arith.constant 0 : i32
    %c0_i32_1 = arith.constant 0 : i32
    return %c0_i32, %c0_i32_0 : i32, i32
  }
}

module attributes {stable_mosaic.version = 11 : i64} {
  func.func @conv_block_kernel(%arg0: i32, %arg1: memref<20x120xbf16, #tpu.memory_space<vmem>>, %arg2: memref<3x120x96xbf16, #tpu.memory_space<vmem>>, %arg3: memref<96x12xf32, #tpu.memory_space<vmem>>, %arg4: memref<12x96xf32, #tpu.memory_space<vmem>>, %arg5: memref<2x8x18xbf16, #tpu.memory_space<vmem>>, %arg6: memref<2x96x48xbf16, #tpu.memory_space<vmem>>, %arg7: memref<18x1xf32, #tpu.memory_space<vmem>>, %arg8: memref<1x96xf32, #tpu.memory_space<vmem>>, %arg9: memref<1x96xf32, #tpu.memory_space<vmem>>, %arg10: memref<8x48xbf16, #tpu.memory_space<vmem>>) attributes {dimension_semantics = [#tpu.dimension_semantics<arbitrary>], iteration_bounds = array<i64: 1>, scalar_prefetch = 0 : i64, scratch_operands = 0 : i64, tpu.core_type = #tpu.core_type<tc>, window_params = [{pipeline_mode = #tpu.pipeline_mode<synchronous>, transform_indices = @transform_0, window_bounds = array<i64: 20, 120>}, {pipeline_mode = #tpu.pipeline_mode<synchronous>, transform_indices = @transform_1, window_bounds = array<i64: 3, 120, 96>}, {pipeline_mode = #tpu.pipeline_mode<synchronous>, transform_indices = @transform_2, window_bounds = array<i64: 96, 12>}, {pipeline_mode = #tpu.pipeline_mode<synchronous>, transform_indices = @transform_3, window_bounds = array<i64: 12, 96>}, {pipeline_mode = #tpu.pipeline_mode<synchronous>, transform_indices = @transform_4, window_bounds = array<i64: 2, 8, 18>}, {pipeline_mode = #tpu.pipeline_mode<synchronous>, transform_indices = @transform_5, window_bounds = array<i64: 2, 96, 48>}, {pipeline_mode = #tpu.pipeline_mode<synchronous>, transform_indices = @transform_6, window_bounds = array<i64: 18, 1>}, {pipeline_mode = #tpu.pipeline_mode<synchronous>, transform_indices = @transform_7, window_bounds = array<i64: 1, 96>}, {pipeline_mode = #tpu.pipeline_mode<synchronous>, transform_indices = @transform_8, window_bounds = array<i64: 1, 96>}, {pipeline_mode = #tpu.pipeline_mode<synchronous>, transform_indices = @transform_9, window_bounds = array<i64: 8, 48>}]} {
    %c0 = arith.constant 0 : index
    %c0_0 = arith.constant 0 : index
    %0 = vector.load %arg1[%c0, %c0_0] : memref<20x120xbf16, #tpu.memory_space<vmem>>, vector<20x120xbf16>
    %1 = vector.extract_strided_slice %0 {offsets = [0, 0], sizes = [18, 120], strides = [1, 1]} : vector<20x120xbf16> to vector<18x120xbf16>
    %c0_1 = arith.constant 0 : index
    %c0_2 = arith.constant 0 : index
    %c0_3 = arith.constant 0 : index
    %2 = vector.load %arg2[%c0_1, %c0_2, %c0_3] : memref<3x120x96xbf16, #tpu.memory_space<vmem>>, vector<1x120x96xbf16>
    %3 = vector.shape_cast %2 : vector<1x120x96xbf16> to vector<120x96xbf16>
    %cst = arith.constant dense<0.000000e+00> : vector<18x96xf32>
    %4 = tpu.matmul %1, %3, %cst {dimension_numbers = #tpu.dot_dimension_numbers<[1], [0], [0], [1], [0, 0, 1, 1], [], []>} : vector<18x120xbf16>, vector<120x96xbf16>, vector<18x96xf32> -> vector<18x96xf32>
    %5 = vector.extract_strided_slice %0 {offsets = [1, 0], sizes = [18, 120], strides = [1, 1]} : vector<20x120xbf16> to vector<18x120xbf16>
    %c1 = arith.constant 1 : index
    %c0_4 = arith.constant 0 : index
    %c0_5 = arith.constant 0 : index
    %6 = vector.load %arg2[%c1, %c0_4, %c0_5] : memref<3x120x96xbf16, #tpu.memory_space<vmem>>, vector<1x120x96xbf16>
    %7 = vector.shape_cast %6 : vector<1x120x96xbf16> to vector<120x96xbf16>
    %cst_6 = arith.constant dense<0.000000e+00> : vector<18x96xf32>
    %8 = tpu.matmul %5, %7, %cst_6 {dimension_numbers = #tpu.dot_dimension_numbers<[1], [0], [0], [1], [0, 0, 1, 1], [], []>} : vector<18x120xbf16>, vector<120x96xbf16>, vector<18x96xf32> -> vector<18x96xf32>
    %9 = arith.addf %4, %8 : vector<18x96xf32>
    %10 = vector.extract_strided_slice %0 {offsets = [2, 0], sizes = [18, 120], strides = [1, 1]} : vector<20x120xbf16> to vector<18x120xbf16>
    %c2 = arith.constant 2 : index
    %c0_7 = arith.constant 0 : index
    %c0_8 = arith.constant 0 : index
    %11 = vector.load %arg2[%c2, %c0_7, %c0_8] : memref<3x120x96xbf16, #tpu.memory_space<vmem>>, vector<1x120x96xbf16>
    %12 = vector.shape_cast %11 : vector<1x120x96xbf16> to vector<120x96xbf16>
    %cst_9 = arith.constant dense<0.000000e+00> : vector<18x96xf32>
    %13 = tpu.matmul %10, %12, %cst_9 {dimension_numbers = #tpu.dot_dimension_numbers<[1], [0], [0], [1], [0, 0, 1, 1], [], []>} : vector<18x120xbf16>, vector<120x96xbf16>, vector<18x96xf32> -> vector<18x96xf32>
    %14 = arith.addf %9, %13 : vector<18x96xf32>
    %c0_10 = arith.constant 0 : index
    %c0_11 = arith.constant 0 : index
    %15 = vector.load %arg7[%c0_10, %c0_11] : memref<18x1xf32, #tpu.memory_space<vmem>>, vector<18x1xf32>
    %16 = vector.broadcast %15 : vector<18x1xf32> to vector<18x96xf32>
    %17 = arith.mulf %14, %16 : vector<18x96xf32>
    %cst_12 = arith.constant dense<0.000000e+00> : vector<96xf32>
    %18 = vector.multi_reduction <add>, %17, %cst_12 [0] : vector<18x96xf32> to vector<96xf32>
    %19 = vector.shape_cast %18 : vector<96xf32> to vector<1x96xf32>
    %20 = arith.mulf %17, %14 : vector<18x96xf32>
    %cst_13 = arith.constant dense<0.000000e+00> : vector<96xf32>
    %21 = vector.multi_reduction <add>, %20, %cst_13 [0] : vector<18x96xf32> to vector<96xf32>
    %22 = vector.shape_cast %21 : vector<96xf32> to vector<1x96xf32>
    %23 = tpu.concatenate %19, %22 in 0 : vector<1x96xf32>, vector<1x96xf32> -> vector<2x96xf32>
    %c0_14 = arith.constant 0 : index
    %c0_15 = arith.constant 0 : index
    %24 = vector.load %arg3[%c0_14, %c0_15] : memref<96x12xf32, #tpu.memory_space<vmem>>, vector<96x12xf32>
    %cst_16 = arith.constant dense<0.000000e+00> : vector<2x12xf32>
    %25 = tpu.matmul %23, %24, %cst_16 {dimension_numbers = #tpu.dot_dimension_numbers<[1], [0], [0], [1], [0, 0, 1, 1], [], []>} : vector<2x96xf32>, vector<96x12xf32>, vector<2x12xf32> -> vector<2x12xf32>
    %c0_17 = arith.constant 0 : index
    %c0_18 = arith.constant 0 : index
    %26 = vector.load %arg4[%c0_17, %c0_18] : memref<12x96xf32, #tpu.memory_space<vmem>>, vector<12x96xf32>
    %cst_19 = arith.constant dense<0.000000e+00> : vector<2x96xf32>
    %27 = tpu.matmul %25, %26, %cst_19 {dimension_numbers = #tpu.dot_dimension_numbers<[1], [0], [0], [1], [0, 0, 1, 1], [], []>} : vector<2x12xf32>, vector<12x96xf32>, vector<2x96xf32> -> vector<2x96xf32>
    %28 = vector.extract_strided_slice %27 {offsets = [0, 0], sizes = [1, 96], strides = [1, 1]} : vector<2x96xf32> to vector<1x96xf32>
    %cst_20 = arith.constant 7.812500e-03 : f32
    %29 = vector.broadcast %cst_20 : f32 to vector<1x96xf32>
    %30 = arith.mulf %28, %29 : vector<1x96xf32>
    %31 = vector.extract_strided_slice %27 {offsets = [1, 0], sizes = [1, 96], strides = [1, 1]} : vector<2x96xf32> to vector<1x96xf32>
    %cst_21 = arith.constant 7.812500e-03 : f32
    %32 = vector.broadcast %cst_21 : f32 to vector<1x96xf32>
    %33 = arith.mulf %31, %32 : vector<1x96xf32>
    %34 = arith.mulf %30, %30 : vector<1x96xf32>
    %35 = arith.subf %33, %34 : vector<1x96xf32>
    %c0_22 = arith.constant 0 : index
    %c0_23 = arith.constant 0 : index
    %36 = vector.load %arg8[%c0_22, %c0_23] : memref<1x96xf32, #tpu.memory_space<vmem>>, vector<1x96xf32>
    %cst_24 = arith.constant 9.99999974E-6 : f32
    %37 = vector.broadcast %cst_24 : f32 to vector<1x96xf32>
    %38 = arith.addf %35, %37 : vector<1x96xf32>
    %39 = math.rsqrt %38 : vector<1x96xf32>
    %40 = arith.mulf %36, %39 : vector<1x96xf32>
    %c0_25 = arith.constant 0 : index
    %c0_26 = arith.constant 0 : index
    %41 = vector.load %arg9[%c0_25, %c0_26] : memref<1x96xf32, #tpu.memory_space<vmem>>, vector<1x96xf32>
    %42 = arith.mulf %30, %40 : vector<1x96xf32>
    %43 = arith.subf %41, %42 : vector<1x96xf32>
    %44 = vector.broadcast %40 : vector<1x96xf32> to vector<18x96xf32>
    %45 = arith.mulf %14, %44 : vector<18x96xf32>
    %46 = vector.broadcast %43 : vector<1x96xf32> to vector<18x96xf32>
    %47 = arith.addf %45, %46 : vector<18x96xf32>
    %cst_27 = arith.constant 0.000000e+00 : f32
    %48 = vector.broadcast %cst_27 : f32 to vector<18x96xf32>
    %49 = arith.maximumf %47, %48 : vector<18x96xf32>
    %50 = arith.truncf %49 : vector<18x96xf32> to vector<18x96xbf16>
    %c0_28 = arith.constant 0 : index
    %c0_29 = arith.constant 0 : index
    %c0_30 = arith.constant 0 : index
    %51 = vector.load %arg5[%c0_28, %c0_29, %c0_30] : memref<2x8x18xbf16, #tpu.memory_space<vmem>>, vector<1x8x18xbf16>
    %52 = vector.shape_cast %51 : vector<1x8x18xbf16> to vector<8x18xbf16>
    %cst_31 = arith.constant dense<0.000000e+00> : vector<8x96xf32>
    %53 = tpu.matmul %52, %50, %cst_31 {dimension_numbers = #tpu.dot_dimension_numbers<[1], [0], [0], [1], [0, 0, 1, 1], [], []>} : vector<8x18xbf16>, vector<18x96xbf16>, vector<8x96xf32> -> vector<8x96xf32>
    %c1_32 = arith.constant 1 : index
    %c0_33 = arith.constant 0 : index
    %c0_34 = arith.constant 0 : index
    %54 = vector.load %arg5[%c1_32, %c0_33, %c0_34] : memref<2x8x18xbf16, #tpu.memory_space<vmem>>, vector<1x8x18xbf16>
    %55 = vector.shape_cast %54 : vector<1x8x18xbf16> to vector<8x18xbf16>
    %cst_35 = arith.constant dense<0.000000e+00> : vector<8x96xf32>
    %56 = tpu.matmul %55, %50, %cst_35 {dimension_numbers = #tpu.dot_dimension_numbers<[1], [0], [0], [1], [0, 0, 1, 1], [], []>} : vector<8x18xbf16>, vector<18x96xbf16>, vector<8x96xf32> -> vector<8x96xf32>
    %57 = arith.maximumf %53, %56 : vector<8x96xf32>
    %58 = arith.truncf %57 : vector<8x96xf32> to vector<8x96xbf16>
    %c0_36 = arith.constant 0 : index
    %c0_37 = arith.constant 0 : index
    %c0_38 = arith.constant 0 : index
    %59 = vector.load %arg6[%c0_36, %c0_37, %c0_38] : memref<2x96x48xbf16, #tpu.memory_space<vmem>>, vector<1x96x48xbf16>
    %60 = vector.shape_cast %59 : vector<1x96x48xbf16> to vector<96x48xbf16>
    %cst_39 = arith.constant dense<0.000000e+00> : vector<8x48xf32>
    %61 = tpu.matmul %58, %60, %cst_39 {dimension_numbers = #tpu.dot_dimension_numbers<[1], [0], [0], [1], [0, 0, 1, 1], [], []>} : vector<8x96xbf16>, vector<96x48xbf16>, vector<8x48xf32> -> vector<8x48xf32>
    %c1_40 = arith.constant 1 : index
    %c0_41 = arith.constant 0 : index
    %c0_42 = arith.constant 0 : index
    %62 = vector.load %arg6[%c1_40, %c0_41, %c0_42] : memref<2x96x48xbf16, #tpu.memory_space<vmem>>, vector<1x96x48xbf16>
    %63 = vector.shape_cast %62 : vector<1x96x48xbf16> to vector<96x48xbf16>
    %cst_43 = arith.constant dense<0.000000e+00> : vector<8x48xf32>
    %64 = tpu.matmul %58, %63, %cst_43 {dimension_numbers = #tpu.dot_dimension_numbers<[1], [0], [0], [1], [0, 0, 1, 1], [], []>} : vector<8x96xbf16>, vector<96x48xbf16>, vector<8x48xf32> -> vector<8x48xf32>
    %65 = arith.maximumf %61, %64 : vector<8x48xf32>
    %66 = arith.truncf %65 : vector<8x48xf32> to vector<8x48xbf16>
    %c0_44 = arith.constant 0 : index
    %c0_45 = arith.constant 0 : index
    %67 = vector.load %arg10[%c0_44, %c0_45] : memref<8x48xbf16, #tpu.memory_space<vmem>>, vector<8x48xbf16>
    tpu.vector_store %arg10[%c0_44, %c0_45], %66 {strides = array<i32>} : memref<8x48xbf16, #tpu.memory_space<vmem>>, vector<8x48xbf16>,
    return
  }
  func.func @transform_0(%arg0: i32) -> (i32, i32) {
    %c0_i32 = arith.constant 0 : i32
    %c0_i32_0 = arith.constant 0 : i32
    %c0_i32_1 = arith.constant 0 : i32
    return %c0_i32, %c0_i32_0 : i32, i32
  }
  func.func @transform_1(%arg0: i32) -> (i32, i32, i32) {
    %c0_i32 = arith.constant 0 : i32
    %c0_i32_0 = arith.constant 0 : i32
    %c0_i32_1 = arith.constant 0 : i32
    %c0_i32_2 = arith.constant 0 : i32
    return %c0_i32, %c0_i32_0, %c0_i32_1 : i32, i32, i32
  }
  func.func @transform_2(%arg0: i32) -> (i32, i32) {
    %c0_i32 = arith.constant 0 : i32
    %c0_i32_0 = arith.constant 0 : i32
    %c0_i32_1 = arith.constant 0 : i32
    return %c0_i32, %c0_i32_0 : i32, i32
  }
  func.func @transform_3(%arg0: i32) -> (i32, i32) {
    %c0_i32 = arith.constant 0 : i32
    %c0_i32_0 = arith.constant 0 : i32
    %c0_i32_1 = arith.constant 0 : i32
    return %c0_i32, %c0_i32_0 : i32, i32
  }
  func.func @transform_4(%arg0: i32) -> (i32, i32, i32) {
    %c0_i32 = arith.constant 0 : i32
    %c0_i32_0 = arith.constant 0 : i32
    %c0_i32_1 = arith.constant 0 : i32
    %c0_i32_2 = arith.constant 0 : i32
    return %c0_i32, %c0_i32_0, %c0_i32_1 : i32, i32, i32
  }
  func.func @transform_5(%arg0: i32) -> (i32, i32, i32) {
    %c0_i32 = arith.constant 0 : i32
    %c0_i32_0 = arith.constant 0 : i32
    %c0_i32_1 = arith.constant 0 : i32
    %c0_i32_2 = arith.constant 0 : i32
    return %c0_i32, %c0_i32_0, %c0_i32_1 : i32, i32, i32
  }
  func.func @transform_6(%arg0: i32) -> (i32, i32) {
    %c0_i32 = arith.constant 0 : i32
    %c0_i32_0 = arith.constant 0 : i32
    %c0_i32_1 = arith.constant 0 : i32
    return %c0_i32, %c0_i32_0 : i32, i32
  }
  func.func @transform_7(%arg0: i32) -> (i32, i32) {
    %c0_i32 = arith.constant 0 : i32
    %c0_i32_0 = arith.constant 0 : i32
    %c0_i32_1 = arith.constant 0 : i32
    return %c0_i32, %c0_i32_0 : i32, i32
  }
  func.func @transform_8(%arg0: i32) -> (i32, i32) {
    %c0_i32 = arith.constant 0 : i32
    %c0_i32_0 = arith.constant 0 : i32
    %c0_i32_1 = arith.constant 0 : i32
    return %c0_i32, %c0_i32_0 : i32, i32
  }
  func.func @transform_9(%arg0: i32) -> (i32, i32) {
    %c0_i32 = arith.constant 0 : i32
    %c0_i32_0 = arith.constant 0 : i32
    %c0_i32_1 = arith.constant 0 : i32
    return %c0_i32, %c0_i32_0 : i32, i32
  }
}

module attributes {stable_mosaic.version = 11 : i64} {
  func.func @mlp_kernel(%arg0: i32, %arg1: memref<2x192xbf16, #tpu.memory_space<vmem>>, %arg2: memref<192x64xbf16, #tpu.memory_space<vmem>>, %arg3: memref<1x64xf32, #tpu.memory_space<vmem>>, %arg4: memref<64x17xbf16, #tpu.memory_space<vmem>>, %arg5: memref<1x17xf32, #tpu.memory_space<vmem>>, %arg6: memref<2x17xf32, #tpu.memory_space<vmem>>) attributes {dimension_semantics = [#tpu.dimension_semantics<arbitrary>], iteration_bounds = array<i64: 1>, scalar_prefetch = 0 : i64, scratch_operands = 0 : i64, tpu.core_type = #tpu.core_type<tc>, window_params = [{pipeline_mode = #tpu.pipeline_mode<synchronous>, transform_indices = @transform_0, window_bounds = array<i64: 2, 192>}, {pipeline_mode = #tpu.pipeline_mode<synchronous>, transform_indices = @transform_1, window_bounds = array<i64: 192, 64>}, {pipeline_mode = #tpu.pipeline_mode<synchronous>, transform_indices = @transform_2, window_bounds = array<i64: 1, 64>}, {pipeline_mode = #tpu.pipeline_mode<synchronous>, transform_indices = @transform_3, window_bounds = array<i64: 64, 17>}, {pipeline_mode = #tpu.pipeline_mode<synchronous>, transform_indices = @transform_4, window_bounds = array<i64: 1, 17>}, {pipeline_mode = #tpu.pipeline_mode<synchronous>, transform_indices = @transform_5, window_bounds = array<i64: 2, 17>}]} {
    %c0 = arith.constant 0 : index
    %c0_0 = arith.constant 0 : index
    %0 = vector.load %arg1[%c0, %c0_0] : memref<2x192xbf16, #tpu.memory_space<vmem>>, vector<2x192xbf16>
    %c0_1 = arith.constant 0 : index
    %c0_2 = arith.constant 0 : index
    %1 = vector.load %arg2[%c0_1, %c0_2] : memref<192x64xbf16, #tpu.memory_space<vmem>>, vector<192x64xbf16>
    %cst = arith.constant dense<0.000000e+00> : vector<2x64xf32>
    %2 = tpu.matmul %0, %1, %cst {dimension_numbers = #tpu.dot_dimension_numbers<[1], [0], [0], [1], [0, 0, 1, 1], [], []>} : vector<2x192xbf16>, vector<192x64xbf16>, vector<2x64xf32> -> vector<2x64xf32>
    %c0_3 = arith.constant 0 : index
    %c0_4 = arith.constant 0 : index
    %3 = vector.load %arg3[%c0_3, %c0_4] : memref<1x64xf32, #tpu.memory_space<vmem>>, vector<1x64xf32>
    %4 = vector.broadcast %3 : vector<1x64xf32> to vector<2x64xf32>
    %5 = arith.addf %2, %4 : vector<2x64xf32>
    %6 = arith.truncf %5 : vector<2x64xf32> to vector<2x64xbf16>
    %c0_5 = arith.constant 0 : index
    %c0_6 = arith.constant 0 : index
    %7 = vector.load %arg4[%c0_5, %c0_6] : memref<64x17xbf16, #tpu.memory_space<vmem>>, vector<64x17xbf16>
    %cst_7 = arith.constant dense<0.000000e+00> : vector<2x17xf32>
    %8 = tpu.matmul %6, %7, %cst_7 {dimension_numbers = #tpu.dot_dimension_numbers<[1], [0], [0], [1], [0, 0, 1, 1], [], []>} : vector<2x64xbf16>, vector<64x17xbf16>, vector<2x17xf32> -> vector<2x17xf32>
    %c0_8 = arith.constant 0 : index
    %c0_9 = arith.constant 0 : index
    %9 = vector.load %arg5[%c0_8, %c0_9] : memref<1x17xf32, #tpu.memory_space<vmem>>, vector<1x17xf32>
    %10 = vector.broadcast %9 : vector<1x17xf32> to vector<2x17xf32>
    %11 = arith.addf %8, %10 : vector<2x17xf32>
    %c0_10 = arith.constant 0 : index
    %c0_11 = arith.constant 0 : index
    %12 = vector.load %arg6[%c0_10, %c0_11] : memref<2x17xf32, #tpu.memory_space<vmem>>, vector<2x17xf32>
    tpu.vector_store %arg6[%c0_10, %c0_11], %11 {strides = array<i32>} : memref<2x17xf32, #tpu.memory_space<vmem>>, vector<2x17xf32>,
    return
  }
  func.func @transform_0(%arg0: i32) -> (i32, i32) {
    %c0_i32 = arith.constant 0 : i32
    %c0_i32_0 = arith.constant 0 : i32
    %c0_i32_1 = arith.constant 0 : i32
    return %c0_i32, %c0_i32_0 : i32, i32
  }
  func.func @transform_1(%arg0: i32) -> (i32, i32) {
    %c0_i32 = arith.constant 0 : i32
    %c0_i32_0 = arith.constant 0 : i32
    %c0_i32_1 = arith.constant 0 : i32
    return %c0_i32, %c0_i32_0 : i32, i32
  }
  func.func @transform_2(%arg0: i32) -> (i32, i32) {
    %c0_i32 = arith.constant 0 : i32
    %c0_i32_0 = arith.constant 0 : i32
    %c0_i32_1 = arith.constant 0 : i32
    return %c0_i32, %c0_i32_0 : i32, i32
  }
  func.func @transform_3(%arg0: i32) -> (i32, i32) {
    %c0_i32 = arith.constant 0 : i32
    %c0_i32_0 = arith.constant 0 : i32
    %c0_i32_1 = arith.constant 0 : i32
    return %c0_i32, %c0_i32_0 : i32, i32
  }
  func.func @transform_4(%arg0: i32) -> (i32, i32) {
    %c0_i32 = arith.constant 0 : i32
    %c0_i32_0 = arith.constant 0 : i32
    %c0_i32_1 = arith.constant 0 : i32
    return %c0_i32, %c0_i32_0 : i32, i32
  }
  func.func @transform_5(%arg0: i32) -> (i32, i32) {
    %c0_i32 = arith.constant 0 : i32
    %c0_i32_0 = arith.constant 0 : i32
    %c0_i32_1 = arith.constant 0 : i32
    return %c0_i32, %c0_i32_0 : i32, i32
  }
}

</mosaic_0001>

<llo_original>
// kernel: convnet_forward.7
$region0: #{convnet_forward.7}
  #allocation0 [shape = 'u32[]', space=smem, size = 0x4, offset = 0x4, fixed_abs, tag = 'smem constant byte address 0x4 - core index']
  #allocation1 [shape = 'u32[144,128]{1,0:T(1,128)}', space=vmem, size = 0x12000, scoped, tag = 'internal scratch']
  %s0 = inlined_call_operand.vmem [shape: bf16[2,192], index: 0, kind: input, shape index: {}]
  %s1 = inlined_call_operand.vmem [shape: bf16[192,64], index: 1, kind: input, shape index: {}]
  %s2 = inlined_call_operand.vmem [shape: f32[1,64], index: 2, kind: input, shape index: {}]
  %s3 = inlined_call_operand.vmem [shape: bf16[64,17], index: 3, kind: input, shape index: {}]
  %s4 = inlined_call_operand.vmem [shape: f32[1,17], index: 4, kind: input, shape index: {}]
  %s5 = inlined_call_operand.hbm [shape: f32[2,17], index: 5, kind: output, shape index: {}]
  %s6 = sld [smem:[#allocation0]]
  $region30: #{convnet_forward.7} parent=0
    _
  %s8 = ssub.s32 1, %s6
  %s9 = scalar_select 0, %s8, %s6
  $region1: #{convnet_forward.7} parent=0
    #allocation2 [shape = 'u8[1024]{0}', space=vmem, size = 0x400, scoped, tag = 'output window, operand 0, single buffered']
    #allocation3 [shape = 's32[1]{0}', space=sflag, size = 0x4, scoped, tag = 'scoped memory for convnet_forward.7']
    %10 = vsyncpa [#allocation3], 0
    // Predicated region
    $region2: #{convnet_forward.7} parent=1 // pred_check
      _
    $region3: #{convnet_forward.7} parent=1 // pred_check_branch
      %12 = sbr.rel (0) target = $region5
    $region4: #{convnet_forward.7} parent=1 // pred_region
      _
    $region5: #{convnet_forward.7} parent=1 // pred_fallthru
      _
    // Predicated region
    $region6: #{convnet_forward.7} parent=1 // pred_check
      _
    $region7: #{convnet_forward.7} parent=1 // pred_check_branch
      %14 = sbr.rel (0) target = $region9
    $region8: #{convnet_forward.7} parent=1 // pred_region
      _
    $region9: #{convnet_forward.7} parent=1 // pred_fallthru
      _
    // Predicated region
    $region10: #{convnet_forward.7} parent=1 // pred_check
      _
    $region11: #{convnet_forward.7} parent=1 // pred_check_branch
      %16 = sbr.rel (0) target = $region13
    $region12: #{convnet_forward.7} parent=1 // pred_region
      _
    $region13: #{convnet_forward.7} parent=1 // pred_fallthru
      _
    // Predicated region
    $region14: #{convnet_forward.7} parent=1 // pred_check
      _
    $region15: #{convnet_forward.7} parent=1 // pred_check_branch
      %18 = sbr.rel (0) target = $region17
    $region16: #{convnet_forward.7} parent=1 // pred_region
      _
    $region17: #{convnet_forward.7} parent=1 // pred_fallthru
      _
    // Predicated region
    $region18: #{convnet_forward.7} parent=1 // pred_check
      _
    $region19: #{convnet_forward.7} parent=1 // pred_check_branch
      %20 = sbr.rel (0) target = $region21
    $region20: #{convnet_forward.7} parent=1 // pred_region
      _
    $region21: #{convnet_forward.7} parent=1 // pred_fallthru
      _
    %v22 = vld [vmem:[%s0] sm:$0x3]
    %v23 = vld [vmem:[%s1] sm:$0xf]
    %v24 = vld [vmem:[%s1 + $0x4] sm:$0xf]
    %v25 = vld [vmem:[%s1 + $0x8] sm:$0xf]
    %v26 = vld [vmem:[%s1 + $0xc] sm:$0xf]
    %v27 = vld [vmem:[%s1 + $0x10] sm:$0xf]
    %v28 = vld [vmem:[%s1 + $0x14] sm:$0xf]
    %v29 = vld [vmem:[%s1 + $0x18] sm:$0xf]
    %v30 = vld [vmem:[%s1 + $0x1c] sm:$0xf]
    %v31 = vld [vmem:[%s1 + $0x20] sm:$0xf]
    %v32 = vld [vmem:[%s1 + $0x24] sm:$0xf]
    %v33 = vld [vmem:[%s1 + $0x28] sm:$0xf]
    %v34 = vld [vmem:[%s1 + $0x2c] sm:$0xf]
    %v35 = vld [vmem:[%s1 + $0x30] sm:$0xf]
    %v36 = vld [vmem:[%s1 + $0x34] sm:$0xf]
    %v37 = vld [vmem:[%s1 + $0x38] sm:$0xf]
    %v38 = vld [vmem:[%s1 + $0x3c] sm:$0xf]
    %v39 = vld [vmem:[%s1 + $0x40] sm:$0xf]
    %v40 = vld [vmem:[%s1 + $0x44] sm:$0xf]
    %v41 = vld [vmem:[%s1 + $0x48] sm:$0xf]
    %v42 = vld [vmem:[%s1 + $0x4c] sm:$0xf]
    %v43 = vld [vmem:[%s1 + $0x50] sm:$0xf]
    %v44 = vld [vmem:[%s1 + $0x54] sm:$0xf]
    %v45 = vld [vmem:[%s1 + $0x58] sm:$0xf]
    %v46 = vld [vmem:[%s1 + $0x5c] sm:$0xf]
    %v47 = vld [vmem:[%s2] sm:$0x1]
    %v49 = vlaneseq
    %v50 = vshrl.u32 %v49, 7
    %v51 = vsub.s32 0, %v50
    %v52 = vrot.slane %v47, %v51
    %v56 = vunpack.c.l.s4 1966171168
    %v57 = vunpack.c.0.s8 %v56
    %v58 = vlaneseq
    %v59 = vshrl.u32 %v58, 7
    %v60 = vsub.s32 %v57, %v59
    %v61 = vrot.slane %v22, %v60
    %v62 = vcombine.high %v61, %v61
    %v64 = vunpack.c.l.s4 1966171168
    %v65 = vunpack.c.0.s8 %v64
    %v66 = vlaneseq
    %v67 = vshrl.u32 %v66, 7
    %v68 = vsub.s32 %v65, %v67
    %v69 = vrot.slane %v61, %v68
    %v71 = vunpack.c.l.s4 1966171168
    %v72 = vunpack.c.0.s8 %v71
    %v73 = vlaneseq
    %v74 = vshrl.u32 %v73, 7
    %v75 = vsub.s32 %v72, %v74
    %v76 = vrot.slane %v62, %v75
    %v102 = vunpack.c.l.b16 %v23
    %v103 = vunpack.c.l.b16 %v24
    %v104 = vunpack.c.l.b16 %v25
    %v105 = vunpack.c.l.b16 %v26
    %v106 = vunpack.c.l.b16 %v27
    %v107 = vunpack.c.l.b16 %v28
    %v108 = vunpack.c.l.b16 %v29
    %v109 = vunpack.c.l.b16 %v30
    %v110 = vunpack.c.l.b16 %v31
    %v111 = vunpack.c.l.b16 %v32
    %v112 = vunpack.c.l.b16 %v33
    %v113 = vunpack.c.l.b16 %v34
    %v114 = vunpack.c.l.b16 %v35
    %v115 = vunpack.c.l.b16 %v36
    %v116 = vunpack.c.l.b16 %v37
    %v117 = vunpack.c.l.b16 %v38
    %v118 = vunpack.c.l.b16 %v39
    %v119 = vunpack.c.l.b16 %v40
    %v120 = vunpack.c.l.b16 %v41
    %v121 = vunpack.c.l.b16 %v42
    %v122 = vunpack.c.l.b16 %v43
    %v123 = vunpack.c.l.b16 %v44
    %v124 = vunpack.c.l.b16 %v45
    %v125 = vunpack.c.l.b16 %v46
    %v126 = vpack.c.b16 %v103, %v102
    %v127 = vpack.c.b16 %v105, %v104
    %v128 = vpack.c.b16 %v107, %v106
    %v129 = vpack.c.b16 %v109, %v108
    %v130 = vpack.c.b16 %v111, %v110
    %v131 = vpack.c.b16 %v113, %v112
    %v132 = vpack.c.b16 %v115, %v114
    %v133 = vpack.c.b16 %v117, %v116
    %v134 = vpack.c.b16 %v119, %v118
    %v135 = vpack.c.b16 %v121, %v120
    %v136 = vpack.c.b16 %v123, %v122
    %v137 = vpack.c.b16 %v125, %v124
    %vm150 = vcmask 523264
    %v152 = vsel %vm150, %v76, 0
    %154 = vmatprep.subr.bf16.mxu0 0
    %155 = vmatpush1.bf16.msra.mxu0 %v126
    %156 = vmatprep.subr.bf16.mxu0 0
    %157 = vmatpush1.bf16.msra.mxu0 %v127
    %158 = vmatprep.subr.bf16.mxu0 0
    %159 = vmatpush1.bf16.msra.mxu0 %v128
    %160 = vmatprep.subr.bf16.mxu0 0
    %161 = vmatpush1.bf16.msra.mxu0 %v129
    %162 = vmatprep.subr.bf16.mxu0 0
    %163 = vmatpush1.bf16.msra.mxu0 %v130
    %164 = vmatprep.subr.bf16.mxu0 0
    %165 = vmatpush1.bf16.msra.mxu0 %v131
    %166 = vmatprep.subr.bf16.mxu0 0
    %167 = vmatpush1.bf16.msra.mxu0 %v132
    %168 = vmatprep.subr.bf16.mxu0 0
    %169 = vmatpush1.bf16.msra.mxu0 %v133
    %170 = vmatprep.subr.bf16.mxu0 0
    %171 = vmatpush1.bf16.msra.mxu0 %v134
    %172 = vmatprep.subr.bf16.mxu0 0
    %173 = vmatpush1.bf16.msra.mxu0 %v135
    %174 = vmatprep.subr.bf16.mxu0 0
    %175 = vmatpush1.bf16.msra.mxu0 %v136
    %176 = vmatprep.subr.bf16.mxu0 0
    %177 = vmatpush1.bf16.msra.mxu0 %v137
    %178 = vmatprep.subr.bf16.mxu0 0
    %179 = vmatpush1.bf16.msra.mxu0 0
    %180 = vmatprep.subr.bf16.mxu0 0
    %181 = vmatpush1.bf16.msra.mxu0 0
    %182 = vmatprep.subr.bf16.mxu0 0
    %183 = vmatpush1.bf16.msra.mxu0 0
    %184 = vmatprep.subr.bf16.mxu0 0
    %185 = vmatpush1.bf16.msra.mxu0 0
    %186 = vmatprep.mubr.bf16.mxu0 %v152
    %187 = vmatmul.mubr.bf16.gmra.mrb[0].mxu0 %v69
    %v188 = vpop.f32.mrb[0].mxu0
    %v189 = vadd.f32 %v52, %v188
    %v190 = vpop.f32.mrb[0].mxu0
    %v191 = vpop.f32.mrb[0].mxu0
    %v192 = vpop.f32.mrb[0].mxu0
    %193 = vdwg.mxu0
    %v194 = vpack.c.bf16 %v189, %v189
    %v195 = vld [vmem:[%s3] sm:$0xf]
    %v196 = vld [vmem:[%s3 + $0x4] sm:$0xf]
    %v197 = vld [vmem:[%s3 + $0x8] sm:$0xf]
    %v198 = vld [vmem:[%s3 + $0xc] sm:$0xf]
    %v199 = vld [vmem:[%s3 + $0x10] sm:$0xf]
    %v200 = vld [vmem:[%s3 + $0x14] sm:$0xf]
    %v201 = vld [vmem:[%s3 + $0x18] sm:$0xf]
    %v202 = vld [vmem:[%s3 + $0x1c] sm:$0xf]
    %v203 = vld [vmem:[%s4] sm:$0x1]
    %v205 = vlaneseq
    %v206 = vshrl.u32 %v205, 7
    %v207 = vsub.s32 0, %v206
    %v208 = vrot.slane %v203, %v207
    %v218 = vunpack.c.l.b16 %v195
    %v219 = vunpack.c.l.b16 %v196
    %v220 = vunpack.c.l.b16 %v197
    %v221 = vunpack.c.l.b16 %v198
    %v222 = vunpack.c.l.b16 %v199
    %v223 = vunpack.c.l.b16 %v200
    %v224 = vunpack.c.l.b16 %v201
    %v225 = vunpack.c.l.b16 %v202
    %v226 = vpack.c.b16 %v219, %v218
    %v227 = vpack.c.b16 %v221, %v220
    %v228 = vpack.c.b16 %v223, %v222
    %v229 = vpack.c.b16 %v225, %v224
    %v235 = vsel %vm150, %v194, 0
    %237 = vmatprep.subr.bf16.mxu0 0
    %238 = vmatpush1.bf16.msra.mxu0 %v226
    %239 = vmatprep.subr.bf16.mxu0 0
    %240 = vmatpush1.bf16.msra.mxu0 %v227
    %241 = vmatprep.subr.bf16.mxu0 0
    %242 = vmatpush1.bf16.msra.mxu0 %v228
    %243 = vmatprep.subr.bf16.mxu0 0
    %244 = vmatpush1.bf16.msra.mxu0 %v229
    %245 = vmatprep.subr.bf16.mxu0 0
    %246 = vmatpush1.bf16.msra.mxu0 0
    %247 = vmatprep.subr.bf16.mxu0 0
    %248 = vmatpush1.bf16.msra.mxu0 0
    %249 = vmatprep.subr.bf16.mxu0 0
    %250 = vmatpush1.bf16.msra.mxu0 0
    %251 = vmatprep.subr.bf16.mxu0 0
    %252 = vmatpush1.bf16.msra.mxu0 0
    %253 = vmatprep.subr.bf16.mxu0 0
    %254 = vmatpush1.bf16.msra.mxu0 0
    %255 = vmatprep.subr.bf16.mxu0 0
    %256 = vmatpush1.bf16.msra.mxu0 0
    %257 = vmatprep.subr.bf16.mxu0 0
    %258 = vmatpush1.bf16.msra.mxu0 0
    %259 = vmatprep.subr.bf16.mxu0 0
    %260 = vmatpush1.bf16.msra.mxu0 0
    %261 = vmatprep.subr.bf16.mxu0 0
    %262 = vmatpush1.bf16.msra.mxu0 0
    %263 = vmatprep.subr.bf16.mxu0 0
    %264 = vmatpush1.bf16.msra.mxu0 0
    %265 = vmatprep.subr.bf16.mxu0 0
    %266 = vmatpush1.bf16.msra.mxu0 0
    %267 = vmatprep.subr.bf16.mxu0 0
    %268 = vmatpush1.bf16.msra.mxu0 0
    %269 = vmatprep.mubr.bf16.mxu0 0
    %270 = vmatmul.mubr.bf16.gmra.mrb[0].mxu0 %v235
    %v271 = vpop.f32.mrb[0].mxu0
    %v272 = vadd.f32 %v208, %v271
    %v273 = vpop.f32.mrb[0].mxu0
    %v274 = vpop.f32.mrb[0].mxu0
    %v275 = vpop.f32.mrb[0].mxu0
    %276 = vdwg.mxu0
    %vm277 = vcmask 132096
    %278 = vst.msk [vmem:[#allocation2] sm:$0x3] %vm277, %v272
    // Predicated region
    $region22: #{convnet_forward.7} parent=1 // pred_check
      _
    $region23: #{convnet_forward.7} parent=1 // pred_check_branch
      %280 = sbr.rel (0) target = $region25
    $region24: #{convnet_forward.7} parent=1 // pred_region
      %s282 = ssub.s32 32, 32
      %283 = vsyncadd [#allocation3], %s282
      %s285 = sshll.u32 [#allocation2], 4
      %s286 = int_to_ptr.vmem [resolvable:$true] %s285
      %288 = dma.vmem_to_hbm [thread:$0]  %s286, 32, %s5, [#allocation3]
    $region25: #{convnet_forward.7} parent=1 // pred_fallthru
      _
    // Predicated region
    $region26: #{convnet_forward.7} parent=1 // pred_check
      _
    $region27: #{convnet_forward.7} parent=1 // pred_check_branch
      %290 = sbr.rel (0) target = $region29
    $region28: #{convnet_forward.7} parent=1 // pred_region
      %291 = dma.done [#allocation3], 32
    $region29: #{convnet_forward.7} parent=1 // pred_fallthru
      _
    %292 = vsyncpa [#allocation3], 1

// kernel: convnet_forward.4
$region0: #{convnet_forward.4}
  #allocation0 [shape = 'u32[]', space=smem, size = 0x4, offset = 0x4, fixed_abs, tag = 'smem constant byte address 0x4 - core index']
  #allocation1 [shape = 'u32[144,128]{1,0:T(1,128)}', space=vmem, size = 0x12000, scoped, tag = 'internal scratch']
  %s0 = inlined_call_operand.vmem [shape: bf16[68,34], index: 0, kind: input, shape index: {}]
  %s1 = inlined_call_operand.vmem [shape: bf16[3,34,96], index: 1, kind: input, shape index: {}]
  %s2 = inlined_call_operand.vmem [shape: f32[96,3], index: 2, kind: input, shape index: {}]
  %s3 = inlined_call_operand.vmem [shape: f32[3,96], index: 3, kind: input, shape index: {}]
  %s4 = inlined_call_operand.vmem [shape: bf16[2,36,66], index: 4, kind: input, shape index: {}]
  %s5 = inlined_call_operand.vmem [shape: bf16[2,96,54], index: 5, kind: input, shape index: {}]
  %s6 = inlined_call_operand.vmem [shape: f32[66,1], index: 6, kind: input, shape index: {}]
  %s7 = inlined_call_operand.vmem [shape: f32[1,96], index: 7, kind: input, shape index: {}]
  %s8 = inlined_call_operand.vmem [shape: f32[1,96], index: 8, kind: input, shape index: {}]
  %s9 = inlined_call_operand.vmem [shape: bf16[36,54], index: 9, kind: output, shape index: {}]
  %s10 = sld [smem:[#allocation0]]
  $region46: #{convnet_forward.4} parent=0
    _
  %s12 = ssub.s32 1, %s10
  %s13 = scalar_select 0, %s12, %s10
  // Predicated region
  $region2: #{convnet_forward.4} parent=0 // pred_check
    _
  $region3: #{convnet_forward.4} parent=0 // pred_check_branch
    %15 = sbr.rel (0) target = $region5
  $region4: #{convnet_forward.4} parent=0 // pred_region
    _
  $region5: #{convnet_forward.4} parent=0 // pred_fallthru
    _
  // Predicated region
  $region6: #{convnet_forward.4} parent=0 // pred_check
    _
  $region7: #{convnet_forward.4} parent=0 // pred_check_branch
    %17 = sbr.rel (0) target = $region9
  $region8: #{convnet_forward.4} parent=0 // pred_region
    _
  $region9: #{convnet_forward.4} parent=0 // pred_fallthru
    _
  // Predicated region
  $region10: #{convnet_forward.4} parent=0 // pred_check
    _
  $region11: #{convnet_forward.4} parent=0 // pred_check_branch
    %19 = sbr.rel (0) target = $region13
  $region12: #{convnet_forward.4} parent=0 // pred_region
    _
  $region13: #{convnet_forward.4} parent=0 // pred_fallthru
    _
  // Predicated region
  $region14: #{convnet_forward.4} parent=0 // pred_check
    _
  $region15: #{convnet_forward.4} parent=0 // pred_check_branch
    %21 = sbr.rel (0) target = $region17
  $region16: #{convnet_forward.4} parent=0 // pred_region
    _
  $region17: #{convnet_forward.4} parent=0 // pred_fallthru
    _
  // Predicated region
  $region18: #{convnet_forward.4} parent=0 // pred_check
    _
  $region19: #{convnet_forward.4} parent=0 // pred_check_branch
    %23 = sbr.rel (0) target = $region21
  $region20: #{convnet_forward.4} parent=0 // pred_region
    _
  $region21: #{convnet_forward.4} parent=0 // pred_fallthru
    _
  // Predicated region
  $region22: #{convnet_forward.4} parent=0 // pred_check
    _
  $region23: #{convnet_forward.4} parent=0 // pred_check_branch
    %25 = sbr.rel (0) target = $region25
  $region24: #{convnet_forward.4} parent=0 // pred_region
    _
  $region25: #{convnet_forward.4} parent=0 // pred_fallthru
    _
  // Predicated region
  $region26: #{convnet_forward.4} parent=0 // pred_check
    _
  $region27: #{convnet_forward.4} parent=0 // pred_check_branch
    %27 = sbr.rel (0) target = $region29
  $region28: #{convnet_forward.4} parent=0 // pred_region
    _
  $region29: #{convnet_forward.4} parent=0 // pred_fallthru
    _
  // Predicated region
  $region30: #{convnet_forward.4} parent=0 // pred_check
    _
  $region31: #{convnet_forward.4} parent=0 // pred_check_branch
    %29 = sbr.rel (0) target = $region33
  $region32: #{convnet_forward.4} parent=0 // pred_region
    _
  $region33: #{convnet_forward.4} parent=0 // pred_fallthru
    _
  // Predicated region
  $region34: #{convnet_forward.4} parent=0 // pred_check
    _
  $region35: #{convnet_forward.4} parent=0 // pred_check_branch
    %31 = sbr.rel (0) target = $region37
  $region36: #{convnet_forward.4} parent=0 // pred_region
    _
  $region37: #{convnet_forward.4} parent=0 // pred_fallthru
    _
  %v33 = vld [vmem:[%s0] sm:$0xf]
  %v34 = vld [vmem:[%s0 + $0x4] sm:$0xf]
  %v35 = vld [vmem:[%s0 + $0x8] sm:$0xf]
  %v36 = vld [vmem:[%s0 + $0xc] sm:$0xf]
  %v37 = vld [vmem:[%s0 + $0x10] sm:$0xf]
  %v38 = vld [vmem:[%s0 + $0x14] sm:$0xf]
  %v39 = vld [vmem:[%s0 + $0x18] sm:$0xf]
  %v40 = vld [vmem:[%s0 + $0x1c] sm:$0xf]
  %v41 = vld [vmem:[%s0 + $0x20] sm:$0x3]
  %v42 = vld [vmem:[%s1] sm:$0xf]
  %v43 = vld [vmem:[%s1 + $0x4] sm:$0xf]
  %v44 = vld [vmem:[%s1 + $0x8] sm:$0xf]
  %v45 = vld [vmem:[%s1 + $0xc] sm:$0xf]
  %v46 = vld [vmem:[%s1 + $0x10] sm:$0x1]
  %s47 = scalar_lea.vmem %s1, 20
  %v48 = vld [vmem:[%s47] sm:$0xf]
  %v49 = vld [vmem:[%s47 + $0x4] sm:$0xf]
  %v50 = vld [vmem:[%s47 + $0x8] sm:$0xf]
  %v51 = vld [vmem:[%s47 + $0xc] sm:$0xf]
  %v52 = vld [vmem:[%s47 + $0x10] sm:$0x1]
  %v62 = vunpack.c.l.b16 %v33
  %v63 = vunpack.c.l.b16 %v34
  %v64 = vunpack.c.l.b16 %v35
  %v65 = vunpack.c.l.b16 %v36
  %v66 = vunpack.c.l.b16 %v37
  %v67 = vunpack.c.l.b16 %v38
  %v68 = vunpack.c.l.b16 %v39
  %v69 = vunpack.c.l.b16 %v40
  %v70 = vunpack.c.l.b16 %v41
  %v71 = vpack.c.b16 %v63, %v62
  %v72 = vpack.c.b16 %v65, %v64
  %v73 = vpack.c.b16 %v67, %v66
  %v74 = vpack.c.b16 %v69, %v68
  %v75 = vpack.c.b16 %v70, %v70
  %vm76 = vsmask.f32 7424
  %v78 = vshrl.u32 %v71, 16
  %v80 = vshll.u32 %v71, 16
  %v82 = vrot.slane %v80, 1
  %v83 = vor.u32 %v78, %v82
  %v85 = vshll.u32 %v72, 16
  %v87 = vrot.slane %v85, 1
  %v88 = vsel %vm76, %v83, %v87
  %v89 = vshrl.u32 %v72, 16
  %v91 = vor.u32 %v89, %v87
  %v93 = vshll.u32 %v73, 16
  %v95 = vrot.slane %v93, 1
  %v96 = vsel %vm76, %v91, %v95
  %v97 = vshrl.u32 %v73, 16
  %v99 = vor.u32 %v97, %v95
  %v101 = vshll.u32 %v74, 16
  %v103 = vrot.slane %v101, 1
  %v104 = vsel %vm76, %v99, %v103
  %v105 = vshrl.u32 %v74, 16
  %v107 = vor.u32 %v105, %v103
  %v109 = vshll.u32 %v75, 16
  %v111 = vrot.slane %v109, 1
  %v112 = vsel %vm76, %v107, %v111
  %v113 = vshrl.u32 %v75, 16
  %v115 = vor.u32 %v113, %v111
  %v121 = vunpack.c.l.b16 %v48
  %v122 = vunpack.c.l.b16 %v49
  %v123 = vunpack.c.l.b16 %v50
  %v124 = vunpack.c.l.b16 %v51
  %v125 = vunpack.c.l.b16 %v52
  %v126 = vpack.c.b16 %v122, %v121
  %v127 = vpack.c.b16 %v124, %v123
  %v128 = vpack.c.b16 %v125, %v125
  %vm131 = vcmask 277504
  %v133 = vsel %vm131, %v88, 0
  %v136 = vsel %vm131, %v96, 0
  %v139 = vsel %vm131, %v104, 0
  %v142 = vsel %vm131, %v112, 0
  %v145 = vsel %vm131, %v115, 0
  %vm147 = vcmask 1040384
  %v149 = vsel %vm147, %v128, 0
  %151 = vmatprep.subr.bf16.mxu0 0
  %152 = vmatpush1.bf16.msra.mxu0 %v126
  %153 = vmatprep.subr.bf16.mxu0 0
  %154 = vmatpush1.bf16.msra.mxu0 %v127
  %155 = vmatprep.subr.bf16.mxu0 0
  %156 = vmatpush1.bf16.msra.mxu0 %v149
  %157 = vmatprep.subr.bf16.mxu0 0
  %158 = vmatpush1.bf16.msra.mxu0 0
  %159 = vmatprep.subr.bf16.mxu0 0
  %160 = vmatpush1.bf16.msra.mxu0 0
  %161 = vmatprep.subr.bf16.mxu0 0
  %162 = vmatpush1.bf16.msra.mxu0 0
  %163 = vmatprep.subr.bf16.mxu0 0
  %164 = vmatpush1.bf16.msra.mxu0 0
  %165 = vmatprep.subr.bf16.mxu0 0
  %166 = vmatpush1.bf16.msra.mxu0 0
  %167 = vmatprep.subr.bf16.mxu0 0
  %168 = vmatpush1.bf16.msra.mxu0 0
  %169 = vmatprep.subr.bf16.mxu0 0
  %170 = vmatpush1.bf16.msra.mxu0 0
  %171 = vmatprep.subr.bf16.mxu0 0
  %172 = vmatpush1.bf16.msra.mxu0 0
  %173 = vmatprep.subr.bf16.mxu0 0
  %174 = vmatpush1.bf16.msra.mxu0 0
  %175 = vmatprep.subr.bf16.mxu0 0
  %176 = vmatpush1.bf16.msra.mxu0 0
  %177 = vmatprep.subr.bf16.mxu0 0
  %178 = vmatpush1.bf16.msra.mxu0 0
  %179 = vmatprep.subr.bf16.mxu0 0
  %180 = vmatpush1.bf16.msra.mxu0 0
  %181 = vmatprep.subr.bf16.mxu0 0
  %182 = vmatpush1.bf16.msra.mxu0 0
  %183 = vmatprep.mubr.bf16.mxu0 0
  %184 = vmatmul.mubr.bf16.gmra.mrb[0].mxu0 %v133
  %v185 = vpop.f32.mrb[0].mxu0
  %v186 = vadd.f32 0.0, %v185
  %v187 = vpop.f32.mrb[0].mxu0
  %v188 = vpop.f32.mrb[0].mxu0
  %v189 = vadd.f32 0.0, %v188
  %v190 = vpop.f32.mrb[0].mxu0
  %191 = vmatprep.mubr.bf16.mxu0 0
  %192 = vmatmul.mubr.bf16.gmra.mrb[0].mxu0 %v136
  %v193 = vpop.f32.mrb[0].mxu0
  %v194 = vadd.f32 0.0, %v193
  %v195 = vpop.f32.mrb[0].mxu0
  %v196 = vpop.f32.mrb[0].mxu0
  %v197 = vadd.f32 0.0, %v196
  %v198 = vpop.f32.mrb[0].mxu0
  %199 = vmatprep.mubr.bf16.mxu0 0
  %200 = vmatmul.mubr.bf16.gmra.mrb[0].mxu0 %v139
  %v201 = vpop.f32.mrb[0].mxu0
  %v202 = vadd.f32 0.0, %v201
  %v203 = vpop.f32.mrb[0].mxu0
  %v204 = vpop.f32.mrb[0].mxu0
  %v205 = vadd.f32 0.0, %v204
  %v206 = vpop.f32.mrb[0].mxu0
  %207 = vmatprep.mubr.bf16.mxu0 0
  %208 = vmatmul.mubr.bf16.gmra.mrb[0].mxu0 %v142
  %v209 = vpop.f32.mrb[0].mxu0
  %v210 = vadd.f32 0.0, %v209
  %v211 = vpop.f32.mrb[0].mxu0
  %v212 = vpop.f32.mrb[0].mxu0
  %v213 = vadd.f32 0.0, %v212
  %v214 = vpop.f32.mrb[0].mxu0
  %215 = vmatprep.mubr.bf16.mxu0 0
  %216 = vmatmul.mubr.bf16.gmra.mrb[0].mxu0 %v145
  %v217 = vpop.f32.mrb[0].mxu0
  %v218 = vadd.f32 0.0, %v217
  %v219 = vpop.f32.mrb[0].mxu0
  %v220 = vpop.f32.mrb[0].mxu0
  %v221 = vpop.f32.mrb[0].mxu0
  %222 = vdwg.mxu0
  %v228 = vunpack.c.l.b16 %v42
  %v229 = vunpack.c.l.b16 %v43
  %v230 = vunpack.c.l.b16 %v44
  %v231 = vunpack.c.l.b16 %v45
  %v232 = vunpack.c.l.b16 %v46
  %v233 = vpack.c.b16 %v229, %v228
  %v234 = vpack.c.b16 %v231, %v230
  %v235 = vpack.c.b16 %v232, %v232
  %v238 = vsel %vm131, %v71, 0
  %v240 = vsel %vm131, %v72, 0
  %v242 = vsel %vm131, %v73, 0
  %v244 = vsel %vm131, %v74, 0
  %v246 = vsel %vm131, %v75, 0
  %v249 = vsel %vm147, %v235, 0
  %251 = vmatprep.subr.bf16.mxu0 0
  %252 = vmatpush1.bf16.msra.mxu0 %v233
  %253 = vmatprep.subr.bf16.mxu0 0
  %254 = vmatpush1.bf16.msra.mxu0 %v234
  %255 = vmatprep.subr.bf16.mxu0 0
  %256 = vmatpush1.bf16.msra.mxu0 %v249
  %257 = vmatprep.subr.bf16.mxu0 0
  %258 = vmatpush1.bf16.msra.mxu0 0
  %259 = vmatprep.subr.bf16.mxu0 0
  %260 = vmatpush1.bf16.msra.mxu0 0
  %261 = vmatprep.subr.bf16.mxu0 0
  %262 = vmatpush1.bf16.msra.mxu0 0
  %263 = vmatprep.subr.bf16.mxu0 0
  %264 = vmatpush1.bf16.msra.mxu0 0
  %265 = vmatprep.subr.bf16.mxu0 0
  %266 = vmatpush1.bf16.msra.mxu0 0
  %267 = vmatprep.subr.bf16.mxu0 0
  %268 = vmatpush1.bf16.msra.mxu0 0
  %269 = vmatprep.subr.bf16.mxu0 0
  %270 = vmatpush1.bf16.msra.mxu0 0
  %271 = vmatprep.subr.bf16.mxu0 0
  %272 = vmatpush1.bf16.msra.mxu0 0
  %273 = vmatprep.subr.bf16.mxu0 0
  %274 = vmatpush1.bf16.msra.mxu0 0
  %275 = vmatprep.subr.bf16.mxu0 0
  %276 = vmatpush1.bf16.msra.mxu0 0
  %277 = vmatprep.subr.bf16.mxu0 0
  %278 = vmatpush1.bf16.msra.mxu0 0
  %279 = vmatprep.subr.bf16.mxu0 0
  %280 = vmatpush1.bf16.msra.mxu0 0
  %281 = vmatprep.subr.bf16.mxu0 0
  %282 = vmatpush1.bf16.msra.mxu0 0
  %283 = vmatprep.mubr.bf16.mxu0 0
  %284 = vmatmul.mubr.bf16.gmra.mrb[0].mxu0 %v238
  %v285 = vpop.f32.mrb[0].mxu0
  %v286 = vadd.f32 %v186, %v285
  %v287 = vpop.f32.mrb[0].mxu0
  %v288 = vpop.f32.mrb[0].mxu0
  %v289 = vadd.f32 %v189, %v288
  %v290 = vpop.f32.mrb[0].mxu0
  %291 = vmatprep.mubr.bf16.mxu0 0
  %292 = vmatmul.mubr.bf16.gmra.mrb[0].mxu0 %v240
  %v293 = vpop.f32.mrb[0].mxu0
  %v294 = vadd.f32 %v194, %v293
  %v295 = vpop.f32.mrb[0].mxu0
  %v296 = vpop.f32.mrb[0].mxu0
  %v297 = vadd.f32 %v197, %v296
  %v298 = vpop.f32.mrb[0].mxu0
  %299 = vmatprep.mubr.bf16.mxu0 0
  %300 = vmatmul.mubr.bf16.gmra.mrb[0].mxu0 %v242
  %v301 = vpop.f32.mrb[0].mxu0
  %v302 = vadd.f32 %v202, %v301
  %v303 = vpop.f32.mrb[0].mxu0
  %v304 = vpop.f32.mrb[0].mxu0
  %v305 = vadd.f32 %v205, %v304
  %v306 = vpop.f32.mrb[0].mxu0
  %307 = vmatprep.mubr.bf16.mxu0 0
  %308 = vmatmul.mubr.bf16.gmra.mrb[0].mxu0 %v244
  %v309 = vpop.f32.mrb[0].mxu0
  %v310 = vadd.f32 %v210, %v309
  %v311 = vpop.f32.mrb[0].mxu0
  %v312 = vpop.f32.mrb[0].mxu0
  %v313 = vadd.f32 %v213, %v312
  %v314 = vpop.f32.mrb[0].mxu0
  %315 = vmatprep.mubr.bf16.mxu0 0
  %316 = vmatmul.mubr.bf16.gmra.mrb[0].mxu0 %v246
  %v317 = vpop.f32.mrb[0].mxu0
  %v318 = vadd.f32 %v218, %v317
  %v319 = vpop.f32.mrb[0].mxu0
  %v320 = vpop.f32.mrb[0].mxu0
  %v321 = vpop.f32.mrb[0].mxu0
  %322 = vdwg.mxu0
  %s323 = scalar_lea.vmem %s1, 40
  %v324 = vld [vmem:[%s323] sm:$0xf]
  %v325 = vld [vmem:[%s323 + $0x4] sm:$0xf]
  %v326 = vld [vmem:[%s323 + $0x8] sm:$0xf]
  %v327 = vld [vmem:[%s323 + $0xc] sm:$0xf]
  %v328 = vld [vmem:[%s323 + $0x10] sm:$0x1]
  %vm329 = vcmask 1046528
  %v330 = vrot.slane %v71, 1
  %v331 = vrot.slane %v72, 1
  %v332 = vsel %vm329, %v330, %v331
  %v333 = vrot.slane %v73, 1
  %v334 = vsel %vm329, %v331, %v333
  %v335 = vrot.slane %v74, 1
  %v336 = vsel %vm329, %v333, %v335
  %v337 = vrot.slane %v75, 1
  %v338 = vsel %vm329, %v335, %v337
  %v344 = vunpack.c.l.b16 %v324
  %v345 = vunpack.c.l.b16 %v325
  %v346 = vunpack.c.l.b16 %v326
  %v347 = vunpack.c.l.b16 %v327
  %v348 = vunpack.c.l.b16 %v328
  %v349 = vpack.c.b16 %v345, %v344
  %v350 = vpack.c.b16 %v347, %v346
  %v351 = vpack.c.b16 %v348, %v348
  %v355 = vsel %vm131, %v332, 0
  %v358 = vsel %vm131, %v334, 0
  %v361 = vsel %vm131, %v336, 0
  %v364 = vsel %vm131, %v338, 0
  %v367 = vsel %vm131, %v337, 0
  %v370 = vsel %vm147, %v351, 0
  %372 = vmatprep.subr.bf16.mxu0 0
  %373 = vmatpush1.bf16.msra.mxu0 %v349
  %374 = vmatprep.subr.bf16.mxu0 0
  %375 = vmatpush1.bf16.msra.mxu0 %v350
  %376 = vmatprep.subr.bf16.mxu0 0
  %377 = vmatpush1.bf16.msra.mxu0 %v370
  %378 = vmatprep.subr.bf16.mxu0 0
  %379 = vmatpush1.bf16.msra.mxu0 0
  %380 = vmatprep.subr.bf16.mxu0 0
  %381 = vmatpush1.bf16.msra.mxu0 0
  %382 = vmatprep.subr.bf16.mxu0 0
  %383 = vmatpush1.bf16.msra.mxu0 0
  %384 = vmatprep.subr.bf16.mxu0 0
  %385 = vmatpush1.bf16.msra.mxu0 0
  %386 = vmatprep.subr.bf16.mxu0 0
  %387 = vmatpush1.bf16.msra.mxu0 0
  %388 = vmatprep.subr.bf16.mxu0 0
  %389 = vmatpush1.bf16.msra.mxu0 0
  %390 = vmatprep.subr.bf16.mxu0 0
  %391 = vmatpush1.bf16.msra.mxu0 0
  %392 = vmatprep.subr.bf16.mxu0 0
  %393 = vmatpush1.bf16.msra.mxu0 0
  %394 = vmatprep.subr.bf16.mxu0 0
  %395 = vmatpush1.bf16.msra.mxu0 0
  %396 = vmatprep.subr.bf16.mxu0 0
  %397 = vmatpush1.bf16.msra.mxu0 0
  %398 = vmatprep.subr.bf16.mxu0 0
  %399 = vmatpush1.bf16.msra.mxu0 0
  %400 = vmatprep.subr.bf16.mxu0 0
  %401 = vmatpush1.bf16.msra.mxu0 0
  %402 = vmatprep.subr.bf16.mxu0 0
  %403 = vmatpush1.bf16.msra.mxu0 0
  %404 = vmatprep.mubr.bf16.mxu0 0
  %405 = vmatmul.mubr.bf16.gmra.mrb[0].mxu0 %v355
  %v406 = vpop.f32.mrb[0].mxu0
  %v407 = vadd.f32 0.0, %v406
  %v408 = vpop.f32.mrb[0].mxu0
  %v409 = vpop.f32.mrb[0].mxu0
  %v410 = vadd.f32 0.0, %v409
  %v411 = vpop.f32.mrb[0].mxu0
  %412 = vmatprep.mubr.bf16.mxu0 0
  %413 = vmatmul.mubr.bf16.gmra.mrb[0].mxu0 %v358
  %v414 = vpop.f32.mrb[0].mxu0
  %v415 = vadd.f32 0.0, %v414
  %v416 = vpop.f32.mrb[0].mxu0
  %v417 = vpop.f32.mrb[0].mxu0
  %v418 = vadd.f32 0.0, %v417
  %v419 = vpop.f32.mrb[0].mxu0
  %420 = vmatprep.mubr.bf16.mxu0 0
  %421 = vmatmul.mubr.bf16.gmra.mrb[0].mxu0 %v361
  %v422 = vpop.f32.mrb[0].mxu0
  %v423 = vadd.f32 0.0, %v422
  %v424 = vpop.f32.mrb[0].mxu0
  %v425 = vpop.f32.mrb[0].mxu0
  %v426 = vadd.f32 0.0, %v425
  %v427 = vpop.f32.mrb[0].mxu0
  %428 = vmatprep.mubr.bf16.mxu0 0
  %429 = vmatmul.mubr.bf16.gmra.mrb[0].mxu0 %v364
  %v430 = vpop.f32.mrb[0].mxu0
  %v431 = vadd.f32 0.0, %v430
  %v432 = vpop.f32.mrb[0].mxu0
  %v433 = vpop.f32.mrb[0].mxu0
  %v434 = vadd.f32 0.0, %v433
  %v435 = vpop.f32.mrb[0].mxu0
  %436 = vmatprep.mubr.bf16.mxu0 0
  %437 = vmatmul.mubr.bf16.gmra.mrb[0].mxu0 %v367
  %v438 = vpop.f32.mrb[0].mxu0
  %v439 = vadd.f32 0.0, %v438
  %v440 = vpop.f32.mrb[0].mxu0
  %v441 = vpop.f32.mrb[0].mxu0
  %v442 = vpop.f32.mrb[0].mxu0
  %443 = vdwg.mxu0
  %v444 = vadd.f32 %v286, %v407
  %v445 = vadd.f32 %v289, %v410
  %v446 = vadd.f32 %v294, %v415
  %v447 = vadd.f32 %v297, %v418
  %v448 = vadd.f32 %v302, %v423
  %v449 = vadd.f32 %v305, %v426
  %v450 = vadd.f32 %v310, %v431
  %v451 = vadd.f32 %v313, %v434
  %v452 = vadd.f32 %v318, %v439
  %v453 = vld [vmem:[%s6] sm:$0xff]
  %v454 = vld [vmem:[%s6 + $0x8] sm:$0xff]
  %v455 = vld [vmem:[%s6 + $0x10] sm:$0xff]
  %v456 = vld [vmem:[%s6 + $0x18] sm:$0xff]
  %v457 = vld [vmem:[%s6 + $0x20] sm:$0xff]
  %v458 = vld [vmem:[%s6 + $0x28] sm:$0xff]
  %v459 = vld [vmem:[%s6 + $0x30] sm:$0xff]
  %v460 = vld [vmem:[%s6 + $0x38] sm:$0xff]
  %v461 = vld [vmem:[%s6 + $0x40] sm:$0x3]
  %463 = vset.pattern.permute.xlu0 0
  %464 = vperm.xlu0 %463, %v453
  %v465 = vpop.permute.xlu0 %464
  %468 = vset.pattern.permute.xlu0 0
  %469 = vperm.xlu0 %468, %v454
  %v470 = vpop.permute.xlu0 %469
  %473 = vset.pattern.permute.xlu0 0
  %474 = vperm.xlu0 %473, %v455
  %v475 = vpop.permute.xlu0 %474
  %478 = vset.pattern.permute.xlu0 0
  %479 = vperm.xlu0 %478, %v456
  %v480 = vpop.permute.xlu0 %479
  %483 = vset.pattern.permute.xlu0 0
  %484 = vperm.xlu0 %483, %v457
  %v485 = vpop.permute.xlu0 %484
  %488 = vset.pattern.permute.xlu0 0
  %489 = vperm.xlu0 %488, %v458
  %v490 = vpop.permute.xlu0 %489
  %493 = vset.pattern.permute.xlu0 0
  %494 = vperm.xlu0 %493, %v459
  %v495 = vpop.permute.xlu0 %494
  %498 = vset.pattern.permute.xlu0 0
  %499 = vperm.xlu0 %498, %v460
  %v500 = vpop.permute.xlu0 %499
  %503 = vset.pattern.permute.xlu0 0
  %504 = vperm.xlu0 %503, %v461
  %v505 = vpop.permute.xlu0 %504
  %v507 = vmul.f32 %v444, %v465
  %v508 = vmul.f32 %v445, %v470
  %v509 = vmul.f32 %v446, %v475
  %v510 = vmul.f32 %v447, %v480
  %v511 = vmul.f32 %v448, %v485
  %v512 = vmul.f32 %v449, %v490
  %v513 = vmul.f32 %v450, %v495
  %v514 = vmul.f32 %v451, %v500
  %v515 = vmul.f32 %v452, %v505
  %vm516 = vcmask 785408
  %v517 = vsel %vm516, %v507, 0.0
  %v518 = vsel %vm516, %v508, 0.0
  %v519 = vadd.f32 %v517, %v518
  %v520 = vsel %vm516, %v509, 0.0
  %v521 = vadd.f32 %v519, %v520
  %v522 = vsel %vm516, %v510, 0.0
  %v523 = vadd.f32 %v521, %v522
  %v524 = vsel %vm516, %v511, 0.0
  %v525 = vadd.f32 %v523, %v524
  %v526 = vsel %vm516, %v512, 0.0
  %v527 = vadd.f32 %v525, %v526
  %v528 = vsel %vm516, %v513, 0.0
  %v529 = vadd.f32 %v527, %v528
  %v530 = vsel %vm516, %v514, 0.0
  %v531 = vadd.f32 %v529, %v530
  %vm532 = vcmask 779264
  %v533 = vsel %vm532, %v515, 0.0
  %v534 = vadd.f32 %v531, %v533
  %v535 = vrot.slane %v534, 4
  %v536 = vadd.f32 %v534, %v535
  %v537 = vrot.slane %v536, 2
  %v538 = vadd.f32 %v536, %v537
  %v539 = vrot.slane %v538, 1
  %v540 = vadd.f32 %v538, %v539
  %v541 = vmul.f32 %v507, %v444
  %v542 = vmul.f32 %v508, %v445
  %v543 = vmul.f32 %v509, %v446
  %v544 = vmul.f32 %v510, %v447
  %v545 = vmul.f32 %v511, %v448
  %v546 = vmul.f32 %v512, %v449
  %v547 = vmul.f32 %v513, %v450
  %v548 = vmul.f32 %v514, %v451
  %v549 = vmul.f32 %v515, %v452
  %v550 = vsel %vm516, %v541, 0.0
  %v551 = vsel %vm516, %v542, 0.0
  %v552 = vadd.f32 %v550, %v551
  %v553 = vsel %vm516, %v543, 0.0
  %v554 = vadd.f32 %v552, %v553
  %v555 = vsel %vm516, %v544, 0.0
  %v556 = vadd.f32 %v554, %v555
  %v557 = vsel %vm516, %v545, 0.0
  %v558 = vadd.f32 %v556, %v557
  %v559 = vsel %vm516, %v546, 0.0
  %v560 = vadd.f32 %v558, %v559
  %v561 = vsel %vm516, %v547, 0.0
  %v562 = vadd.f32 %v560, %v561
  %v563 = vsel %vm516, %v548, 0.0
  %v564 = vadd.f32 %v562, %v563
  %v565 = vsel %vm532, %v549, 0.0
  %v566 = vadd.f32 %v564, %v565
  %v567 = vrot.slane %v566, 4
  %v568 = vadd.f32 %v566, %v567
  %v569 = vrot.slane %v568, 2
  %v570 = vadd.f32 %v568, %v569
  %v571 = vrot.slane %v570, 1
  %v572 = vadd.f32 %v570, %v571
  %v573 = vsel %vm147, %v540, %v572
  %v574 = vld [vmem:[%s2] sm:$0xff]
  %v575 = vld [vmem:[%s2 + $0x8] sm:$0xff]
  %v576 = vld [vmem:[%s2 + $0x10] sm:$0xff]
  %v577 = vld [vmem:[%s2 + $0x18] sm:$0xff]
  %v578 = vld [vmem:[%s2 + $0x20] sm:$0xff]
  %v579 = vld [vmem:[%s2 + $0x28] sm:$0xff]
  %v580 = vld [vmem:[%s2 + $0x30] sm:$0xff]
  %v581 = vld [vmem:[%s2 + $0x38] sm:$0xff]
  %v582 = vld [vmem:[%s2 + $0x40] sm:$0xff]
  %v583 = vld [vmem:[%s2 + $0x48] sm:$0xff]
  %v584 = vld [vmem:[%s2 + $0x50] sm:$0xff]
  %v585 = vld [vmem:[%s2 + $0x58] sm:$0xff]
  %v587 = vsel %vm516, %v573, 0
  %589 = vmatprep.subr.mxu0 0.0
  %590 = vmatpush1.msra.mxu0 %v574
  %591 = vmatprep.subr.mxu0 0.0
  %592 = vmatpush1.msra.mxu0 %v575
  %593 = vmatprep.subr.mxu0 0.0
  %594 = vmatpush1.msra.mxu0 %v576
  %595 = vmatprep.subr.mxu0 0.0
  %596 = vmatpush1.msra.mxu0 %v577
  %597 = vmatprep.subr.mxu0 0.0
  %598 = vmatpush1.msra.mxu0 %v578
  %599 = vmatprep.subr.mxu0 0.0
  %600 = vmatpush1.msra.mxu0 %v579
  %601 = vmatprep.subr.mxu0 0.0
  %602 = vmatpush1.msra.mxu0 %v580
  %603 = vmatprep.subr.mxu0 0.0
  %604 = vmatpush1.msra.mxu0 %v581
  %605 = vmatprep.subr.mxu0 0.0
  %606 = vmatpush1.msra.mxu0 %v582
  %607 = vmatprep.subr.mxu0 0.0
  %608 = vmatpush1.msra.mxu0 %v583
  %609 = vmatprep.subr.mxu0 0.0
  %610 = vmatpush1.msra.mxu0 %v584
  %611 = vmatprep.subr.mxu0 0.0
  %612 = vmatpush1.msra.mxu0 %v585
  %613 = vmatprep.subr.mxu0 0.0
  %614 = vmatpush1.msra.mxu0 0.0
  %615 = vmatprep.subr.mxu0 0.0
  %616 = vmatpush1.msra.mxu0 0.0
  %617 = vmatprep.subr.mxu0 0.0
  %618 = vmatpush1.msra.mxu0 0.0
  %619 = vmatprep.subr.mxu0 0.0
  %620 = vmatpush1.msra.mxu0 0.0
  %621 = vmatprep.subr.mxu0 0.0
  %622 = vmatpush1.msra.mxu0 0.0
  %623 = vmatprep.subr.mxu0 0.0
  %624 = vmatpush1.msra.mxu0 0.0
  %625 = vmatprep.subr.mxu0 0.0
  %626 = vmatpush1.msra.mxu0 0.0
  %627 = vmatprep.subr.mxu0 0.0
  %628 = vmatpush1.msra.mxu0 0.0
  %629 = vmatprep.subr.mxu0 0.0
  %630 = vmatpush1.msra.mxu0 0.0
  %631 = vmatprep.subr.mxu0 0.0
  %632 = vmatpush1.msra.mxu0 0.0
  %633 = vmatprep.subr.mxu0 0.0
  %634 = vmatpush1.msra.mxu0 0.0
  %635 = vmatprep.subr.mxu0 0.0
  %636 = vmatpush1.msra.mxu0 0.0
  %637 = vmatprep.subr.mxu0 0.0
  %638 = vmatpush1.msra.mxu0 0.0
  %639 = vmatprep.subr.mxu0 0.0
  %640 = vmatpush1.msra.mxu0 0.0
  %641 = vmatprep.subr.mxu0 0.0
  %642 = vmatpush1.msra.mxu0 0.0
  %643 = vmatprep.subr.mxu0 0.0
  %644 = vmatpush1.msra.mxu0 0.0
  %645 = vmatprep.subr.mxu0 0.0
  %646 = vmatpush1.msra.mxu0 0.0
  %647 = vmatprep.subr.mxu0 0.0
  %648 = vmatpush1.msra.mxu0 0.0
  %649 = vmatprep.subr.mxu0 0.0
  %650 = vmatpush1.msra.mxu0 0.0
  %651 = vmatprep.subr.mxu0 0.0
  %652 = vmatpush1.msra.mxu0 0.0
  %653 = vmatprep.mubr.f32.mxu0 0.0
  %654 = vmatmul.mubr.f32.gmra.mrb[0].mxu0 %v587
  %v655 = vpop.f32.mrb[0].mxu0
  %v656 = vadd.f32 0.0, %v655
  %v657 = vpop.f32.mrb[0].mxu0
  %658 = vdwg.mxu0
  %v659 = vld [vmem:[%s3] sm:$0x7]
  %vm660 = vcmask 23552
  %v662 = vsel %vm660, %v656, 0
  %vm664 = vcmask 1042432
  %v666 = vsel %vm664, %v659, 0
  %668 = vmatprep.subr.mxu0 0.0
  %669 = vmatpush1.msra.mxu0 %v666
  %670 = vmatprep.subr.mxu0 0.0
  %671 = vmatpush1.msra.mxu0 0.0
  %672 = vmatprep.subr.mxu0 0.0
  %673 = vmatpush1.msra.mxu0 0.0
  %674 = vmatprep.subr.mxu0 0.0
  %675 = vmatpush1.msra.mxu0 0.0
  %676 = vmatprep.subr.mxu0 0.0
  %677 = vmatpush1.msra.mxu0 0.0
  %678 = vmatprep.subr.mxu0 0.0
  %679 = vmatpush1.msra.mxu0 0.0
  %680 = vmatprep.subr.mxu0 0.0
  %681 = vmatpush1.msra.mxu0 0.0
  %682 = vmatprep.subr.mxu0 0.0
  %683 = vmatpush1.msra.mxu0 0.0
  %684 = vmatprep.subr.mxu0 0.0
  %685 = vmatpush1.msra.mxu0 0.0
  %686 = vmatprep.subr.mxu0 0.0
  %687 = vmatpush1.msra.mxu0 0.0
  %688 = vmatprep.subr.mxu0 0.0
  %689 = vmatpush1.msra.mxu0 0.0
  %690 = vmatprep.subr.mxu0 0.0
  %691 = vmatpush1.msra.mxu0 0.0
  %692 = vmatprep.subr.mxu0 0.0
  %693 = vmatpush1.msra.mxu0 0.0
  %694 = vmatprep.subr.mxu0 0.0
  %695 = vmatpush1.msra.mxu0 0.0
  %696 = vmatprep.subr.mxu0 0.0
  %697 = vmatpush1.msra.mxu0 0.0
  %698 = vmatprep.subr.mxu0 0.0
  %699 = vmatpush1.msra.mxu0 0.0
  %700 = vmatprep.subr.mxu0 0.0
  %701 = vmatpush1.msra.mxu0 0.0
  %702 = vmatprep.subr.mxu0 0.0
  %703 = vmatpush1.msra.mxu0 0.0
  %704 = vmatprep.subr.mxu0 0.0
  %705 = vmatpush1.msra.mxu0 0.0
  %706 = vmatprep.subr.mxu0 0.0
  %707 = vmatpush1.msra.mxu0 0.0
  %708 = vmatprep.subr.mxu0 0.0
  %709 = vmatpush1.msra.mxu0 0.0
  %710 = vmatprep.subr.mxu0 0.0
  %711 = vmatpush1.msra.mxu0 0.0
  %712 = vmatprep.subr.mxu0 0.0
  %713 = vmatpush1.msra.mxu0 0.0
  %714 = vmatprep.subr.mxu0 0.0
  %715 = vmatpush1.msra.mxu0 0.0
  %716 = vmatprep.subr.mxu0 0.0
  %717 = vmatpush1.msra.mxu0 0.0
  %718 = vmatprep.subr.mxu0 0.0
  %719 = vmatpush1.msra.mxu0 0.0
  %720 = vmatprep.subr.mxu0 0.0
  %721 = vmatpush1.msra.mxu0 0.0
  %722 = vmatprep.subr.mxu0 0.0
  %723 = vmatpush1.msra.mxu0 0.0
  %724 = vmatprep.subr.mxu0 0.0
  %725 = vmatpush1.msra.mxu0 0.0
  %726 = vmatprep.subr.mxu0 0.0
  %727 = vmatpush1.msra.mxu0 0.0
  %728 = vmatprep.subr.mxu0 0.0
  %729 = vmatpush1.msra.mxu0 0.0
  %730 = vmatprep.subr.mxu0 0.0
  %731 = vmatpush1.msra.mxu0 0.0
  %732 = vmatprep.mubr.f32.mxu0 0.0
  %733 = vmatmul.mubr.f32.gmra.mrb[0].mxu0 %v662
  %v734 = vpop.f32.mrb[0].mxu0
  %v735 = vadd.f32 0.0, %v734
  %v736 = vpop.f32.mrb[0].mxu0
  %737 = vdwg.mxu0
  %v738 = vmul.f32 %v735, 0.00048828125
  %v739 = vmul.f32 %v738, %v738
  %v741 = vrot.slane %v739, 7
  %v743 = vsub.f32 %v738, %v741
  %v744 = vld [vmem:[%s7] sm:$0x1]
  %v745 = vadd.f32 %v743, 1e-05
  %v746 = vrsqrt.pop %v745
  %v749 = vunpack.c.l.s4 1966171168
  %v750 = vunpack.c.0.s8 %v749
  %v751 = vlaneseq
  %v752 = vshrl.u32 %v751, 7
  %v753 = vsub.s32 %v750, %v752
  %v754 = vrot.slane %v746, %v753
  %v755 = vcombine.high %v754, %v754
  %v757 = vunpack.c.l.s4 1966171168
  %v758 = vunpack.c.0.s8 %v757
  %v759 = vlaneseq
  %v760 = vshrl.u32 %v759, 7
  %v761 = vsub.s32 %v758, %v760
  %v762 = vrot.slane %v755, %v761
  %v764 = vmul.f32 %v744, %v762
  %v765 = vld [vmem:[%s8] sm:$0x1]
  %v766 = vmul.f32 %v738, %v764
  %v767 = vsub.f32 %v765, %v766
  %v769 = vlaneseq
  %v770 = vshrl.u32 %v769, 7
  %v771 = vsub.s32 0, %v770
  %v772 = vrot.slane %v764, %v771
  %v774 = vmul.f32 %v444, %v772
  %v775 = vmul.f32 %v445, %v772
  %v776 = vmul.f32 %v446, %v772
  %v777 = vmul.f32 %v447, %v772
  %v778 = vmul.f32 %v448, %v772
  %v779 = vmul.f32 %v449, %v772
  %v780 = vmul.f32 %v450, %v772
  %v781 = vmul.f32 %v451, %v772
  %v782 = vmul.f32 %v452, %v772
  %v784 = vlaneseq
  %v785 = vshrl.u32 %v784, 7
  %v786 = vsub.s32 0, %v785
  %v787 = vrot.slane %v767, %v786
  %v789 = vadd.f32 %v774, %v787
  %v790 = vadd.f32 %v775, %v787
  %v791 = vadd.f32 %v776, %v787
  %v792 = vadd.f32 %v777, %v787
  %v793 = vadd.f32 %v778, %v787
  %v794 = vadd.f32 %v779, %v787
  %v795 = vadd.f32 %v780, %v787
  %v796 = vadd.f32 %v781, %v787
  %v797 = vadd.f32 %v782, %v787
  %v798 = vmax.f32 %v789, 0.0
  %v799 = vmax.f32 %v790, 0.0
  %v800 = vmax.f32 %v791, 0.0
  %v801 = vmax.f32 %v792, 0.0
  %v802 = vmax.f32 %v793, 0.0
  %v803 = vmax.f32 %v794, 0.0
  %v804 = vmax.f32 %v795, 0.0
  %v805 = vmax.f32 %v796, 0.0
  %v806 = vmax.f32 %v797, 0.0
  %v807 = vpack.c.bf16 %v799, %v798
  %v808 = vpack.c.bf16 %v801, %v800
  %v809 = vpack.c.bf16 %v803, %v802
  %v810 = vpack.c.bf16 %v805, %v804
  %v811 = vpack.c.bf16 %v806, %v806
  %v812 = vld [vmem:[%s4] sm:$0xf]
  %v813 = vld [vmem:[%s4 + $0x4] sm:$0xf]
  %v814 = vld [vmem:[%s4 + $0x8] sm:$0xf]
  %v815 = vld [vmem:[%s4 + $0xc] sm:$0xf]
  %v816 = vld [vmem:[%s4 + $0x10] sm:$0x3]
  %v822 = vunpack.c.l.b16 %v812
  %v823 = vunpack.c.l.b16 %v813
  %v824 = vunpack.c.l.b16 %v814
  %v825 = vunpack.c.l.b16 %v815
  %v826 = vunpack.c.l.b16 %v816
  %v827 = vpack.c.b16 %v823, %v822
  %v828 = vpack.c.b16 %v825, %v824
  %v829 = vpack.c.b16 %v826, %v826
  %vm830 = vcmask 539648
  %v832 = vsel %vm830, %v827, 0
  %v835 = vsel %vm830, %v828, 0
  %v838 = vsel %vm830, %v829, 0
  %v841 = vsel %vm147, %v811, 0
  %843 = vmatprep.subr.bf16.mxu0 0
  %844 = vmatpush1.bf16.msra.mxu0 %v807
  %845 = vmatprep.subr.bf16.mxu0 0
  %846 = vmatpush1.bf16.msra.mxu0 %v808
  %847 = vmatprep.subr.bf16.mxu0 0
  %848 = vmatpush1.bf16.msra.mxu0 %v809
  %849 = vmatprep.subr.bf16.mxu0 0
  %850 = vmatpush1.bf16.msra.mxu0 %v810
  %851 = vmatprep.subr.bf16.mxu0 0
  %852 = vmatpush1.bf16.msra.mxu0 %v841
  %853 = vmatprep.subr.bf16.mxu0 0
  %854 = vmatpush1.bf16.msra.mxu0 0
  %855 = vmatprep.subr.bf16.mxu0 0
  %856 = vmatpush1.bf16.msra.mxu0 0
  %857 = vmatprep.subr.bf16.mxu0 0
  %858 = vmatpush1.bf16.msra.mxu0 0
  %859 = vmatprep.subr.bf16.mxu0 0
  %860 = vmatpush1.bf16.msra.mxu0 0
  %861 = vmatprep.subr.bf16.mxu0 0
  %862 = vmatpush1.bf16.msra.mxu0 0
  %863 = vmatprep.subr.bf16.mxu0 0
  %864 = vmatpush1.bf16.msra.mxu0 0
  %865 = vmatprep.subr.bf16.mxu0 0
  %866 = vmatpush1.bf16.msra.mxu0 0
  %867 = vmatprep.subr.bf16.mxu0 0
  %868 = vmatpush1.bf16.msra.mxu0 0
  %869 = vmatprep.subr.bf16.mxu0 0
  %870 = vmatpush1.bf16.msra.mxu0 0
  %871 = vmatprep.subr.bf16.mxu0 0
  %872 = vmatpush1.bf16.msra.mxu0 0
  %873 = vmatprep.subr.bf16.mxu0 0
  %874 = vmatpush1.bf16.msra.mxu0 0
  %875 = vmatprep.mubr.bf16.mxu0 0
  %876 = vmatmul.mubr.bf16.gmra.mrb[0].mxu0 %v832
  %v877 = vpop.f32.mrb[0].mxu0
  %v878 = vadd.f32 0.0, %v877
  %v879 = vpop.f32.mrb[0].mxu0
  %v880 = vpop.f32.mrb[0].mxu0
  %v881 = vadd.f32 0.0, %v880
  %v882 = vpop.f32.mrb[0].mxu0
  %883 = vmatprep.mubr.bf16.mxu0 0
  %884 = vmatmul.mubr.bf16.gmra.mrb[0].mxu0 %v835
  %v885 = vpop.f32.mrb[0].mxu0
  %v886 = vadd.f32 0.0, %v885
  %v887 = vpop.f32.mrb[0].mxu0
  %v888 = vpop.f32.mrb[0].mxu0
  %v889 = vadd.f32 0.0, %v888
  %v890 = vpop.f32.mrb[0].mxu0
  %891 = vmatprep.mubr.bf16.mxu0 0
  %892 = vmatmul.mubr.bf16.gmra.mrb[0].mxu0 %v838
  %v893 = vpop.f32.mrb[0].mxu0
  %v894 = vadd.f32 0.0, %v893
  %v895 = vpop.f32.mrb[0].mxu0
  %v896 = vpop.f32.mrb[0].mxu0
  %v897 = vpop.f32.mrb[0].mxu0
  %898 = vdwg.mxu0
  %s899 = scalar_lea.vmem %s4, 20
  %v900 = vld [vmem:[%s899] sm:$0xf]
  %v901 = vld [vmem:[%s899 + $0x4] sm:$0xf]
  %v902 = vld [vmem:[%s899 + $0x8] sm:$0xf]
  %v903 = vld [vmem:[%s899 + $0xc] sm:$0xf]
  %v904 = vld [vmem:[%s899 + $0x10] sm:$0x3]
  %v910 = vunpack.c.l.b16 %v900
  %v911 = vunpack.c.l.b16 %v901
  %v912 = vunpack.c.l.b16 %v902
  %v913 = vunpack.c.l.b16 %v903
  %v914 = vunpack.c.l.b16 %v904
  %v915 = vpack.c.b16 %v911, %v910
  %v916 = vpack.c.b16 %v913, %v912
  %v917 = vpack.c.b16 %v914, %v914
  %v919 = vsel %vm830, %v915, 0
  %v922 = vsel %vm830, %v916, 0
  %v925 = vsel %vm830, %v917, 0
  %927 = vmatprep.subr.bf16.mxu0 0
  %928 = vmatpush1.bf16.msra.mxu0 %v807
  %929 = vmatprep.subr.bf16.mxu0 0
  %930 = vmatpush1.bf16.msra.mxu0 %v808
  %931 = vmatprep.subr.bf16.mxu0 0
  %932 = vmatpush1.bf16.msra.mxu0 %v809
  %933 = vmatprep.subr.bf16.mxu0 0
  %934 = vmatpush1.bf16.msra.mxu0 %v810
  %935 = vmatprep.subr.bf16.mxu0 0
  %936 = vmatpush1.bf16.msra.mxu0 %v841
  %937 = vmatprep.subr.bf16.mxu0 0
  %938 = vmatpush1.bf16.msra.mxu0 0
  %939 = vmatprep.subr.bf16.mxu0 0
  %940 = vmatpush1.bf16.msra.mxu0 0
  %941 = vmatprep.subr.bf16.mxu0 0
  %942 = vmatpush1.bf16.msra.mxu0 0
  %943 = vmatprep.subr.bf16.mxu0 0
  %944 = vmatpush1.bf16.msra.mxu0 0
  %945 = vmatprep.subr.bf16.mxu0 0
  %946 = vmatpush1.bf16.msra.mxu0 0
  %947 = vmatprep.subr.bf16.mxu0 0
  %948 = vmatpush1.bf16.msra.mxu0 0
  %949 = vmatprep.subr.bf16.mxu0 0
  %950 = vmatpush1.bf16.msra.mxu0 0
  %951 = vmatprep.subr.bf16.mxu0 0
  %952 = vmatpush1.bf16.msra.mxu0 0
  %953 = vmatprep.subr.bf16.mxu0 0
  %954 = vmatpush1.bf16.msra.mxu0 0
  %955 = vmatprep.subr.bf16.mxu0 0
  %956 = vmatpush1.bf16.msra.mxu0 0
  %957 = vmatprep.subr.bf16.mxu0 0
  %958 = vmatpush1.bf16.msra.mxu0 0
  %959 = vmatprep.mubr.bf16.mxu0 0
  %960 = vmatmul.mubr.bf16.gmra.mrb[0].mxu0 %v919
  %v961 = vpop.f32.mrb[0].mxu0
  %v962 = vadd.f32 0.0, %v961
  %v963 = vpop.f32.mrb[0].mxu0
  %v964 = vpop.f32.mrb[0].mxu0
  %v965 = vadd.f32 0.0, %v964
  %v966 = vpop.f32.mrb[0].mxu0
  %967 = vmatprep.mubr.bf16.mxu0 0
  %968 = vmatmul.mubr.bf16.gmra.mrb[0].mxu0 %v922
  %v969 = vpop.f32.mrb[0].mxu0
  %v970 = vadd.f32 0.0, %v969
  %v971 = vpop.f32.mrb[0].mxu0
  %v972 = vpop.f32.mrb[0].mxu0
  %v973 = vadd.f32 0.0, %v972
  %v974 = vpop.f32.mrb[0].mxu0
  %975 = vmatprep.mubr.bf16.mxu0 0
  %976 = vmatmul.mubr.bf16.gmra.mrb[0].mxu0 %v925
  %v977 = vpop.f32.mrb[0].mxu0
  %v978 = vadd.f32 0.0, %v977
  %v979 = vpop.f32.mrb[0].mxu0
  %v980 = vpop.f32.mrb[0].mxu0
  %v981 = vpop.f32.mrb[0].mxu0
  %982 = vdwg.mxu0
  %v983 = vmax.f32 %v878, %v962
  %v984 = vmax.f32 %v881, %v965
  %v985 = vmax.f32 %v886, %v970
  %v986 = vmax.f32 %v889, %v973
  %v987 = vmax.f32 %v894, %v978
  %v988 = vpack.c.bf16 %v984, %v983
  %v989 = vpack.c.bf16 %v986, %v985
  %v990 = vpack.c.bf16 %v987, %v987
  %v991 = vld [vmem:[%s5] sm:$0xf]
  %v992 = vld [vmem:[%s5 + $0x4] sm:$0xf]
  %v993 = vld [vmem:[%s5 + $0x8] sm:$0xf]
  %v994 = vld [vmem:[%s5 + $0xc] sm:$0xf]
  %v995 = vld [vmem:[%s5 + $0x10] sm:$0xf]
  %v996 = vld [vmem:[%s5 + $0x14] sm:$0xf]
  %v997 = vld [vmem:[%s5 + $0x18] sm:$0xf]
  %v998 = vld [vmem:[%s5 + $0x1c] sm:$0xf]
  %v999 = vld [vmem:[%s5 + $0x20] sm:$0xf]
  %v1000 = vld [vmem:[%s5 + $0x24] sm:$0xf]
  %v1001 = vld [vmem:[%s5 + $0x28] sm:$0xf]
  %v1002 = vld [vmem:[%s5 + $0x2c] sm:$0xf]
  %v1015 = vunpack.c.l.b16 %v991
  %v1016 = vunpack.c.l.b16 %v992
  %v1017 = vunpack.c.l.b16 %v993
  %v1018 = vunpack.c.l.b16 %v994
  %v1019 = vunpack.c.l.b16 %v995
  %v1020 = vunpack.c.l.b16 %v996
  %v1021 = vunpack.c.l.b16 %v997
  %v1022 = vunpack.c.l.b16 %v998
  %v1023 = vunpack.c.l.b16 %v999
  %v1024 = vunpack.c.l.b16 %v1000
  %v1025 = vunpack.c.l.b16 %v1001
  %v1026 = vunpack.c.l.b16 %v1002
  %v1027 = vpack.c.b16 %v1016, %v1015
  %v1028 = vpack.c.b16 %v1018, %v1017
  %v1029 = vpack.c.b16 %v1020, %v1019
  %v1030 = vpack.c.b16 %v1022, %v1021
  %v1031 = vpack.c.b16 %v1024, %v1023
  %v1032 = vpack.c.b16 %v1026, %v1025
  %v1040 = vsel %vm516, %v988, 0
  %v1043 = vsel %vm516, %v989, 0
  %v1046 = vsel %vm516, %v990, 0
  %1048 = vmatprep.subr.bf16.mxu0 0
  %1049 = vmatpush1.bf16.msra.mxu0 %v1027
  %1050 = vmatprep.subr.bf16.mxu0 0
  %1051 = vmatpush1.bf16.msra.mxu0 %v1028
  %1052 = vmatprep.subr.bf16.mxu0 0
  %1053 = vmatpush1.bf16.msra.mxu0 %v1029
  %1054 = vmatprep.subr.bf16.mxu0 0
  %1055 = vmatpush1.bf16.msra.mxu0 %v1030
  %1056 = vmatprep.subr.bf16.mxu0 0
  %1057 = vmatpush1.bf16.msra.mxu0 %v1031
  %1058 = vmatprep.subr.bf16.mxu0 0
  %1059 = vmatpush1.bf16.msra.mxu0 %v1032
  %1060 = vmatprep.subr.bf16.mxu0 0
  %1061 = vmatpush1.bf16.msra.mxu0 0
  %1062 = vmatprep.subr.bf16.mxu0 0
  %1063 = vmatpush1.bf16.msra.mxu0 0
  %1064 = vmatprep.subr.bf16.mxu0 0
  %1065 = vmatpush1.bf16.msra.mxu0 0
  %1066 = vmatprep.subr.bf16.mxu0 0
  %1067 = vmatpush1.bf16.msra.mxu0 0
  %1068 = vmatprep.subr.bf16.mxu0 0
  %1069 = vmatpush1.bf16.msra.mxu0 0
  %1070 = vmatprep.subr.bf16.mxu0 0
  %1071 = vmatpush1.bf16.msra.mxu0 0
  %1072 = vmatprep.subr.bf16.mxu0 0
  %1073 = vmatpush1.bf16.msra.mxu0 0
  %1074 = vmatprep.subr.bf16.mxu0 0
  %1075 = vmatpush1.bf16.msra.mxu0 0
  %1076 = vmatprep.subr.bf16.mxu0 0
  %1077 = vmatpush1.bf16.msra.mxu0 0
  %1078 = vmatprep.subr.bf16.mxu0 0
  %1079 = vmatpush1.bf16.msra.mxu0 0
  %1080 = vmatprep.mubr.bf16.mxu0 0
  %1081 = vmatmul.mubr.bf16.gmra.mrb[0].mxu0 %v1040
  %v1082 = vpop.f32.mrb[0].mxu0
  %v1083 = vadd.f32 0.0, %v1082
  %v1084 = vpop.f32.mrb[0].mxu0
  %v1085 = vpop.f32.mrb[0].mxu0
  %v1086 = vadd.f32 0.0, %v1085
  %v1087 = vpop.f32.mrb[0].mxu0
  %1088 = vmatprep.mubr.bf16.mxu0 0
  %1089 = vmatmul.mubr.bf16.gmra.mrb[0].mxu0 %v1043
  %v1090 = vpop.f32.mrb[0].mxu0
  %v1091 = vadd.f32 0.0, %v1090
  %v1092 = vpop.f32.mrb[0].mxu0
  %v1093 = vpop.f32.mrb[0].mxu0
  %v1094 = vadd.f32 0.0, %v1093
  %v1095 = vpop.f32.mrb[0].mxu0
  %1096 = vmatprep.mubr.bf16.mxu0 0
  %1097 = vmatmul.mubr.bf16.gmra.mrb[0].mxu0 %v1046
  %v1098 = vpop.f32.mrb[0].mxu0
  %v1099 = vadd.f32 0.0, %v1098
  %v1100 = vpop.f32.mrb[0].mxu0
  %v1101 = vpop.f32.mrb[0].mxu0
  %v1102 = vpop.f32.mrb[0].mxu0
  %1103 = vdwg.mxu0
  %s1104 = scalar_lea.vmem %s5, 48
  %v1105 = vld [vmem:[%s1104] sm:$0xf]
  %v1106 = vld [vmem:[%s1104 + $0x4] sm:$0xf]
  %v1107 = vld [vmem:[%s1104 + $0x8] sm:$0xf]
  %v1108 = vld [vmem:[%s1104 + $0xc] sm:$0xf]
  %v1109 = vld [vmem:[%s1104 + $0x10] sm:$0xf]
  %v1110 = vld [vmem:[%s1104 + $0x14] sm:$0xf]
  %v1111 = vld [vmem:[%s1104 + $0x18] sm:$0xf]
  %v1112 = vld [vmem:[%s1104 + $0x1c] sm:$0xf]
  %v1113 = vld [vmem:[%s1104 + $0x20] sm:$0xf]
  %v1114 = vld [vmem:[%s1104 + $0x24] sm:$0xf]
  %v1115 = vld [vmem:[%s1104 + $0x28] sm:$0xf]
  %v1116 = vld [vmem:[%s1104 + $0x2c] sm:$0xf]
  %v1129 = vunpack.c.l.b16 %v1105
  %v1130 = vunpack.c.l.b16 %v1106
  %v1131 = vunpack.c.l.b16 %v1107
  %v1132 = vunpack.c.l.b16 %v1108
  %v1133 = vunpack.c.l.b16 %v1109
  %v1134 = vunpack.c.l.b16 %v1110
  %v1135 = vunpack.c.l.b16 %v1111
  %v1136 = vunpack.c.l.b16 %v1112
  %v1137 = vunpack.c.l.b16 %v1113
  %v1138 = vunpack.c.l.b16 %v1114
  %v1139 = vunpack.c.l.b16 %v1115
  %v1140 = vunpack.c.l.b16 %v1116
  %v1141 = vpack.c.b16 %v1130, %v1129
  %v1142 = vpack.c.b16 %v1132, %v1131
  %v1143 = vpack.c.b16 %v1134, %v1133
  %v1144 = vpack.c.b16 %v1136, %v1135
  %v1145 = vpack.c.b16 %v1138, %v1137
  %v1146 = vpack.c.b16 %v1140, %v1139
  %1153 = vmatprep.subr.bf16.mxu0 0
  %1154 = vmatpush1.bf16.msra.mxu0 %v1141
  %1155 = vmatprep.subr.bf16.mxu0 0
  %1156 = vmatpush1.bf16.msra.mxu0 %v1142
  %1157 = vmatprep.subr.bf16.mxu0 0
  %1158 = vmatpush1.bf16.msra.mxu0 %v1143
  %1159 = vmatprep.subr.bf16.mxu0 0
  %1160 = vmatpush1.bf16.msra.mxu0 %v1144
  %1161 = vmatprep.subr.bf16.mxu0 0
  %1162 = vmatpush1.bf16.msra.mxu0 %v1145
  %1163 = vmatprep.subr.bf16.mxu0 0
  %1164 = vmatpush1.bf16.msra.mxu0 %v1146
  %1165 = vmatprep.subr.bf16.mxu0 0
  %1166 = vmatpush1.bf16.msra.mxu0 0
  %1167 = vmatprep.subr.bf16.mxu0 0
  %1168 = vmatpush1.bf16.msra.mxu0 0
  %1169 = vmatprep.subr.bf16.mxu0 0
  %1170 = vmatpush1.bf16.msra.mxu0 0
  %1171 = vmatprep.subr.bf16.mxu0 0
  %1172 = vmatpush1.bf16.msra.mxu0 0
  %1173 = vmatprep.subr.bf16.mxu0 0
  %1174 = vmatpush1.bf16.msra.mxu0 0
  %1175 = vmatprep.subr.bf16.mxu0 0
  %1176 = vmatpush1.bf16.msra.mxu0 0
  %1177 = vmatprep.subr.bf16.mxu0 0
  %1178 = vmatpush1.bf16.msra.mxu0 0
  %1179 = vmatprep.subr.bf16.mxu0 0
  %1180 = vmatpush1.bf16.msra.mxu0 0
  %1181 = vmatprep.subr.bf16.mxu0 0
  %1182 = vmatpush1.bf16.msra.mxu0 0
  %1183 = vmatprep.subr.bf16.mxu0 0
  %1184 = vmatpush1.bf16.msra.mxu0 0
  %1185 = vmatprep.mubr.bf16.mxu0 0
  %1186 = vmatmul.mubr.bf16.gmra.mrb[0].mxu0 %v1040
  %v1187 = vpop.f32.mrb[0].mxu0
  %v1188 = vadd.f32 0.0, %v1187
  %v1189 = vpop.f32.mrb[0].mxu0
  %v1190 = vpop.f32.mrb[0].mxu0
  %v1191 = vadd.f32 0.0, %v1190
  %v1192 = vpop.f32.mrb[0].mxu0
  %1193 = vmatprep.mubr.bf16.mxu0 0
  %1194 = vmatmul.mubr.bf16.gmra.mrb[0].mxu0 %v1043
  %v1195 = vpop.f32.mrb[0].mxu0
  %v1196 = vadd.f32 0.0, %v1195
  %v1197 = vpop.f32.mrb[0].mxu0
  %v1198 = vpop.f32.mrb[0].mxu0
  %v1199 = vadd.f32 0.0, %v1198
  %v1200 = vpop.f32.mrb[0].mxu0
  %1201 = vmatprep.mubr.bf16.mxu0 0
  %1202 = vmatmul.mubr.bf16.gmra.mrb[0].mxu0 %v1046
  %v1203 = vpop.f32.mrb[0].mxu0
  %v1204 = vadd.f32 0.0, %v1203
  %v1205 = vpop.f32.mrb[0].mxu0
  %v1206 = vpop.f32.mrb[0].mxu0
  %v1207 = vpop.f32.mrb[0].mxu0
  %1208 = vdwg.mxu0
  %v1209 = vmax.f32 %v1083, %v1188
  %v1210 = vmax.f32 %v1086, %v1191
  %v1211 = vmax.f32 %v1091, %v1196
  %v1212 = vmax.f32 %v1094, %v1199
  %v1213 = vmax.f32 %v1099, %v1204
  %v1214 = vpack.c.bf16 %v1210, %v1209
  %v1215 = vpack.c.bf16 %v1212, %v1211
  %v1216 = vpack.c.bf16 %v1213, %v1213
  %v1220 = vunpack.c.l.b16 %v1214
  %v1221 = vunpack.c.h.b16 %v1214
  %v1222 = vunpack.c.l.b16 %v1215
  %v1223 = vunpack.c.h.b16 %v1215
  %v1224 = vunpack.c.l.b16 %v1216
  %v1225 = vpack.c.b16 %v1220, %v1220
  %v1226 = vpack.c.b16 %v1221, %v1221
  %v1227 = vpack.c.b16 %v1222, %v1222
  %v1228 = vpack.c.b16 %v1223, %v1223
  %v1229 = vpack.c.b16 %v1224, %v1224
  %vm1235 = vcmask 437248
  %1236 = vst.msk [vmem:[%s9] sm:$0xf] %vm1235, %v1225
  %1237 = vst.msk [vmem:[%s9 + $0x4] sm:$0xf] %vm1235, %v1226
  %1238 = vst.msk [vmem:[%s9 + $0x8] sm:$0xf] %vm1235, %v1227
  %1239 = vst.msk [vmem:[%s9 + $0xc] sm:$0xf] %vm1235, %v1228
  %vm1240 = vcmask 435200
  %1241 = vst.msk [vmem:[%s9 + $0x10] sm:$0x3] %vm1240, %v1229
  // Predicated region
  $region38: #{convnet_forward.4} parent=0 // pred_check
    _
  $region39: #{convnet_forward.4} parent=0 // pred_check_branch
    %1243 = sbr.rel (0) target = $region41
  $region40: #{convnet_forward.4} parent=0 // pred_region
    _
  $region41: #{convnet_forward.4} parent=0 // pred_fallthru
    _
  // Predicated region
  $region42: #{convnet_forward.4} parent=0 // pred_check
    _
  $region43: #{convnet_forward.4} parent=0 // pred_check_branch
    %1245 = sbr.rel (0) target = $region45
  $region44: #{convnet_forward.4} parent=0 // pred_region
    _
  $region45: #{convnet_forward.4} parent=0 // pred_fallthru
    _

// kernel: convnet_forward.5
$region0: #{convnet_forward.5}
  #allocation0 [shape = 'u32[]', space=smem, size = 0x4, offset = 0x4, fixed_abs, tag = 'smem constant byte address 0x4 - core index']
  #allocation1 [shape = 'u32[144,128]{1,0:T(1,128)}', space=vmem, size = 0x12000, scoped, tag = 'internal scratch']
  %s0 = inlined_call_operand.vmem [shape: bf16[36,54], index: 0, kind: input, shape index: {}]
  %s1 = inlined_call_operand.vmem [shape: bf16[3,54,192], index: 1, kind: input, shape index: {}]
  %s2 = inlined_call_operand.vmem [shape: f32[192,12], index: 2, kind: input, shape index: {}]
  %s3 = inlined_call_operand.vmem [shape: f32[12,192], index: 3, kind: input, shape index: {}]
  %s4 = inlined_call_operand.vmem [shape: bf16[2,20,34], index: 4, kind: input, shape index: {}]
  %s5 = inlined_call_operand.vmem [shape: bf16[2,192,120], index: 5, kind: input, shape index: {}]
  %s6 = inlined_call_operand.vmem [shape: f32[34,1], index: 6, kind: input, shape index: {}]
  %s7 = inlined_call_operand.vmem [shape: f32[1,192], index: 7, kind: input, shape index: {}]
  %s8 = inlined_call_operand.vmem [shape: f32[1,192], index: 8, kind: input, shape index: {}]
  %s9 = inlined_call_operand.vmem [shape: bf16[20,120], index: 9, kind: output, shape index: {}]
  %s10 = sld [smem:[#allocation0]]
  $region46: #{convnet_forward.5} parent=0
    _
  %s12 = ssub.s32 1, %s10
  %s13 = scalar_select 0, %s12, %s10
  // Predicated region
  $region2: #{convnet_forward.5} parent=0 // pred_check
    _
  $region3: #{convnet_forward.5} parent=0 // pred_check_branch
    %15 = sbr.rel (0) target = $region5
  $region4: #{convnet_forward.5} parent=0 // pred_region
    _
  $region5: #{convnet_forward.5} parent=0 // pred_fallthru
    _
  // Predicated region
  $region6: #{convnet_forward.5} parent=0 // pred_check
    _
  $region7: #{convnet_forward.5} parent=0 // pred_check_branch
    %17 = sbr.rel (0) target = $region9
  $region8: #{convnet_forward.5} parent=0 // pred_region
    _
  $region9: #{convnet_forward.5} parent=0 // pred_fallthru
    _
  // Predicated region
  $region10: #{convnet_forward.5} parent=0 // pred_check
    _
  $region11: #{convnet_forward.5} parent=0 // pred_check_branch
    %19 = sbr.rel (0) target = $region13
  $region12: #{convnet_forward.5} parent=0 // pred_region
    _
  $region13: #{convnet_forward.5} parent=0 // pred_fallthru
    _
  // Predicated region
  $region14: #{convnet_forward.5} parent=0 // pred_check
    _
  $region15: #{convnet_forward.5} parent=0 // pred_check_branch
    %21 = sbr.rel (0) target = $region17
  $region16: #{convnet_forward.5} parent=0 // pred_region
    _
  $region17: #{convnet_forward.5} parent=0 // pred_fallthru
    _
  // Predicated region
  $region18: #{convnet_forward.5} parent=0 // pred_check
    _
  $region19: #{convnet_forward.5} parent=0 // pred_check_branch
    %23 = sbr.rel (0) target = $region21
  $region20: #{convnet_forward.5} parent=0 // pred_region
    _
  $region21: #{convnet_forward.5} parent=0 // pred_fallthru
    _
  // Predicated region
  $region22: #{convnet_forward.5} parent=0 // pred_check
    _
  $region23: #{convnet_forward.5} parent=0 // pred_check_branch
    %25 = sbr.rel (0) target = $region25
  $region24: #{convnet_forward.5} parent=0 // pred_region
    _
  $region25: #{convnet_forward.5} parent=0 // pred_fallthru
    _
  // Predicated region
  $region26: #{convnet_forward.5} parent=0 // pred_check
    _
  $region27: #{convnet_forward.5} parent=0 // pred_check_branch
    %27 = sbr.rel (0) target = $region29
  $region28: #{convnet_forward.5} parent=0 // pred_region
    _
  $region29: #{convnet_forward.5} parent=0 // pred_fallthru
    _
  // Predicated region
  $region30: #{convnet_forward.5} parent=0 // pred_check
    _
  $region31: #{convnet_forward.5} parent=0 // pred_check_branch
    %29 = sbr.rel (0) target = $region33
  $region32: #{convnet_forward.5} parent=0 // pred_region
    _
  $region33: #{convnet_forward.5} parent=0 // pred_fallthru
    _
  // Predicated region
  $region34: #{convnet_forward.5} parent=0 // pred_check
    _
  $region35: #{convnet_forward.5} parent=0 // pred_check_branch
    %31 = sbr.rel (0) target = $region37
  $region36: #{convnet_forward.5} parent=0 // pred_region
    _
  $region37: #{convnet_forward.5} parent=0 // pred_fallthru
    _
  %v33 = vld [vmem:[%s0] sm:$0xf]
  %v34 = vld [vmem:[%s0 + $0x4] sm:$0xf]
  %v35 = vld [vmem:[%s0 + $0x8] sm:$0xf]
  %v36 = vld [vmem:[%s0 + $0xc] sm:$0xf]
  %v37 = vld [vmem:[%s0 + $0x10] sm:$0x3]
  %v38 = vld [vmem:[%s1] sm:$0xff]
  %v39 = vld [vmem:[%s1 + $0x8] sm:$0xff]
  %v40 = vld [vmem:[%s1 + $0x10] sm:$0xff]
  %v41 = vld [vmem:[%s1 + $0x18] sm:$0xff]
  %v42 = vld [vmem:[%s1 + $0x20] sm:$0xff]
  %v43 = vld [vmem:[%s1 + $0x28] sm:$0xff]
  %v44 = vld [vmem:[%s1 + $0x30] sm:$0x77]
  %s45 = scalar_lea.vmem %s1, 56
  %v46 = vld [vmem:[%s45] sm:$0xff]
  %v47 = vld [vmem:[%s45 + $0x8] sm:$0xff]
  %v48 = vld [vmem:[%s45 + $0x10] sm:$0xff]
  %v49 = vld [vmem:[%s45 + $0x18] sm:$0xff]
  %v50 = vld [vmem:[%s45 + $0x20] sm:$0xff]
  %v51 = vld [vmem:[%s45 + $0x28] sm:$0xff]
  %v52 = vld [vmem:[%s45 + $0x30] sm:$0x77]
  %v58 = vunpack.c.l.b16 %v33
  %v59 = vunpack.c.l.b16 %v34
  %v60 = vunpack.c.l.b16 %v35
  %v61 = vunpack.c.l.b16 %v36
  %v62 = vunpack.c.l.b16 %v37
  %v63 = vpack.c.b16 %v59, %v58
  %v64 = vpack.c.b16 %v61, %v60
  %v65 = vpack.c.b16 %v62, %v62
  %vm66 = vsmask.f32 7424
  %v68 = vshrl.u32 %v63, 16
  %v70 = vshll.u32 %v63, 16
  %v72 = vrot.slane %v70, 1
  %v73 = vor.u32 %v68, %v72
  %v75 = vshll.u32 %v64, 16
  %v77 = vrot.slane %v75, 1
  %v78 = vsel %vm66, %v73, %v77
  %v79 = vshrl.u32 %v64, 16
  %v81 = vor.u32 %v79, %v77
  %v83 = vshll.u32 %v65, 16
  %v85 = vrot.slane %v83, 1
  %v86 = vsel %vm66, %v81, %v85
  %v87 = vshrl.u32 %v65, 16
  %v89 = vor.u32 %v87, %v85
  %v97 = vunpack.c.l.b16 %v46
  %v98 = vunpack.c.h.b16 %v46
  %v99 = vunpack.c.l.b16 %v47
  %v100 = vunpack.c.h.b16 %v47
  %v101 = vunpack.c.l.b16 %v48
  %v102 = vunpack.c.h.b16 %v48
  %v103 = vunpack.c.l.b16 %v49
  %v104 = vunpack.c.h.b16 %v49
  %v105 = vunpack.c.l.b16 %v50
  %v106 = vunpack.c.h.b16 %v50
  %v107 = vunpack.c.l.b16 %v51
  %v108 = vunpack.c.h.b16 %v51
  %v109 = vunpack.c.l.b16 %v52
  %v110 = vunpack.c.h.b16 %v52
  %v111 = vpack.c.b16 %v99, %v97
  %v112 = vpack.c.b16 %v100, %v98
  %v113 = vpack.c.b16 %v103, %v101
  %v114 = vpack.c.b16 %v104, %v102
  %v115 = vpack.c.b16 %v107, %v105
  %v116 = vpack.c.b16 %v108, %v106
  %v117 = vpack.c.b16 %v109, %v109
  %v118 = vpack.c.b16 %v110, %v110
  %vm125 = vcmask 441344
  %v127 = vsel %vm125, %v78, 0
  %v130 = vsel %vm125, %v86, 0
  %v133 = vsel %vm125, %v89, 0
  %vm135 = vcmask 1042432
  %v137 = vsel %vm135, %v117, 0
  %v140 = vsel %vm135, %v118, 0
  %142 = vmatprep.subr.bf16.mxu0 %v112
  %143 = vmatpush1.bf16.msra.mxu0 %v111
  %144 = vmatprep.subr.bf16.mxu0 %v114
  %145 = vmatpush1.bf16.msra.mxu0 %v113
  %146 = vmatprep.subr.bf16.mxu0 %v116
  %147 = vmatpush1.bf16.msra.mxu0 %v115
  %148 = vmatprep.subr.bf16.mxu0 %v140
  %149 = vmatpush1.bf16.msra.mxu0 %v137
  %150 = vmatprep.subr.bf16.mxu0 0
  %151 = vmatpush1.bf16.msra.mxu0 0
  %152 = vmatprep.subr.bf16.mxu0 0
  %153 = vmatpush1.bf16.msra.mxu0 0
  %154 = vmatprep.subr.bf16.mxu0 0
  %155 = vmatpush1.bf16.msra.mxu0 0
  %156 = vmatprep.subr.bf16.mxu0 0
  %157 = vmatpush1.bf16.msra.mxu0 0
  %158 = vmatprep.subr.bf16.mxu0 0
  %159 = vmatpush1.bf16.msra.mxu0 0
  %160 = vmatprep.subr.bf16.mxu0 0
  %161 = vmatpush1.bf16.msra.mxu0 0
  %162 = vmatprep.subr.bf16.mxu0 0
  %163 = vmatpush1.bf16.msra.mxu0 0
  %164 = vmatprep.subr.bf16.mxu0 0
  %165 = vmatpush1.bf16.msra.mxu0 0
  %166 = vmatprep.subr.bf16.mxu0 0
  %167 = vmatpush1.bf16.msra.mxu0 0
  %168 = vmatprep.subr.bf16.mxu0 0
  %169 = vmatpush1.bf16.msra.mxu0 0
  %170 = vmatprep.subr.bf16.mxu0 0
  %171 = vmatpush1.bf16.msra.mxu0 0
  %172 = vmatprep.subr.bf16.mxu0 0
  %173 = vmatpush1.bf16.msra.mxu0 0
  %174 = vmatprep.mubr.bf16.mxu0 0
  %175 = vmatmul.mubr.bf16.gmra.mrb[0].mxu0 %v127
  %v176 = vpop.f32.mrb[0].mxu0
  %v177 = vadd.f32 0.0, %v176
  %v178 = vpop.f32.mrb[0].mxu0
  %v179 = vadd.f32 0.0, %v178
  %v180 = vpop.f32.mrb[0].mxu0
  %v181 = vadd.f32 0.0, %v180
  %v182 = vpop.f32.mrb[0].mxu0
  %v183 = vadd.f32 0.0, %v182
  %184 = vmatprep.mubr.bf16.mxu0 0
  %185 = vmatmul.mubr.bf16.gmra.mrb[0].mxu0 %v130
  %v186 = vpop.f32.mrb[0].mxu0
  %v187 = vadd.f32 0.0, %v186
  %v188 = vpop.f32.mrb[0].mxu0
  %v189 = vadd.f32 0.0, %v188
  %v190 = vpop.f32.mrb[0].mxu0
  %v191 = vadd.f32 0.0, %v190
  %v192 = vpop.f32.mrb[0].mxu0
  %v193 = vadd.f32 0.0, %v192
  %194 = vmatprep.mubr.bf16.mxu0 0
  %195 = vmatmul.mubr.bf16.gmra.mrb[0].mxu0 %v133
  %v196 = vpop.f32.mrb[0].mxu0
  %v197 = vadd.f32 0.0, %v196
  %v198 = vpop.f32.mrb[0].mxu0
  %v199 = vadd.f32 0.0, %v198
  %v200 = vpop.f32.mrb[0].mxu0
  %v201 = vpop.f32.mrb[0].mxu0
  %202 = vdwg.mxu0
  %v210 = vunpack.c.l.b16 %v38
  %v211 = vunpack.c.h.b16 %v38
  %v212 = vunpack.c.l.b16 %v39
  %v213 = vunpack.c.h.b16 %v39
  %v214 = vunpack.c.l.b16 %v40
  %v215 = vunpack.c.h.b16 %v40
  %v216 = vunpack.c.l.b16 %v41
  %v217 = vunpack.c.h.b16 %v41
  %v218 = vunpack.c.l.b16 %v42
  %v219 = vunpack.c.h.b16 %v42
  %v220 = vunpack.c.l.b16 %v43
  %v221 = vunpack.c.h.b16 %v43
  %v222 = vunpack.c.l.b16 %v44
  %v223 = vunpack.c.h.b16 %v44
  %v224 = vpack.c.b16 %v212, %v210
  %v225 = vpack.c.b16 %v213, %v211
  %v226 = vpack.c.b16 %v216, %v214
  %v227 = vpack.c.b16 %v217, %v215
  %v228 = vpack.c.b16 %v220, %v218
  %v229 = vpack.c.b16 %v221, %v219
  %v230 = vpack.c.b16 %v222, %v222
  %v231 = vpack.c.b16 %v223, %v223
  %v238 = vsel %vm125, %v63, 0
  %v240 = vsel %vm125, %v64, 0
  %v242 = vsel %vm125, %v65, 0
  %v245 = vsel %vm135, %v230, 0
  %v248 = vsel %vm135, %v231, 0
  %250 = vmatprep.subr.bf16.mxu0 %v225
  %251 = vmatpush1.bf16.msra.mxu0 %v224
  %252 = vmatprep.subr.bf16.mxu0 %v227
  %253 = vmatpush1.bf16.msra.mxu0 %v226
  %254 = vmatprep.subr.bf16.mxu0 %v229
  %255 = vmatpush1.bf16.msra.mxu0 %v228
  %256 = vmatprep.subr.bf16.mxu0 %v248
  %257 = vmatpush1.bf16.msra.mxu0 %v245
  %258 = vmatprep.subr.bf16.mxu0 0
  %259 = vmatpush1.bf16.msra.mxu0 0
  %260 = vmatprep.subr.bf16.mxu0 0
  %261 = vmatpush1.bf16.msra.mxu0 0
  %262 = vmatprep.subr.bf16.mxu0 0
  %263 = vmatpush1.bf16.msra.mxu0 0
  %264 = vmatprep.subr.bf16.mxu0 0
  %265 = vmatpush1.bf16.msra.mxu0 0
  %266 = vmatprep.subr.bf16.mxu0 0
  %267 = vmatpush1.bf16.msra.mxu0 0
  %268 = vmatprep.subr.bf16.mxu0 0
  %269 = vmatpush1.bf16.msra.mxu0 0
  %270 = vmatprep.subr.bf16.mxu0 0
  %271 = vmatpush1.bf16.msra.mxu0 0
  %272 = vmatprep.subr.bf16.mxu0 0
  %273 = vmatpush1.bf16.msra.mxu0 0
  %274 = vmatprep.subr.bf16.mxu0 0
  %275 = vmatpush1.bf16.msra.mxu0 0
  %276 = vmatprep.subr.bf16.mxu0 0
  %277 = vmatpush1.bf16.msra.mxu0 0
  %278 = vmatprep.subr.bf16.mxu0 0
  %279 = vmatpush1.bf16.msra.mxu0 0
  %280 = vmatprep.subr.bf16.mxu0 0
  %281 = vmatpush1.bf16.msra.mxu0 0
  %282 = vmatprep.mubr.bf16.mxu0 0
  %283 = vmatmul.mubr.bf16.gmra.mrb[0].mxu0 %v238
  %v284 = vpop.f32.mrb[0].mxu0
  %v285 = vadd.f32 %v177, %v284
  %v286 = vpop.f32.mrb[0].mxu0
  %v287 = vadd.f32 %v179, %v286
  %v288 = vpop.f32.mrb[0].mxu0
  %v289 = vadd.f32 %v181, %v288
  %v290 = vpop.f32.mrb[0].mxu0
  %v291 = vadd.f32 %v183, %v290
  %292 = vmatprep.mubr.bf16.mxu0 0
  %293 = vmatmul.mubr.bf16.gmra.mrb[0].mxu0 %v240
  %v294 = vpop.f32.mrb[0].mxu0
  %v295 = vadd.f32 %v187, %v294
  %v296 = vpop.f32.mrb[0].mxu0
  %v297 = vadd.f32 %v189, %v296
  %v298 = vpop.f32.mrb[0].mxu0
  %v299 = vadd.f32 %v191, %v298
  %v300 = vpop.f32.mrb[0].mxu0
  %v301 = vadd.f32 %v193, %v300
  %302 = vmatprep.mubr.bf16.mxu0 0
  %303 = vmatmul.mubr.bf16.gmra.mrb[0].mxu0 %v242
  %v304 = vpop.f32.mrb[0].mxu0
  %v305 = vadd.f32 %v197, %v304
  %v306 = vpop.f32.mrb[0].mxu0
  %v307 = vadd.f32 %v199, %v306
  %v308 = vpop.f32.mrb[0].mxu0
  %v309 = vpop.f32.mrb[0].mxu0
  %310 = vdwg.mxu0
  %s311 = scalar_lea.vmem %s1, 112
  %v312 = vld [vmem:[%s311] sm:$0xff]
  %v313 = vld [vmem:[%s311 + $0x8] sm:$0xff]
  %v314 = vld [vmem:[%s311 + $0x10] sm:$0xff]
  %v315 = vld [vmem:[%s311 + $0x18] sm:$0xff]
  %v316 = vld [vmem:[%s311 + $0x20] sm:$0xff]
  %v317 = vld [vmem:[%s311 + $0x28] sm:$0xff]
  %v318 = vld [vmem:[%s311 + $0x30] sm:$0x77]
  %vm319 = vcmask 1046528
  %v320 = vrot.slane %v63, 1
  %v321 = vrot.slane %v64, 1
  %v322 = vsel %vm319, %v320, %v321
  %v323 = vrot.slane %v65, 1
  %v324 = vsel %vm319, %v321, %v323
  %v332 = vunpack.c.l.b16 %v312
  %v333 = vunpack.c.h.b16 %v312
  %v334 = vunpack.c.l.b16 %v313
  %v335 = vunpack.c.h.b16 %v313
  %v336 = vunpack.c.l.b16 %v314
  %v337 = vunpack.c.h.b16 %v314
  %v338 = vunpack.c.l.b16 %v315
  %v339 = vunpack.c.h.b16 %v315
  %v340 = vunpack.c.l.b16 %v316
  %v341 = vunpack.c.h.b16 %v316
  %v342 = vunpack.c.l.b16 %v317
  %v343 = vunpack.c.h.b16 %v317
  %v344 = vunpack.c.l.b16 %v318
  %v345 = vunpack.c.h.b16 %v318
  %v346 = vpack.c.b16 %v334, %v332
  %v347 = vpack.c.b16 %v335, %v333
  %v348 = vpack.c.b16 %v338, %v336
  %v349 = vpack.c.b16 %v339, %v337
  %v350 = vpack.c.b16 %v342, %v340
  %v351 = vpack.c.b16 %v343, %v341
  %v352 = vpack.c.b16 %v344, %v344
  %v353 = vpack.c.b16 %v345, %v345
  %v361 = vsel %vm125, %v322, 0
  %v364 = vsel %vm125, %v324, 0
  %v367 = vsel %vm125, %v323, 0
  %v370 = vsel %vm135, %v352, 0
  %v373 = vsel %vm135, %v353, 0
  %375 = vmatprep.subr.bf16.mxu0 %v347
  %376 = vmatpush1.bf16.msra.mxu0 %v346
  %377 = vmatprep.subr.bf16.mxu0 %v349
  %378 = vmatpush1.bf16.msra.mxu0 %v348
  %379 = vmatprep.subr.bf16.mxu0 %v351
  %380 = vmatpush1.bf16.msra.mxu0 %v350
  %381 = vmatprep.subr.bf16.mxu0 %v373
  %382 = vmatpush1.bf16.msra.mxu0 %v370
  %383 = vmatprep.subr.bf16.mxu0 0
  %384 = vmatpush1.bf16.msra.mxu0 0
  %385 = vmatprep.subr.bf16.mxu0 0
  %386 = vmatpush1.bf16.msra.mxu0 0
  %387 = vmatprep.subr.bf16.mxu0 0
  %388 = vmatpush1.bf16.msra.mxu0 0
  %389 = vmatprep.subr.bf16.mxu0 0
  %390 = vmatpush1.bf16.msra.mxu0 0
  %391 = vmatprep.subr.bf16.mxu0 0
  %392 = vmatpush1.bf16.msra.mxu0 0
  %393 = vmatprep.subr.bf16.mxu0 0
  %394 = vmatpush1.bf16.msra.mxu0 0
  %395 = vmatprep.subr.bf16.mxu0 0
  %396 = vmatpush1.bf16.msra.mxu0 0
  %397 = vmatprep.subr.bf16.mxu0 0
  %398 = vmatpush1.bf16.msra.mxu0 0
  %399 = vmatprep.subr.bf16.mxu0 0
  %400 = vmatpush1.bf16.msra.mxu0 0
  %401 = vmatprep.subr.bf16.mxu0 0
  %402 = vmatpush1.bf16.msra.mxu0 0
  %403 = vmatprep.subr.bf16.mxu0 0
  %404 = vmatpush1.bf16.msra.mxu0 0
  %405 = vmatprep.subr.bf16.mxu0 0
  %406 = vmatpush1.bf16.msra.mxu0 0
  %407 = vmatprep.mubr.bf16.mxu0 0
  %408 = vmatmul.mubr.bf16.gmra.mrb[0].mxu0 %v361
  %v409 = vpop.f32.mrb[0].mxu0
  %v410 = vadd.f32 0.0, %v409
  %v411 = vpop.f32.mrb[0].mxu0
  %v412 = vadd.f32 0.0, %v411
  %v413 = vpop.f32.mrb[0].mxu0
  %v414 = vadd.f32 0.0, %v413
  %v415 = vpop.f32.mrb[0].mxu0
  %v416 = vadd.f32 0.0, %v415
  %417 = vmatprep.mubr.bf16.mxu0 0
  %418 = vmatmul.mubr.bf16.gmra.mrb[0].mxu0 %v364
  %v419 = vpop.f32.mrb[0].mxu0
  %v420 = vadd.f32 0.0, %v419
  %v421 = vpop.f32.mrb[0].mxu0
  %v422 = vadd.f32 0.0, %v421
  %v423 = vpop.f32.mrb[0].mxu0
  %v424 = vadd.f32 0.0, %v423
  %v425 = vpop.f32.mrb[0].mxu0
  %v426 = vadd.f32 0.0, %v425
  %427 = vmatprep.mubr.bf16.mxu0 0
  %428 = vmatmul.mubr.bf16.gmra.mrb[0].mxu0 %v367
  %v429 = vpop.f32.mrb[0].mxu0
  %v430 = vadd.f32 0.0, %v429
  %v431 = vpop.f32.mrb[0].mxu0
  %v432 = vadd.f32 0.0, %v431
  %v433 = vpop.f32.mrb[0].mxu0
  %v434 = vpop.f32.mrb[0].mxu0
  %435 = vdwg.mxu0
  %v436 = vadd.f32 %v285, %v410
  %v437 = vadd.f32 %v287, %v412
  %v438 = vadd.f32 %v289, %v414
  %v439 = vadd.f32 %v291, %v416
  %v440 = vadd.f32 %v295, %v420
  %v441 = vadd.f32 %v297, %v422
  %v442 = vadd.f32 %v299, %v424
  %v443 = vadd.f32 %v301, %v426
  %v444 = vadd.f32 %v305, %v430
  %v445 = vadd.f32 %v307, %v432
  %v446 = vld [vmem:[%s6] sm:$0xff]
  %v447 = vld [vmem:[%s6 + $0x8] sm:$0xff]
  %v448 = vld [vmem:[%s6 + $0x10] sm:$0xff]
  %v449 = vld [vmem:[%s6 + $0x18] sm:$0xff]
  %v450 = vld [vmem:[%s6 + $0x20] sm:$0x3]
  %452 = vset.pattern.permute.xlu0 0
  %453 = vperm.xlu0 %452, %v446
  %v454 = vpop.permute.xlu0 %453
  %457 = vset.pattern.permute.xlu0 0
  %458 = vperm.xlu0 %457, %v447
  %v459 = vpop.permute.xlu0 %458
  %462 = vset.pattern.permute.xlu0 0
  %463 = vperm.xlu0 %462, %v448
  %v464 = vpop.permute.xlu0 %463
  %467 = vset.pattern.permute.xlu0 0
  %468 = vperm.xlu0 %467, %v449
  %v469 = vpop.permute.xlu0 %468
  %472 = vset.pattern.permute.xlu0 0
  %473 = vperm.xlu0 %472, %v450
  %v474 = vpop.permute.xlu0 %473
  %v476 = vmul.f32 %v436, %v454
  %v477 = vmul.f32 %v437, %v454
  %v478 = vmul.f32 %v438, %v459
  %v479 = vmul.f32 %v439, %v459
  %v480 = vmul.f32 %v440, %v464
  %v481 = vmul.f32 %v441, %v464
  %v482 = vmul.f32 %v442, %v469
  %v483 = vmul.f32 %v443, %v469
  %v484 = vmul.f32 %v444, %v474
  %v485 = vmul.f32 %v445, %v474
  %v486 = vadd.f32 %v476, %v478
  %v487 = vadd.f32 %v486, %v480
  %v488 = vadd.f32 %v487, %v482
  %vm489 = vcmask 1041408
  %v490 = vsel %vm489, %v484, 0.0
  %v491 = vadd.f32 %v488, %v490
  %v492 = vrot.slane %v491, 4
  %v493 = vadd.f32 %v491, %v492
  %v494 = vrot.slane %v493, 2
  %v495 = vadd.f32 %v493, %v494
  %v496 = vrot.slane %v495, 1
  %v497 = vadd.f32 %v495, %v496
  %vm498 = vcmask 523264
  %v499 = vsel %vm498, %v477, 0.0
  %v500 = vsel %vm498, %v479, 0.0
  %v501 = vadd.f32 %v499, %v500
  %v502 = vsel %vm498, %v481, 0.0
  %v503 = vadd.f32 %v501, %v502
  %v504 = vsel %vm498, %v483, 0.0
  %v505 = vadd.f32 %v503, %v504
  %vm506 = vcmask 517120
  %v507 = vsel %vm506, %v485, 0.0
  %v508 = vadd.f32 %v505, %v507
  %v509 = vrot.slane %v508, 4
  %v510 = vadd.f32 %v508, %v509
  %v511 = vrot.slane %v510, 2
  %v512 = vadd.f32 %v510, %v511
  %v513 = vrot.slane %v512, 1
  %v514 = vadd.f32 %v512, %v513
  %v515 = vmul.f32 %v476, %v436
  %v516 = vmul.f32 %v477, %v437
  %v517 = vmul.f32 %v478, %v438
  %v518 = vmul.f32 %v479, %v439
  %v519 = vmul.f32 %v480, %v440
  %v520 = vmul.f32 %v481, %v441
  %v521 = vmul.f32 %v482, %v442
  %v522 = vmul.f32 %v483, %v443
  %v523 = vmul.f32 %v484, %v444
  %v524 = vmul.f32 %v485, %v445
  %v525 = vadd.f32 %v515, %v517
  %v526 = vadd.f32 %v525, %v519
  %v527 = vadd.f32 %v526, %v521
  %v528 = vsel %vm489, %v523, 0.0
  %v529 = vadd.f32 %v527, %v528
  %v530 = vrot.slane %v529, 4
  %v531 = vadd.f32 %v529, %v530
  %v532 = vrot.slane %v531, 2
  %v533 = vadd.f32 %v531, %v532
  %v534 = vrot.slane %v533, 1
  %v535 = vadd.f32 %v533, %v534
  %v536 = vsel %vm498, %v516, 0.0
  %v537 = vsel %vm498, %v518, 0.0
  %v538 = vadd.f32 %v536, %v537
  %v539 = vsel %vm498, %v520, 0.0
  %v540 = vadd.f32 %v538, %v539
  %v541 = vsel %vm498, %v522, 0.0
  %v542 = vadd.f32 %v540, %v541
  %v543 = vsel %vm506, %v524, 0.0
  %v544 = vadd.f32 %v542, %v543
  %v545 = vrot.slane %v544, 4
  %v546 = vadd.f32 %v544, %v545
  %v547 = vrot.slane %v546, 2
  %v548 = vadd.f32 %v546, %v547
  %v549 = vrot.slane %v548, 1
  %v550 = vadd.f32 %v548, %v549
  %vm551 = vcmask 1040384
  %v552 = vsel %vm551, %v497, %v535
  %v553 = vsel %vm551, %v514, %v550
  %v554 = vld [vmem:[%s2] sm:$0xff]
  %v555 = vld [vmem:[%s2 + $0x8] sm:$0xff]
  %v556 = vld [vmem:[%s2 + $0x10] sm:$0xff]
  %v557 = vld [vmem:[%s2 + $0x18] sm:$0xff]
  %v558 = vld [vmem:[%s2 + $0x20] sm:$0xff]
  %v559 = vld [vmem:[%s2 + $0x28] sm:$0xff]
  %v560 = vld [vmem:[%s2 + $0x30] sm:$0xff]
  %v561 = vld [vmem:[%s2 + $0x38] sm:$0xff]
  %v562 = vld [vmem:[%s2 + $0x40] sm:$0xff]
  %v563 = vld [vmem:[%s2 + $0x48] sm:$0xff]
  %v564 = vld [vmem:[%s2 + $0x50] sm:$0xff]
  %v565 = vld [vmem:[%s2 + $0x58] sm:$0xff]
  %v566 = vld [vmem:[%s2 + $0x60] sm:$0xff]
  %v567 = vld [vmem:[%s2 + $0x68] sm:$0xff]
  %v568 = vld [vmem:[%s2 + $0x70] sm:$0xff]
  %v569 = vld [vmem:[%s2 + $0x78] sm:$0xff]
  %v570 = vld [vmem:[%s2 + $0x80] sm:$0xff]
  %v571 = vld [vmem:[%s2 + $0x88] sm:$0xff]
  %v572 = vld [vmem:[%s2 + $0x90] sm:$0xff]
  %v573 = vld [vmem:[%s2 + $0x98] sm:$0xff]
  %v574 = vld [vmem:[%s2 + $0xa0] sm:$0xff]
  %v575 = vld [vmem:[%s2 + $0xa8] sm:$0xff]
  %v576 = vld [vmem:[%s2 + $0xb0] sm:$0xff]
  %v577 = vld [vmem:[%s2 + $0xb8] sm:$0xff]
  %v579 = vsel %vm498, %v553, 0
  %581 = vmatprep.subr.mxu0 0.0
  %582 = vmatpush1.msra.mxu0 %v554
  %583 = vmatprep.subr.mxu0 0.0
  %584 = vmatpush1.msra.mxu0 %v555
  %585 = vmatprep.subr.mxu0 0.0
  %586 = vmatpush1.msra.mxu0 %v556
  %587 = vmatprep.subr.mxu0 0.0
  %588 = vmatpush1.msra.mxu0 %v557
  %589 = vmatprep.subr.mxu0 0.0
  %590 = vmatpush1.msra.mxu0 %v558
  %591 = vmatprep.subr.mxu0 0.0
  %592 = vmatpush1.msra.mxu0 %v559
  %593 = vmatprep.subr.mxu0 0.0
  %594 = vmatpush1.msra.mxu0 %v560
  %595 = vmatprep.subr.mxu0 0.0
  %596 = vmatpush1.msra.mxu0 %v561
  %597 = vmatprep.subr.mxu0 0.0
  %598 = vmatpush1.msra.mxu0 %v562
  %599 = vmatprep.subr.mxu0 0.0
  %600 = vmatpush1.msra.mxu0 %v563
  %601 = vmatprep.subr.mxu0 0.0
  %602 = vmatpush1.msra.mxu0 %v564
  %603 = vmatprep.subr.mxu0 0.0
  %604 = vmatpush1.msra.mxu0 %v565
  %605 = vmatprep.subr.mxu0 0.0
  %606 = vmatpush1.msra.mxu0 %v566
  %607 = vmatprep.subr.mxu0 0.0
  %608 = vmatpush1.msra.mxu0 %v567
  %609 = vmatprep.subr.mxu0 0.0
  %610 = vmatpush1.msra.mxu0 %v568
  %611 = vmatprep.subr.mxu0 0.0
  %612 = vmatpush1.msra.mxu0 %v569
  %613 = vmatprep.subr.mxu0 0.0
  %614 = vmatpush1.msra.mxu0 %v570
  %615 = vmatprep.subr.mxu0 0.0
  %616 = vmatpush1.msra.mxu0 %v571
  %617 = vmatprep.subr.mxu0 0.0
  %618 = vmatpush1.msra.mxu0 %v572
  %619 = vmatprep.subr.mxu0 0.0
  %620 = vmatpush1.msra.mxu0 %v573
  %621 = vmatprep.subr.mxu0 0.0
  %622 = vmatpush1.msra.mxu0 %v574
  %623 = vmatprep.subr.mxu0 0.0
  %624 = vmatpush1.msra.mxu0 %v575
  %625 = vmatprep.subr.mxu0 0.0
  %626 = vmatpush1.msra.mxu0 %v576
  %627 = vmatprep.subr.mxu0 0.0
  %628 = vmatpush1.msra.mxu0 %v577
  %629 = vmatprep.subr.mxu0 0.0
  %630 = vmatpush1.msra.mxu0 0.0
  %631 = vmatprep.subr.mxu0 0.0
  %632 = vmatpush1.msra.mxu0 0.0
  %633 = vmatprep.subr.mxu0 0.0
  %634 = vmatpush1.msra.mxu0 0.0
  %635 = vmatprep.subr.mxu0 0.0
  %636 = vmatpush1.msra.mxu0 0.0
  %637 = vmatprep.subr.mxu0 0.0
  %638 = vmatpush1.msra.mxu0 0.0
  %639 = vmatprep.subr.mxu0 0.0
  %640 = vmatpush1.msra.mxu0 0.0
  %641 = vmatprep.subr.mxu0 0.0
  %642 = vmatpush1.msra.mxu0 0.0
  %643 = vmatprep.subr.mxu0 0.0
  %644 = vmatpush1.msra.mxu0 0.0
  %645 = vmatprep.mubr.f32.mxu0 %v579
  %646 = vmatmul.mubr.f32.gmra.mrb[0].mxu0 %v552
  %v647 = vpop.f32.mrb[0].mxu0
  %v648 = vadd.f32 0.0, %v647
  %v649 = vpop.f32.mrb[0].mxu0
  %650 = vdwg.mxu0
  %v651 = vld [vmem:[%s3] sm:$0xff]
  %v652 = vld [vmem:[%s3 + $0x8] sm:$0xff]
  %v653 = vld [vmem:[%s3 + $0x10] sm:$0xf]
  %v654 = vld [vmem:[%s3 + $0x18] sm:$0xf]
  %vm655 = vcmask 97280
  %v657 = vsel %vm655, %v648, 0
  %vm659 = vcmask 1043456
  %v661 = vsel %vm659, %v653, 0
  %v664 = vsel %vm659, %v654, 0
  %666 = vmatprep.subr.mxu0 %v652
  %667 = vmatpush1.msra.mxu0 %v651
  %668 = vmatprep.subr.mxu0 %v664
  %669 = vmatpush1.msra.mxu0 %v661
  %670 = vmatprep.subr.mxu0 0.0
  %671 = vmatpush1.msra.mxu0 0.0
  %672 = vmatprep.subr.mxu0 0.0
  %673 = vmatpush1.msra.mxu0 0.0
  %674 = vmatprep.subr.mxu0 0.0
  %675 = vmatpush1.msra.mxu0 0.0
  %676 = vmatprep.subr.mxu0 0.0
  %677 = vmatpush1.msra.mxu0 0.0
  %678 = vmatprep.subr.mxu0 0.0
  %679 = vmatpush1.msra.mxu0 0.0
  %680 = vmatprep.subr.mxu0 0.0
  %681 = vmatpush1.msra.mxu0 0.0
  %682 = vmatprep.subr.mxu0 0.0
  %683 = vmatpush1.msra.mxu0 0.0
  %684 = vmatprep.subr.mxu0 0.0
  %685 = vmatpush1.msra.mxu0 0.0
  %686 = vmatprep.subr.mxu0 0.0
  %687 = vmatpush1.msra.mxu0 0.0
  %688 = vmatprep.subr.mxu0 0.0
  %689 = vmatpush1.msra.mxu0 0.0
  %690 = vmatprep.subr.mxu0 0.0
  %691 = vmatpush1.msra.mxu0 0.0
  %692 = vmatprep.subr.mxu0 0.0
  %693 = vmatpush1.msra.mxu0 0.0
  %694 = vmatprep.subr.mxu0 0.0
  %695 = vmatpush1.msra.mxu0 0.0
  %696 = vmatprep.subr.mxu0 0.0
  %697 = vmatpush1.msra.mxu0 0.0
  %698 = vmatprep.subr.mxu0 0.0
  %699 = vmatpush1.msra.mxu0 0.0
  %700 = vmatprep.subr.mxu0 0.0
  %701 = vmatpush1.msra.mxu0 0.0
  %702 = vmatprep.subr.mxu0 0.0
  %703 = vmatpush1.msra.mxu0 0.0
  %704 = vmatprep.subr.mxu0 0.0
  %705 = vmatpush1.msra.mxu0 0.0
  %706 = vmatprep.subr.mxu0 0.0
  %707 = vmatpush1.msra.mxu0 0.0
  %708 = vmatprep.subr.mxu0 0.0
  %709 = vmatpush1.msra.mxu0 0.0
  %710 = vmatprep.subr.mxu0 0.0
  %711 = vmatpush1.msra.mxu0 0.0
  %712 = vmatprep.subr.mxu0 0.0
  %713 = vmatpush1.msra.mxu0 0.0
  %714 = vmatprep.subr.mxu0 0.0
  %715 = vmatpush1.msra.mxu0 0.0
  %716 = vmatprep.subr.mxu0 0.0
  %717 = vmatpush1.msra.mxu0 0.0
  %718 = vmatprep.subr.mxu0 0.0
  %719 = vmatpush1.msra.mxu0 0.0
  %720 = vmatprep.subr.mxu0 0.0
  %721 = vmatpush1.msra.mxu0 0.0
  %722 = vmatprep.subr.mxu0 0.0
  %723 = vmatpush1.msra.mxu0 0.0
  %724 = vmatprep.subr.mxu0 0.0
  %725 = vmatpush1.msra.mxu0 0.0
  %726 = vmatprep.subr.mxu0 0.0
  %727 = vmatpush1.msra.mxu0 0.0
  %728 = vmatprep.subr.mxu0 0.0
  %729 = vmatpush1.msra.mxu0 0.0
  %730 = vmatprep.mubr.f32.mxu0 0.0
  %731 = vmatmul.mubr.f32.gmra.mrb[0].mxu0 %v657
  %v732 = vpop.f32.mrb[0].mxu0
  %v733 = vadd.f32 0.0, %v732
  %v734 = vpop.f32.mrb[0].mxu0
  %v735 = vadd.f32 0.0, %v734
  %736 = vdwg.mxu0
  %v737 = vmul.f32 %v733, 0.001953125
  %v738 = vmul.f32 %v735, 0.001953125
  %v739 = vmul.f32 %v737, %v737
  %v740 = vmul.f32 %v738, %v738
  %v743 = vrot.slane %v739, 7
  %v744 = vrot.slane %v740, 7
  %v747 = vsub.f32 %v737, %v743
  %v748 = vsub.f32 %v738, %v744
  %v749 = vld [vmem:[%s7] sm:$0x3]
  %v750 = vadd.f32 %v747, 1e-05
  %v751 = vadd.f32 %v748, 1e-05
  %v752 = vrsqrt.pop %v750
  %v753 = vrsqrt.pop %v751
  %v756 = vcombine.low %v752, %v753
  %v758 = vunpack.c.l.s4 1966171168
  %v759 = vunpack.c.0.s8 %v758
  %v760 = vlaneseq
  %v761 = vshrl.u32 %v760, 7
  %v762 = vsub.s32 %v759, %v761
  %v763 = vrot.slane %v756, %v762
  %v764 = vcombine.high %v763, %v763
  %v766 = vunpack.c.l.s4 1966171168
  %v767 = vunpack.c.0.s8 %v766
  %v768 = vlaneseq
  %v769 = vshrl.u32 %v768, 7
  %v770 = vsub.s32 %v767, %v769
  %v771 = vrot.slane %v764, %v770
  %v773 = vmul.f32 %v749, %v771
  %v774 = vld [vmem:[%s8] sm:$0x3]
  %v776 = vlaneseq
  %v777 = vshrl.u32 %v776, 7
  %v778 = vsub.s32 0, %v777
  %v779 = vrot.slane %v773, %v778
  %v780 = vlaneseq
  %v781 = vshrl.u32 %v780, 7
  %v782 = vsub.s32 1, %v781
  %v783 = vrot.slane %v773, %v782
  %v786 = vmul.f32 %v737, %v779
  %v787 = vmul.f32 %v738, %v783
  %v790 = vcombine.low %v786, %v787
  %v792 = vunpack.c.l.s4 1966171168
  %v793 = vunpack.c.0.s8 %v792
  %v794 = vlaneseq
  %v795 = vshrl.u32 %v794, 7
  %v796 = vsub.s32 %v793, %v795
  %v797 = vrot.slane %v790, %v796
  %v799 = vunpack.c.l.s4 1966171168
  %v800 = vunpack.c.0.s8 %v799
  %v801 = vlaneseq
  %v802 = vshrl.u32 %v801, 7
  %v803 = vsub.s32 %v800, %v802
  %v804 = vrot.slane %v797, %v803
  %v806 = vsub.f32 %v774, %v804
  %v807 = vmul.f32 %v436, %v779
  %v808 = vmul.f32 %v437, %v783
  %v809 = vmul.f32 %v438, %v779
  %v810 = vmul.f32 %v439, %v783
  %v811 = vmul.f32 %v440, %v779
  %v812 = vmul.f32 %v441, %v783
  %v813 = vmul.f32 %v442, %v779
  %v814 = vmul.f32 %v443, %v783
  %v815 = vmul.f32 %v444, %v779
  %v816 = vmul.f32 %v445, %v783
  %v818 = vlaneseq
  %v819 = vshrl.u32 %v818, 7
  %v820 = vsub.s32 0, %v819
  %v821 = vrot.slane %v806, %v820
  %v822 = vlaneseq
  %v823 = vshrl.u32 %v822, 7
  %v824 = vsub.s32 1, %v823
  %v825 = vrot.slane %v806, %v824
  %v828 = vadd.f32 %v807, %v821
  %v829 = vadd.f32 %v808, %v825
  %v830 = vadd.f32 %v809, %v821
  %v831 = vadd.f32 %v810, %v825
  %v832 = vadd.f32 %v811, %v821
  %v833 = vadd.f32 %v812, %v825
  %v834 = vadd.f32 %v813, %v821
  %v835 = vadd.f32 %v814, %v825
  %v836 = vadd.f32 %v815, %v821
  %v837 = vadd.f32 %v816, %v825
  %v838 = vmax.f32 %v828, 0.0
  %v839 = vmax.f32 %v829, 0.0
  %v840 = vmax.f32 %v830, 0.0
  %v841 = vmax.f32 %v831, 0.0
  %v842 = vmax.f32 %v832, 0.0
  %v843 = vmax.f32 %v833, 0.0
  %v844 = vmax.f32 %v834, 0.0
  %v845 = vmax.f32 %v835, 0.0
  %v846 = vmax.f32 %v836, 0.0
  %v847 = vmax.f32 %v837, 0.0
  %v848 = vpack.c.bf16 %v840, %v838
  %v849 = vpack.c.bf16 %v841, %v839
  %v850 = vpack.c.bf16 %v844, %v842
  %v851 = vpack.c.bf16 %v845, %v843
  %v852 = vpack.c.bf16 %v846, %v846
  %v853 = vpack.c.bf16 %v847, %v847
  %v854 = vld [vmem:[%s4] sm:$0xf]
  %v855 = vld [vmem:[%s4 + $0x4] sm:$0xf]
  %v856 = vld [vmem:[%s4 + $0x8] sm:$0x3]
  %v860 = vunpack.c.l.b16 %v854
  %v861 = vunpack.c.l.b16 %v855
  %v862 = vunpack.c.l.b16 %v856
  %v863 = vpack.c.b16 %v861, %v860
  %v864 = vpack.c.b16 %v862, %v862
  %vm865 = vcmask 277504
  %v867 = vsel %vm865, %v863, 0
  %v870 = vsel %vm865, %v864, 0
  %v873 = vsel %vm551, %v852, 0
  %v876 = vsel %vm551, %v853, 0
  %878 = vmatprep.subr.bf16.mxu0 %v849
  %879 = vmatpush1.bf16.msra.mxu0 %v848
  %880 = vmatprep.subr.bf16.mxu0 %v851
  %881 = vmatpush1.bf16.msra.mxu0 %v850
  %882 = vmatprep.subr.bf16.mxu0 %v876
  %883 = vmatpush1.bf16.msra.mxu0 %v873
  %884 = vmatprep.subr.bf16.mxu0 0
  %885 = vmatpush1.bf16.msra.mxu0 0
  %886 = vmatprep.subr.bf16.mxu0 0
  %887 = vmatpush1.bf16.msra.mxu0 0
  %888 = vmatprep.subr.bf16.mxu0 0
  %889 = vmatpush1.bf16.msra.mxu0 0
  %890 = vmatprep.subr.bf16.mxu0 0
  %891 = vmatpush1.bf16.msra.mxu0 0
  %892 = vmatprep.subr.bf16.mxu0 0
  %893 = vmatpush1.bf16.msra.mxu0 0
  %894 = vmatprep.subr.bf16.mxu0 0
  %895 = vmatpush1.bf16.msra.mxu0 0
  %896 = vmatprep.subr.bf16.mxu0 0
  %897 = vmatpush1.bf16.msra.mxu0 0
  %898 = vmatprep.subr.bf16.mxu0 0
  %899 = vmatpush1.bf16.msra.mxu0 0
  %900 = vmatprep.subr.bf16.mxu0 0
  %901 = vmatpush1.bf16.msra.mxu0 0
  %902 = vmatprep.subr.bf16.mxu0 0
  %903 = vmatpush1.bf16.msra.mxu0 0
  %904 = vmatprep.subr.bf16.mxu0 0
  %905 = vmatpush1.bf16.msra.mxu0 0
  %906 = vmatprep.subr.bf16.mxu0 0
  %907 = vmatpush1.bf16.msra.mxu0 0
  %908 = vmatprep.subr.bf16.mxu0 0
  %909 = vmatpush1.bf16.msra.mxu0 0
  %910 = vmatprep.mubr.bf16.mxu0 0
  %911 = vmatmul.mubr.bf16.gmra.mrb[0].mxu0 %v867
  %v912 = vpop.f32.mrb[0].mxu0
  %v913 = vadd.f32 0.0, %v912
  %v914 = vpop.f32.mrb[0].mxu0
  %v915 = vadd.f32 0.0, %v914
  %v916 = vpop.f32.mrb[0].mxu0
  %v917 = vadd.f32 0.0, %v916
  %v918 = vpop.f32.mrb[0].mxu0
  %v919 = vadd.f32 0.0, %v918
  %920 = vmatprep.mubr.bf16.mxu0 0
  %921 = vmatmul.mubr.bf16.gmra.mrb[0].mxu0 %v870
  %v922 = vpop.f32.mrb[0].mxu0
  %v923 = vadd.f32 0.0, %v922
  %v924 = vpop.f32.mrb[0].mxu0
  %v925 = vadd.f32 0.0, %v924
  %v926 = vpop.f32.mrb[0].mxu0
  %v927 = vpop.f32.mrb[0].mxu0
  %928 = vdwg.mxu0
  %s929 = scalar_lea.vmem %s4, 12
  %v930 = vld [vmem:[%s929] sm:$0xf]
  %v931 = vld [vmem:[%s929 + $0x4] sm:$0xf]
  %v932 = vld [vmem:[%s929 + $0x8] sm:$0x3]
  %v936 = vunpack.c.l.b16 %v930
  %v937 = vunpack.c.l.b16 %v931
  %v938 = vunpack.c.l.b16 %v932
  %v939 = vpack.c.b16 %v937, %v936
  %v940 = vpack.c.b16 %v938, %v938
  %v942 = vsel %vm865, %v939, 0
  %v945 = vsel %vm865, %v940, 0
  %947 = vmatprep.subr.bf16.mxu0 %v849
  %948 = vmatpush1.bf16.msra.mxu0 %v848
  %949 = vmatprep.subr.bf16.mxu0 %v851
  %950 = vmatpush1.bf16.msra.mxu0 %v850
  %951 = vmatprep.subr.bf16.mxu0 %v876
  %952 = vmatpush1.bf16.msra.mxu0 %v873
  %953 = vmatprep.subr.bf16.mxu0 0
  %954 = vmatpush1.bf16.msra.mxu0 0
  %955 = vmatprep.subr.bf16.mxu0 0
  %956 = vmatpush1.bf16.msra.mxu0 0
  %957 = vmatprep.subr.bf16.mxu0 0
  %958 = vmatpush1.bf16.msra.mxu0 0
  %959 = vmatprep.subr.bf16.mxu0 0
  %960 = vmatpush1.bf16.msra.mxu0 0
  %961 = vmatprep.subr.bf16.mxu0 0
  %962 = vmatpush1.bf16.msra.mxu0 0
  %963 = vmatprep.subr.bf16.mxu0 0
  %964 = vmatpush1.bf16.msra.mxu0 0
  %965 = vmatprep.subr.bf16.mxu0 0
  %966 = vmatpush1.bf16.msra.mxu0 0
  %967 = vmatprep.subr.bf16.mxu0 0
  %968 = vmatpush1.bf16.msra.mxu0 0
  %969 = vmatprep.subr.bf16.mxu0 0
  %970 = vmatpush1.bf16.msra.mxu0 0
  %971 = vmatprep.subr.bf16.mxu0 0
  %972 = vmatpush1.bf16.msra.mxu0 0
  %973 = vmatprep.subr.bf16.mxu0 0
  %974 = vmatpush1.bf16.msra.mxu0 0
  %975 = vmatprep.subr.bf16.mxu0 0
  %976 = vmatpush1.bf16.msra.mxu0 0
  %977 = vmatprep.subr.bf16.mxu0 0
  %978 = vmatpush1.bf16.msra.mxu0 0
  %979 = vmatprep.mubr.bf16.mxu0 0
  %980 = vmatmul.mubr.bf16.gmra.mrb[0].mxu0 %v942
  %v981 = vpop.f32.mrb[0].mxu0
  %v982 = vadd.f32 0.0, %v981
  %v983 = vpop.f32.mrb[0].mxu0
  %v984 = vadd.f32 0.0, %v983
  %v985 = vpop.f32.mrb[0].mxu0
  %v986 = vadd.f32 0.0, %v985
  %v987 = vpop.f32.mrb[0].mxu0
  %v988 = vadd.f32 0.0, %v987
  %989 = vmatprep.mubr.bf16.mxu0 0
  %990 = vmatmul.mubr.bf16.gmra.mrb[0].mxu0 %v945
  %v991 = vpop.f32.mrb[0].mxu0
  %v992 = vadd.f32 0.0, %v991
  %v993 = vpop.f32.mrb[0].mxu0
  %v994 = vadd.f32 0.0, %v993
  %v995 = vpop.f32.mrb[0].mxu0
  %v996 = vpop.f32.mrb[0].mxu0
  %997 = vdwg.mxu0
  %v998 = vmax.f32 %v913, %v982
  %v999 = vmax.f32 %v915, %v984
  %v1000 = vmax.f32 %v917, %v986
  %v1001 = vmax.f32 %v919, %v988
  %v1002 = vmax.f32 %v923, %v992
  %v1003 = vmax.f32 %v925, %v994
  %v1004 = vpack.c.bf16 %v1000, %v998
  %v1005 = vpack.c.bf16 %v1001, %v999
  %v1006 = vpack.c.bf16 %v1002, %v1002
  %v1007 = vpack.c.bf16 %v1003, %v1003
  %v1008 = vld [vmem:[%s5] sm:$0xf]
  %v1009 = vld [vmem:[%s5 + $0x4] sm:$0xf]
  %v1010 = vld [vmem:[%s5 + $0x8] sm:$0xf]
  %v1011 = vld [vmem:[%s5 + $0xc] sm:$0xf]
  %v1012 = vld [vmem:[%s5 + $0x10] sm:$0xf]
  %v1013 = vld [vmem:[%s5 + $0x14] sm:$0xf]
  %v1014 = vld [vmem:[%s5 + $0x18] sm:$0xf]
  %v1015 = vld [vmem:[%s5 + $0x1c] sm:$0xf]
  %v1016 = vld [vmem:[%s5 + $0x20] sm:$0xf]
  %v1017 = vld [vmem:[%s5 + $0x24] sm:$0xf]
  %v1018 = vld [vmem:[%s5 + $0x28] sm:$0xf]
  %v1019 = vld [vmem:[%s5 + $0x2c] sm:$0xf]
  %v1020 = vld [vmem:[%s5 + $0x30] sm:$0xf]
  %v1021 = vld [vmem:[%s5 + $0x34] sm:$0xf]
  %v1022 = vld [vmem:[%s5 + $0x38] sm:$0xf]
  %v1023 = vld [vmem:[%s5 + $0x3c] sm:$0xf]
  %v1024 = vld [vmem:[%s5 + $0x40] sm:$0xf]
  %v1025 = vld [vmem:[%s5 + $0x44] sm:$0xf]
  %v1026 = vld [vmem:[%s5 + $0x48] sm:$0xf]
  %v1027 = vld [vmem:[%s5 + $0x4c] sm:$0xf]
  %v1028 = vld [vmem:[%s5 + $0x50] sm:$0xf]
  %v1029 = vld [vmem:[%s5 + $0x54] sm:$0xf]
  %v1030 = vld [vmem:[%s5 + $0x58] sm:$0xf]
  %v1031 = vld [vmem:[%s5 + $0x5c] sm:$0xf]
  %v1056 = vunpack.c.l.b16 %v1008
  %v1057 = vunpack.c.l.b16 %v1009
  %v1058 = vunpack.c.l.b16 %v1010
  %v1059 = vunpack.c.l.b16 %v1011
  %v1060 = vunpack.c.l.b16 %v1012
  %v1061 = vunpack.c.l.b16 %v1013
  %v1062 = vunpack.c.l.b16 %v1014
  %v1063 = vunpack.c.l.b16 %v1015
  %v1064 = vunpack.c.l.b16 %v1016
  %v1065 = vunpack.c.l.b16 %v1017
  %v1066 = vunpack.c.l.b16 %v1018
  %v1067 = vunpack.c.l.b16 %v1019
  %v1068 = vunpack.c.l.b16 %v1020
  %v1069 = vunpack.c.l.b16 %v1021
  %v1070 = vunpack.c.l.b16 %v1022
  %v1071 = vunpack.c.l.b16 %v1023
  %v1072 = vunpack.c.l.b16 %v1024
  %v1073 = vunpack.c.l.b16 %v1025
  %v1074 = vunpack.c.l.b16 %v1026
  %v1075 = vunpack.c.l.b16 %v1027
  %v1076 = vunpack.c.l.b16 %v1028
  %v1077 = vunpack.c.l.b16 %v1029
  %v1078 = vunpack.c.l.b16 %v1030
  %v1079 = vunpack.c.l.b16 %v1031
  %v1080 = vpack.c.b16 %v1057, %v1056
  %v1081 = vpack.c.b16 %v1059, %v1058
  %v1082 = vpack.c.b16 %v1061, %v1060
  %v1083 = vpack.c.b16 %v1063, %v1062
  %v1084 = vpack.c.b16 %v1065, %v1064
  %v1085 = vpack.c.b16 %v1067, %v1066
  %v1086 = vpack.c.b16 %v1069, %v1068
  %v1087 = vpack.c.b16 %v1071, %v1070
  %v1088 = vpack.c.b16 %v1073, %v1072
  %v1089 = vpack.c.b16 %v1075, %v1074
  %v1090 = vpack.c.b16 %v1077, %v1076
  %v1091 = vpack.c.b16 %v1079, %v1078
  %v1105 = vsel %vm498, %v1005, 0
  %v1108 = vsel %vm498, %v1007, 0
  %1110 = vmatprep.subr.bf16.mxu0 0
  %1111 = vmatpush1.bf16.msra.mxu0 %v1080
  %1112 = vmatprep.subr.bf16.mxu0 0
  %1113 = vmatpush1.bf16.msra.mxu0 %v1081
  %1114 = vmatprep.subr.bf16.mxu0 0
  %1115 = vmatpush1.bf16.msra.mxu0 %v1082
  %1116 = vmatprep.subr.bf16.mxu0 0
  %1117 = vmatpush1.bf16.msra.mxu0 %v1083
  %1118 = vmatprep.subr.bf16.mxu0 0
  %1119 = vmatpush1.bf16.msra.mxu0 %v1084
  %1120 = vmatprep.subr.bf16.mxu0 0
  %1121 = vmatpush1.bf16.msra.mxu0 %v1085
  %1122 = vmatprep.subr.bf16.mxu0 0
  %1123 = vmatpush1.bf16.msra.mxu0 %v1086
  %1124 = vmatprep.subr.bf16.mxu0 0
  %1125 = vmatpush1.bf16.msra.mxu0 %v1087
  %1126 = vmatprep.subr.bf16.mxu0 0
  %1127 = vmatpush1.bf16.msra.mxu0 %v1088
  %1128 = vmatprep.subr.bf16.mxu0 0
  %1129 = vmatpush1.bf16.msra.mxu0 %v1089
  %1130 = vmatprep.subr.bf16.mxu0 0
  %1131 = vmatpush1.bf16.msra.mxu0 %v1090
  %1132 = vmatprep.subr.bf16.mxu0 0
  %1133 = vmatpush1.bf16.msra.mxu0 %v1091
  %1134 = vmatprep.subr.bf16.mxu0 0
  %1135 = vmatpush1.bf16.msra.mxu0 0
  %1136 = vmatprep.subr.bf16.mxu0 0
  %1137 = vmatpush1.bf16.msra.mxu0 0
  %1138 = vmatprep.subr.bf16.mxu0 0
  %1139 = vmatpush1.bf16.msra.mxu0 0
  %1140 = vmatprep.subr.bf16.mxu0 0
  %1141 = vmatpush1.bf16.msra.mxu0 0
  %1142 = vmatprep.mubr.bf16.mxu0 %v1105
  %1143 = vmatmul.mubr.bf16.gmra.mrb[0].mxu0 %v1004
  %v1144 = vpop.f32.mrb[0].mxu0
  %v1145 = vadd.f32 0.0, %v1144
  %v1146 = vpop.f32.mrb[0].mxu0
  %v1147 = vpop.f32.mrb[0].mxu0
  %v1148 = vadd.f32 0.0, %v1147
  %v1149 = vpop.f32.mrb[0].mxu0
  %1150 = vmatprep.mubr.bf16.mxu0 %v1108
  %1151 = vmatmul.mubr.bf16.gmra.mrb[0].mxu0 %v1006
  %v1152 = vpop.f32.mrb[0].mxu0
  %v1153 = vadd.f32 0.0, %v1152
  %v1154 = vpop.f32.mrb[0].mxu0
  %v1155 = vpop.f32.mrb[0].mxu0
  %v1156 = vpop.f32.mrb[0].mxu0
  %1157 = vdwg.mxu0
  %s1158 = scalar_lea.vmem %s5, 96
  %v1159 = vld [vmem:[%s1158] sm:$0xf]
  %v1160 = vld [vmem:[%s1158 + $0x4] sm:$0xf]
  %v1161 = vld [vmem:[%s1158 + $0x8] sm:$0xf]
  %v1162 = vld [vmem:[%s1158 + $0xc] sm:$0xf]
  %v1163 = vld [vmem:[%s1158 + $0x10] sm:$0xf]
  %v1164 = vld [vmem:[%s1158 + $0x14] sm:$0xf]
  %v1165 = vld [vmem:[%s1158 + $0x18] sm:$0xf]
  %v1166 = vld [vmem:[%s1158 + $0x1c] sm:$0xf]
  %v1167 = vld [vmem:[%s1158 + $0x20] sm:$0xf]
  %v1168 = vld [vmem:[%s1158 + $0x24] sm:$0xf]
  %v1169 = vld [vmem:[%s1158 + $0x28] sm:$0xf]
  %v1170 = vld [vmem:[%s1158 + $0x2c] sm:$0xf]
  %v1171 = vld [vmem:[%s1158 + $0x30] sm:$0xf]
  %v1172 = vld [vmem:[%s1158 + $0x34] sm:$0xf]
  %v1173 = vld [vmem:[%s1158 + $0x38] sm:$0xf]
  %v1174 = vld [vmem:[%s1158 + $0x3c] sm:$0xf]
  %v1175 = vld [vmem:[%s1158 + $0x40] sm:$0xf]
  %v1176 = vld [vmem:[%s1158 + $0x44] sm:$0xf]
  %v1177 = vld [vmem:[%s1158 + $0x48] sm:$0xf]
  %v1178 = vld [vmem:[%s1158 + $0x4c] sm:$0xf]
  %v1179 = vld [vmem:[%s1158 + $0x50] sm:$0xf]
  %v1180 = vld [vmem:[%s1158 + $0x54] sm:$0xf]
  %v1181 = vld [vmem:[%s1158 + $0x58] sm:$0xf]
  %v1182 = vld [vmem:[%s1158 + $0x5c] sm:$0xf]
  %v1207 = vunpack.c.l.b16 %v1159
  %v1208 = vunpack.c.l.b16 %v1160
  %v1209 = vunpack.c.l.b16 %v1161
  %v1210 = vunpack.c.l.b16 %v1162
  %v1211 = vunpack.c.l.b16 %v1163
  %v1212 = vunpack.c.l.b16 %v1164
  %v1213 = vunpack.c.l.b16 %v1165
  %v1214 = vunpack.c.l.b16 %v1166
  %v1215 = vunpack.c.l.b16 %v1167
  %v1216 = vunpack.c.l.b16 %v1168
  %v1217 = vunpack.c.l.b16 %v1169
  %v1218 = vunpack.c.l.b16 %v1170
  %v1219 = vunpack.c.l.b16 %v1171
  %v1220 = vunpack.c.l.b16 %v1172
  %v1221 = vunpack.c.l.b16 %v1173
  %v1222 = vunpack.c.l.b16 %v1174
  %v1223 = vunpack.c.l.b16 %v1175
  %v1224 = vunpack.c.l.b16 %v1176
  %v1225 = vunpack.c.l.b16 %v1177
  %v1226 = vunpack.c.l.b16 %v1178
  %v1227 = vunpack.c.l.b16 %v1179
  %v1228 = vunpack.c.l.b16 %v1180
  %v1229 = vunpack.c.l.b16 %v1181
  %v1230 = vunpack.c.l.b16 %v1182
  %v1231 = vpack.c.b16 %v1208, %v1207
  %v1232 = vpack.c.b16 %v1210, %v1209
  %v1233 = vpack.c.b16 %v1212, %v1211
  %v1234 = vpack.c.b16 %v1214, %v1213
  %v1235 = vpack.c.b16 %v1216, %v1215
  %v1236 = vpack.c.b16 %v1218, %v1217
  %v1237 = vpack.c.b16 %v1220, %v1219
  %v1238 = vpack.c.b16 %v1222, %v1221
  %v1239 = vpack.c.b16 %v1224, %v1223
  %v1240 = vpack.c.b16 %v1226, %v1225
  %v1241 = vpack.c.b16 %v1228, %v1227
  %v1242 = vpack.c.b16 %v1230, %v1229
  %1255 = vmatprep.subr.bf16.mxu0 0
  %1256 = vmatpush1.bf16.msra.mxu0 %v1231
  %1257 = vmatprep.subr.bf16.mxu0 0
  %1258 = vmatpush1.bf16.msra.mxu0 %v1232
  %1259 = vmatprep.subr.bf16.mxu0 0
  %1260 = vmatpush1.bf16.msra.mxu0 %v1233
  %1261 = vmatprep.subr.bf16.mxu0 0
  %1262 = vmatpush1.bf16.msra.mxu0 %v1234
  %1263 = vmatprep.subr.bf16.mxu0 0
  %1264 = vmatpush1.bf16.msra.mxu0 %v1235
  %1265 = vmatprep.subr.bf16.mxu0 0
  %1266 = vmatpush1.bf16.msra.mxu0 %v1236
  %1267 = vmatprep.subr.bf16.mxu0 0
  %1268 = vmatpush1.bf16.msra.mxu0 %v1237
  %1269 = vmatprep.subr.bf16.mxu0 0
  %1270 = vmatpush1.bf16.msra.mxu0 %v1238
  %1271 = vmatprep.subr.bf16.mxu0 0
  %1272 = vmatpush1.bf16.msra.mxu0 %v1239
  %1273 = vmatprep.subr.bf16.mxu0 0
  %1274 = vmatpush1.bf16.msra.mxu0 %v1240
  %1275 = vmatprep.subr.bf16.mxu0 0
  %1276 = vmatpush1.bf16.msra.mxu0 %v1241
  %1277 = vmatprep.subr.bf16.mxu0 0
  %1278 = vmatpush1.bf16.msra.mxu0 %v1242
  %1279 = vmatprep.subr.bf16.mxu0 0
  %1280 = vmatpush1.bf16.msra.mxu0 0
  %1281 = vmatprep.subr.bf16.mxu0 0
  %1282 = vmatpush1.bf16.msra.mxu0 0
  %1283 = vmatprep.subr.bf16.mxu0 0
  %1284 = vmatpush1.bf16.msra.mxu0 0
  %1285 = vmatprep.subr.bf16.mxu0 0
  %1286 = vmatpush1.bf16.msra.mxu0 0
  %1287 = vmatprep.mubr.bf16.mxu0 %v1105
  %1288 = vmatmul.mubr.bf16.gmra.mrb[0].mxu0 %v1004
  %v1289 = vpop.f32.mrb[0].mxu0
  %v1290 = vadd.f32 0.0, %v1289
  %v1291 = vpop.f32.mrb[0].mxu0
  %v1292 = vpop.f32.mrb[0].mxu0
  %v1293 = vadd.f32 0.0, %v1292
  %v1294 = vpop.f32.mrb[0].mxu0
  %1295 = vmatprep.mubr.bf16.mxu0 %v1108
  %1296 = vmatmul.mubr.bf16.gmra.mrb[0].mxu0 %v1006
  %v1297 = vpop.f32.mrb[0].mxu0
  %v1298 = vadd.f32 0.0, %v1297
  %v1299 = vpop.f32.mrb[0].mxu0
  %v1300 = vpop.f32.mrb[0].mxu0
  %v1301 = vpop.f32.mrb[0].mxu0
  %1302 = vdwg.mxu0
  %v1303 = vmax.f32 %v1145, %v1290
  %v1304 = vmax.f32 %v1148, %v1293
  %v1305 = vmax.f32 %v1153, %v1298
  %v1306 = vpack.c.bf16 %v1304, %v1303
  %v1307 = vpack.c.bf16 %v1305, %v1305
  %v1310 = vunpack.c.l.b16 %v1306
  %v1311 = vunpack.c.h.b16 %v1306
  %v1312 = vunpack.c.l.b16 %v1307
  %v1313 = vpack.c.b16 %v1310, %v1310
  %v1314 = vpack.c.b16 %v1311, %v1311
  %v1315 = vpack.c.b16 %v1312, %v1312
  %vm1319 = vcmask 977920
  %1320 = vst.msk [vmem:[%s9] sm:$0xf] %vm1319, %v1313
  %1321 = vst.msk [vmem:[%s9 + $0x4] sm:$0xf] %vm1319, %v1314
  %vm1322 = vcmask 975872
  %1323 = vst.msk [vmem:[%s9 + $0x8] sm:$0x3] %vm1322, %v1315
  // Predicated region
  $region38: #{convnet_forward.5} parent=0 // pred_check
    _
  $region39: #{convnet_forward.5} parent=0 // pred_check_branch
    %1325 = sbr.rel (0) target = $region41
  $region40: #{convnet_forward.5} parent=0 // pred_region
    _
  $region41: #{convnet_forward.5} parent=0 // pred_fallthru
    _
  // Predicated region
  $region42: #{convnet_forward.5} parent=0 // pred_check
    _
  $region43: #{convnet_forward.5} parent=0 // pred_check_branch
    %1327 = sbr.rel (0) target = $region45
  $region44: #{convnet_forward.5} parent=0 // pred_region
    _
  $region45: #{convnet_forward.5} parent=0 // pred_fallthru
    _

// kernel: convnet_forward.6
$region0: #{convnet_forward.6}
  #allocation0 [shape = 'u32[]', space=smem, size = 0x4, offset = 0x4, fixed_abs, tag = 'smem constant byte address 0x4 - core index']
  #allocation1 [shape = 'u32[144,128]{1,0:T(1,128)}', space=vmem, size = 0x12000, scoped, tag = 'internal scratch']
  %s0 = inlined_call_operand.vmem [shape: bf16[20,120], index: 0, kind: input, shape index: {}]
  %s1 = inlined_call_operand.vmem [shape: bf16[3,120,96], index: 1, kind: input, shape index: {}]
  %s2 = inlined_call_operand.vmem [shape: f32[96,12], index: 2, kind: input, shape index: {}]
  %s3 = inlined_call_operand.vmem [shape: f32[12,96], index: 3, kind: input, shape index: {}]
  %s4 = inlined_call_operand.vmem [shape: bf16[2,8,18], index: 4, kind: input, shape index: {}]
  %s5 = inlined_call_operand.vmem [shape: bf16[2,96,48], index: 5, kind: input, shape index: {}]
  %s6 = inlined_call_operand.vmem [shape: f32[18,1], index: 6, kind: input, shape index: {}]
  %s7 = inlined_call_operand.vmem [shape: f32[1,96], index: 7, kind: input, shape index: {}]
  %s8 = inlined_call_operand.vmem [shape: f32[1,96], index: 8, kind: input, shape index: {}]
  %s9 = inlined_call_operand.vmem [shape: bf16[8,48], index: 9, kind: output, shape index: {}]
  %s10 = sld [smem:[#allocation0]]
  $region46: #{convnet_forward.6} parent=0
    _
  %s12 = ssub.s32 1, %s10
  %s13 = scalar_select 0, %s12, %s10
  // Predicated region
  $region2: #{convnet_forward.6} parent=0 // pred_check
    _
  $region3: #{convnet_forward.6} parent=0 // pred_check_branch
    %15 = sbr.rel (0) target = $region5
  $region4: #{convnet_forward.6} parent=0 // pred_region
    _
  $region5: #{convnet_forward.6} parent=0 // pred_fallthru
    _
  // Predicated region
  $region6: #{convnet_forward.6} parent=0 // pred_check
    _
  $region7: #{convnet_forward.6} parent=0 // pred_check_branch
    %17 = sbr.rel (0) target = $region9
  $region8: #{convnet_forward.6} parent=0 // pred_region
    _
  $region9: #{convnet_forward.6} parent=0 // pred_fallthru
    _
  // Predicated region
  $region10: #{convnet_forward.6} parent=0 // pred_check
    _
  $region11: #{convnet_forward.6} parent=0 // pred_check_branch
    %19 = sbr.rel (0) target = $region13
  $region12: #{convnet_forward.6} parent=0 // pred_region
    _
  $region13: #{convnet_forward.6} parent=0 // pred_fallthru
    _
  // Predicated region
  $region14: #{convnet_forward.6} parent=0 // pred_check
    _
  $region15: #{convnet_forward.6} parent=0 // pred_check_branch
    %21 = sbr.rel (0) target = $region17
  $region16: #{convnet_forward.6} parent=0 // pred_region
    _
  $region17: #{convnet_forward.6} parent=0 // pred_fallthru
    _
  // Predicated region
  $region18: #{convnet_forward.6} parent=0 // pred_check
    _
  $region19: #{convnet_forward.6} parent=0 // pred_check_branch
    %23 = sbr.rel (0) target = $region21
  $region20: #{convnet_forward.6} parent=0 // pred_region
    _
  $region21: #{convnet_forward.6} parent=0 // pred_fallthru
    _
  // Predicated region
  $region22: #{convnet_forward.6} parent=0 // pred_check
    _
  $region23: #{convnet_forward.6} parent=0 // pred_check_branch
    %25 = sbr.rel (0) target = $region25
  $region24: #{convnet_forward.6} parent=0 // pred_region
    _
  $region25: #{convnet_forward.6} parent=0 // pred_fallthru
    _
  // Predicated region
  $region26: #{convnet_forward.6} parent=0 // pred_check
    _
  $region27: #{convnet_forward.6} parent=0 // pred_check_branch
    %27 = sbr.rel (0) target = $region29
  $region28: #{convnet_forward.6} parent=0 // pred_region
    _
  $region29: #{convnet_forward.6} parent=0 // pred_fallthru
    _
  // Predicated region
  $region30: #{convnet_forward.6} parent=0 // pred_check
    _
  $region31: #{convnet_forward.6} parent=0 // pred_check_branch
    %29 = sbr.rel (0) target = $region33
  $region32: #{convnet_forward.6} parent=0 // pred_region
    _
  $region33: #{convnet_forward.6} parent=0 // pred_fallthru
    _
  // Predicated region
  $region34: #{convnet_forward.6} parent=0 // pred_check
    _
  $region35: #{convnet_forward.6} parent=0 // pred_check_branch
    %31 = sbr.rel (0) target = $region37
  $region36: #{convnet_forward.6} parent=0 // pred_region
    _
  $region37: #{convnet_forward.6} parent=0 // pred_fallthru
    _
  %v33 = vld [vmem:[%s0] sm:$0xf]
  %v34 = vld [vmem:[%s0 + $0x4] sm:$0xf]
  %v35 = vld [vmem:[%s0 + $0x8] sm:$0x3]
  %v36 = vld [vmem:[%s1] sm:$0xf]
  %v37 = vld [vmem:[%s1 + $0x4] sm:$0xf]
  %v38 = vld [vmem:[%s1 + $0x8] sm:$0xf]
  %v39 = vld [vmem:[%s1 + $0xc] sm:$0xf]
  %v40 = vld [vmem:[%s1 + $0x10] sm:$0xf]
  %v41 = vld [vmem:[%s1 + $0x14] sm:$0xf]
  %v42 = vld [vmem:[%s1 + $0x18] sm:$0xf]
  %v43 = vld [vmem:[%s1 + $0x1c] sm:$0xf]
  %v44 = vld [vmem:[%s1 + $0x20] sm:$0xf]
  %v45 = vld [vmem:[%s1 + $0x24] sm:$0xf]
  %v46 = vld [vmem:[%s1 + $0x28] sm:$0xf]
  %v47 = vld [vmem:[%s1 + $0x2c] sm:$0xf]
  %v48 = vld [vmem:[%s1 + $0x30] sm:$0xf]
  %v49 = vld [vmem:[%s1 + $0x34] sm:$0xf]
  %v50 = vld [vmem:[%s1 + $0x38] sm:$0xf]
  %s51 = scalar_lea.vmem %s1, 60
  %v52 = vld [vmem:[%s51] sm:$0xf]
  %v53 = vld [vmem:[%s51 + $0x4] sm:$0xf]
  %v54 = vld [vmem:[%s51 + $0x8] sm:$0xf]
  %v55 = vld [vmem:[%s51 + $0xc] sm:$0xf]
  %v56 = vld [vmem:[%s51 + $0x10] sm:$0xf]
  %v57 = vld [vmem:[%s51 + $0x14] sm:$0xf]
  %v58 = vld [vmem:[%s51 + $0x18] sm:$0xf]
  %v59 = vld [vmem:[%s51 + $0x1c] sm:$0xf]
  %v60 = vld [vmem:[%s51 + $0x20] sm:$0xf]
  %v61 = vld [vmem:[%s51 + $0x24] sm:$0xf]
  %v62 = vld [vmem:[%s51 + $0x28] sm:$0xf]
  %v63 = vld [vmem:[%s51 + $0x2c] sm:$0xf]
  %v64 = vld [vmem:[%s51 + $0x30] sm:$0xf]
  %v65 = vld [vmem:[%s51 + $0x34] sm:$0xf]
  %v66 = vld [vmem:[%s51 + $0x38] sm:$0xf]
  %v70 = vunpack.c.l.b16 %v33
  %v71 = vunpack.c.l.b16 %v34
  %v72 = vunpack.c.l.b16 %v35
  %v73 = vpack.c.b16 %v71, %v70
  %v74 = vpack.c.b16 %v72, %v72
  %vm75 = vsmask.f32 7424
  %v77 = vshrl.u32 %v73, 16
  %v79 = vshll.u32 %v73, 16
  %v81 = vrot.slane %v79, 1
  %v82 = vor.u32 %v77, %v81
  %v84 = vshll.u32 %v74, 16
  %v86 = vrot.slane %v84, 1
  %v87 = vsel %vm75, %v82, %v86
  %v88 = vshrl.u32 %v74, 16
  %v90 = vor.u32 %v88, %v86
  %v106 = vunpack.c.l.b16 %v52
  %v107 = vunpack.c.l.b16 %v53
  %v108 = vunpack.c.l.b16 %v54
  %v109 = vunpack.c.l.b16 %v55
  %v110 = vunpack.c.l.b16 %v56
  %v111 = vunpack.c.l.b16 %v57
  %v112 = vunpack.c.l.b16 %v58
  %v113 = vunpack.c.l.b16 %v59
  %v114 = vunpack.c.l.b16 %v60
  %v115 = vunpack.c.l.b16 %v61
  %v116 = vunpack.c.l.b16 %v62
  %v117 = vunpack.c.l.b16 %v63
  %v118 = vunpack.c.l.b16 %v64
  %v119 = vunpack.c.l.b16 %v65
  %v120 = vunpack.c.l.b16 %v66
  %v121 = vpack.c.b16 %v107, %v106
  %v122 = vpack.c.b16 %v109, %v108
  %v123 = vpack.c.b16 %v111, %v110
  %v124 = vpack.c.b16 %v113, %v112
  %v125 = vpack.c.b16 %v115, %v114
  %v126 = vpack.c.b16 %v117, %v116
  %v127 = vpack.c.b16 %v119, %v118
  %v128 = vpack.c.b16 %v120, %v120
  %vm136 = vcmask 982016
  %v138 = vsel %vm136, %v87, 0
  %v141 = vsel %vm136, %v90, 0
  %vm143 = vcmask 1043456
  %v145 = vsel %vm143, %v128, 0
  %147 = vmatprep.subr.bf16.mxu0 0
  %148 = vmatpush1.bf16.msra.mxu0 %v121
  %149 = vmatprep.subr.bf16.mxu0 0
  %150 = vmatpush1.bf16.msra.mxu0 %v122
  %151 = vmatprep.subr.bf16.mxu0 0
  %152 = vmatpush1.bf16.msra.mxu0 %v123
  %153 = vmatprep.subr.bf16.mxu0 0
  %154 = vmatpush1.bf16.msra.mxu0 %v124
  %155 = vmatprep.subr.bf16.mxu0 0
  %156 = vmatpush1.bf16.msra.mxu0 %v125
  %157 = vmatprep.subr.bf16.mxu0 0
  %158 = vmatpush1.bf16.msra.mxu0 %v126
  %159 = vmatprep.subr.bf16.mxu0 0
  %160 = vmatpush1.bf16.msra.mxu0 %v127
  %161 = vmatprep.subr.bf16.mxu0 0
  %162 = vmatpush1.bf16.msra.mxu0 %v145
  %163 = vmatprep.subr.bf16.mxu0 0
  %164 = vmatpush1.bf16.msra.mxu0 0
  %165 = vmatprep.subr.bf16.mxu0 0
  %166 = vmatpush1.bf16.msra.mxu0 0
  %167 = vmatprep.subr.bf16.mxu0 0
  %168 = vmatpush1.bf16.msra.mxu0 0
  %169 = vmatprep.subr.bf16.mxu0 0
  %170 = vmatpush1.bf16.msra.mxu0 0
  %171 = vmatprep.subr.bf16.mxu0 0
  %172 = vmatpush1.bf16.msra.mxu0 0
  %173 = vmatprep.subr.bf16.mxu0 0
  %174 = vmatpush1.bf16.msra.mxu0 0
  %175 = vmatprep.subr.bf16.mxu0 0
  %176 = vmatpush1.bf16.msra.mxu0 0
  %177 = vmatprep.subr.bf16.mxu0 0
  %178 = vmatpush1.bf16.msra.mxu0 0
  %179 = vmatprep.mubr.bf16.mxu0 0
  %180 = vmatmul.mubr.bf16.gmra.mrb[0].mxu0 %v138
  %v181 = vpop.f32.mrb[0].mxu0
  %v182 = vadd.f32 0.0, %v181
  %v183 = vpop.f32.mrb[0].mxu0
  %v184 = vpop.f32.mrb[0].mxu0
  %v185 = vadd.f32 0.0, %v184
  %v186 = vpop.f32.mrb[0].mxu0
  %187 = vmatprep.mubr.bf16.mxu0 0
  %188 = vmatmul.mubr.bf16.gmra.mrb[0].mxu0 %v141
  %v189 = vpop.f32.mrb[0].mxu0
  %v190 = vadd.f32 0.0, %v189
  %v191 = vpop.f32.mrb[0].mxu0
  %v192 = vpop.f32.mrb[0].mxu0
  %v193 = vpop.f32.mrb[0].mxu0
  %194 = vdwg.mxu0
  %v210 = vunpack.c.l.b16 %v36
  %v211 = vunpack.c.l.b16 %v37
  %v212 = vunpack.c.l.b16 %v38
  %v213 = vunpack.c.l.b16 %v39
  %v214 = vunpack.c.l.b16 %v40
  %v215 = vunpack.c.l.b16 %v41
  %v216 = vunpack.c.l.b16 %v42
  %v217 = vunpack.c.l.b16 %v43
  %v218 = vunpack.c.l.b16 %v44
  %v219 = vunpack.c.l.b16 %v45
  %v220 = vunpack.c.l.b16 %v46
  %v221 = vunpack.c.l.b16 %v47
  %v222 = vunpack.c.l.b16 %v48
  %v223 = vunpack.c.l.b16 %v49
  %v224 = vunpack.c.l.b16 %v50
  %v225 = vpack.c.b16 %v211, %v210
  %v226 = vpack.c.b16 %v213, %v212
  %v227 = vpack.c.b16 %v215, %v214
  %v228 = vpack.c.b16 %v217, %v216
  %v229 = vpack.c.b16 %v219, %v218
  %v230 = vpack.c.b16 %v221, %v220
  %v231 = vpack.c.b16 %v223, %v222
  %v232 = vpack.c.b16 %v224, %v224
  %v240 = vsel %vm136, %v73, 0
  %v242 = vsel %vm136, %v74, 0
  %v245 = vsel %vm143, %v232, 0
  %247 = vmatprep.subr.bf16.mxu0 0
  %248 = vmatpush1.bf16.msra.mxu0 %v225
  %249 = vmatprep.subr.bf16.mxu0 0
  %250 = vmatpush1.bf16.msra.mxu0 %v226
  %251 = vmatprep.subr.bf16.mxu0 0
  %252 = vmatpush1.bf16.msra.mxu0 %v227
  %253 = vmatprep.subr.bf16.mxu0 0
  %254 = vmatpush1.bf16.msra.mxu0 %v228
  %255 = vmatprep.subr.bf16.mxu0 0
  %256 = vmatpush1.bf16.msra.mxu0 %v229
  %257 = vmatprep.subr.bf16.mxu0 0
  %258 = vmatpush1.bf16.msra.mxu0 %v230
  %259 = vmatprep.subr.bf16.mxu0 0
  %260 = vmatpush1.bf16.msra.mxu0 %v231
  %261 = vmatprep.subr.bf16.mxu0 0
  %262 = vmatpush1.bf16.msra.mxu0 %v245
  %263 = vmatprep.subr.bf16.mxu0 0
  %264 = vmatpush1.bf16.msra.mxu0 0
  %265 = vmatprep.subr.bf16.mxu0 0
  %266 = vmatpush1.bf16.msra.mxu0 0
  %267 = vmatprep.subr.bf16.mxu0 0
  %268 = vmatpush1.bf16.msra.mxu0 0
  %269 = vmatprep.subr.bf16.mxu0 0
  %270 = vmatpush1.bf16.msra.mxu0 0
  %271 = vmatprep.subr.bf16.mxu0 0
  %272 = vmatpush1.bf16.msra.mxu0 0
  %273 = vmatprep.subr.bf16.mxu0 0
  %274 = vmatpush1.bf16.msra.mxu0 0
  %275 = vmatprep.subr.bf16.mxu0 0
  %276 = vmatpush1.bf16.msra.mxu0 0
  %277 = vmatprep.subr.bf16.mxu0 0
  %278 = vmatpush1.bf16.msra.mxu0 0
  %279 = vmatprep.mubr.bf16.mxu0 0
  %280 = vmatmul.mubr.bf16.gmra.mrb[0].mxu0 %v240
  %v281 = vpop.f32.mrb[0].mxu0
  %v282 = vadd.f32 %v182, %v281
  %v283 = vpop.f32.mrb[0].mxu0
  %v284 = vpop.f32.mrb[0].mxu0
  %v285 = vadd.f32 %v185, %v284
  %v286 = vpop.f32.mrb[0].mxu0
  %287 = vmatprep.mubr.bf16.mxu0 0
  %288 = vmatmul.mubr.bf16.gmra.mrb[0].mxu0 %v242
  %v289 = vpop.f32.mrb[0].mxu0
  %v290 = vadd.f32 %v190, %v289
  %v291 = vpop.f32.mrb[0].mxu0
  %v292 = vpop.f32.mrb[0].mxu0
  %v293 = vpop.f32.mrb[0].mxu0
  %294 = vdwg.mxu0
  %s295 = scalar_lea.vmem %s1, 120
  %v296 = vld [vmem:[%s295] sm:$0xf]
  %v297 = vld [vmem:[%s295 + $0x4] sm:$0xf]
  %v298 = vld [vmem:[%s295 + $0x8] sm:$0xf]
  %v299 = vld [vmem:[%s295 + $0xc] sm:$0xf]
  %v300 = vld [vmem:[%s295 + $0x10] sm:$0xf]
  %v301 = vld [vmem:[%s295 + $0x14] sm:$0xf]
  %v302 = vld [vmem:[%s295 + $0x18] sm:$0xf]
  %v303 = vld [vmem:[%s295 + $0x1c] sm:$0xf]
  %v304 = vld [vmem:[%s295 + $0x20] sm:$0xf]
  %v305 = vld [vmem:[%s295 + $0x24] sm:$0xf]
  %v306 = vld [vmem:[%s295 + $0x28] sm:$0xf]
  %v307 = vld [vmem:[%s295 + $0x2c] sm:$0xf]
  %v308 = vld [vmem:[%s295 + $0x30] sm:$0xf]
  %v309 = vld [vmem:[%s295 + $0x34] sm:$0xf]
  %v310 = vld [vmem:[%s295 + $0x38] sm:$0xf]
  %vm311 = vcmask 1046528
  %v312 = vrot.slane %v73, 1
  %v313 = vrot.slane %v74, 1
  %v314 = vsel %vm311, %v312, %v313
  %v330 = vunpack.c.l.b16 %v296
  %v331 = vunpack.c.l.b16 %v297
  %v332 = vunpack.c.l.b16 %v298
  %v333 = vunpack.c.l.b16 %v299
  %v334 = vunpack.c.l.b16 %v300
  %v335 = vunpack.c.l.b16 %v301
  %v336 = vunpack.c.l.b16 %v302
  %v337 = vunpack.c.l.b16 %v303
  %v338 = vunpack.c.l.b16 %v304
  %v339 = vunpack.c.l.b16 %v305
  %v340 = vunpack.c.l.b16 %v306
  %v341 = vunpack.c.l.b16 %v307
  %v342 = vunpack.c.l.b16 %v308
  %v343 = vunpack.c.l.b16 %v309
  %v344 = vunpack.c.l.b16 %v310
  %v345 = vpack.c.b16 %v331, %v330
  %v346 = vpack.c.b16 %v333, %v332
  %v347 = vpack.c.b16 %v335, %v334
  %v348 = vpack.c.b16 %v337, %v336
  %v349 = vpack.c.b16 %v339, %v338
  %v350 = vpack.c.b16 %v341, %v340
  %v351 = vpack.c.b16 %v343, %v342
  %v352 = vpack.c.b16 %v344, %v344
  %v361 = vsel %vm136, %v314, 0
  %v364 = vsel %vm136, %v313, 0
  %v367 = vsel %vm143, %v352, 0
  %369 = vmatprep.subr.bf16.mxu0 0
  %370 = vmatpush1.bf16.msra.mxu0 %v345
  %371 = vmatprep.subr.bf16.mxu0 0
  %372 = vmatpush1.bf16.msra.mxu0 %v346
  %373 = vmatprep.subr.bf16.mxu0 0
  %374 = vmatpush1.bf16.msra.mxu0 %v347
  %375 = vmatprep.subr.bf16.mxu0 0
  %376 = vmatpush1.bf16.msra.mxu0 %v348
  %377 = vmatprep.subr.bf16.mxu0 0
  %378 = vmatpush1.bf16.msra.mxu0 %v349
  %379 = vmatprep.subr.bf16.mxu0 0
  %380 = vmatpush1.bf16.msra.mxu0 %v350
  %381 = vmatprep.subr.bf16.mxu0 0
  %382 = vmatpush1.bf16.msra.mxu0 %v351
  %383 = vmatprep.subr.bf16.mxu0 0
  %384 = vmatpush1.bf16.msra.mxu0 %v367
  %385 = vmatprep.subr.bf16.mxu0 0
  %386 = vmatpush1.bf16.msra.mxu0 0
  %387 = vmatprep.subr.bf16.mxu0 0
  %388 = vmatpush1.bf16.msra.mxu0 0
  %389 = vmatprep.subr.bf16.mxu0 0
  %390 = vmatpush1.bf16.msra.mxu0 0
  %391 = vmatprep.subr.bf16.mxu0 0
  %392 = vmatpush1.bf16.msra.mxu0 0
  %393 = vmatprep.subr.bf16.mxu0 0
  %394 = vmatpush1.bf16.msra.mxu0 0
  %395 = vmatprep.subr.bf16.mxu0 0
  %396 = vmatpush1.bf16.msra.mxu0 0
  %397 = vmatprep.subr.bf16.mxu0 0
  %398 = vmatpush1.bf16.msra.mxu0 0
  %399 = vmatprep.subr.bf16.mxu0 0
  %400 = vmatpush1.bf16.msra.mxu0 0
  %401 = vmatprep.mubr.bf16.mxu0 0
  %402 = vmatmul.mubr.bf16.gmra.mrb[0].mxu0 %v361
  %v403 = vpop.f32.mrb[0].mxu0
  %v404 = vadd.f32 0.0, %v403
  %v405 = vpop.f32.mrb[0].mxu0
  %v406 = vpop.f32.mrb[0].mxu0
  %v407 = vadd.f32 0.0, %v406
  %v408 = vpop.f32.mrb[0].mxu0
  %409 = vmatprep.mubr.bf16.mxu0 0
  %410 = vmatmul.mubr.bf16.gmra.mrb[0].mxu0 %v364
  %v411 = vpop.f32.mrb[0].mxu0
  %v412 = vadd.f32 0.0, %v411
  %v413 = vpop.f32.mrb[0].mxu0
  %v414 = vpop.f32.mrb[0].mxu0
  %v415 = vpop.f32.mrb[0].mxu0
  %416 = vdwg.mxu0
  %v417 = vadd.f32 %v282, %v404
  %v418 = vadd.f32 %v285, %v407
  %v419 = vadd.f32 %v290, %v412
  %v420 = vld [vmem:[%s6] sm:$0xff]
  %v421 = vld [vmem:[%s6 + $0x8] sm:$0xff]
  %v422 = vld [vmem:[%s6 + $0x10] sm:$0x3]
  %424 = vset.pattern.permute.xlu0 0
  %425 = vperm.xlu0 %424, %v420
  %v426 = vpop.permute.xlu0 %425
  %429 = vset.pattern.permute.xlu0 0
  %430 = vperm.xlu0 %429, %v421
  %v431 = vpop.permute.xlu0 %430
  %434 = vset.pattern.permute.xlu0 0
  %435 = vperm.xlu0 %434, %v422
  %v436 = vpop.permute.xlu0 %435
  %v438 = vmul.f32 %v417, %v426
  %v439 = vmul.f32 %v418, %v431
  %v440 = vmul.f32 %v419, %v436
  %vm441 = vcmask 785408
  %v442 = vsel %vm441, %v438, 0.0
  %v443 = vsel %vm441, %v439, 0.0
  %v444 = vadd.f32 %v442, %v443
  %vm445 = vcmask 779264
  %v446 = vsel %vm445, %v440, 0.0
  %v447 = vadd.f32 %v444, %v446
  %v448 = vrot.slane %v447, 4
  %v449 = vadd.f32 %v447, %v448
  %v450 = vrot.slane %v449, 2
  %v451 = vadd.f32 %v449, %v450
  %v452 = vrot.slane %v451, 1
  %v453 = vadd.f32 %v451, %v452
  %v454 = vmul.f32 %v438, %v417
  %v455 = vmul.f32 %v439, %v418
  %v456 = vmul.f32 %v440, %v419
  %v457 = vsel %vm441, %v454, 0.0
  %v458 = vsel %vm441, %v455, 0.0
  %v459 = vadd.f32 %v457, %v458
  %v460 = vsel %vm445, %v456, 0.0
  %v461 = vadd.f32 %v459, %v460
  %v462 = vrot.slane %v461, 4
  %v463 = vadd.f32 %v461, %v462
  %v464 = vrot.slane %v463, 2
  %v465 = vadd.f32 %v463, %v464
  %v466 = vrot.slane %v465, 1
  %v467 = vadd.f32 %v465, %v466
  %vm468 = vcmask 1040384
  %v469 = vsel %vm468, %v453, %v467
  %v470 = vld [vmem:[%s2] sm:$0xff]
  %v471 = vld [vmem:[%s2 + $0x8] sm:$0xff]
  %v472 = vld [vmem:[%s2 + $0x10] sm:$0xff]
  %v473 = vld [vmem:[%s2 + $0x18] sm:$0xff]
  %v474 = vld [vmem:[%s2 + $0x20] sm:$0xff]
  %v475 = vld [vmem:[%s2 + $0x28] sm:$0xff]
  %v476 = vld [vmem:[%s2 + $0x30] sm:$0xff]
  %v477 = vld [vmem:[%s2 + $0x38] sm:$0xff]
  %v478 = vld [vmem:[%s2 + $0x40] sm:$0xff]
  %v479 = vld [vmem:[%s2 + $0x48] sm:$0xff]
  %v480 = vld [vmem:[%s2 + $0x50] sm:$0xff]
  %v481 = vld [vmem:[%s2 + $0x58] sm:$0xff]
  %v483 = vsel %vm441, %v469, 0
  %485 = vmatprep.subr.mxu0 0.0
  %486 = vmatpush1.msra.mxu0 %v470
  %487 = vmatprep.subr.mxu0 0.0
  %488 = vmatpush1.msra.mxu0 %v471
  %489 = vmatprep.subr.mxu0 0.0
  %490 = vmatpush1.msra.mxu0 %v472
  %491 = vmatprep.subr.mxu0 0.0
  %492 = vmatpush1.msra.mxu0 %v473
  %493 = vmatprep.subr.mxu0 0.0
  %494 = vmatpush1.msra.mxu0 %v474
  %495 = vmatprep.subr.mxu0 0.0
  %496 = vmatpush1.msra.mxu0 %v475
  %497 = vmatprep.subr.mxu0 0.0
  %498 = vmatpush1.msra.mxu0 %v476
  %499 = vmatprep.subr.mxu0 0.0
  %500 = vmatpush1.msra.mxu0 %v477
  %501 = vmatprep.subr.mxu0 0.0
  %502 = vmatpush1.msra.mxu0 %v478
  %503 = vmatprep.subr.mxu0 0.0
  %504 = vmatpush1.msra.mxu0 %v479
  %505 = vmatprep.subr.mxu0 0.0
  %506 = vmatpush1.msra.mxu0 %v480
  %507 = vmatprep.subr.mxu0 0.0
  %508 = vmatpush1.msra.mxu0 %v481
  %509 = vmatprep.subr.mxu0 0.0
  %510 = vmatpush1.msra.mxu0 0.0
  %511 = vmatprep.subr.mxu0 0.0
  %512 = vmatpush1.msra.mxu0 0.0
  %513 = vmatprep.subr.mxu0 0.0
  %514 = vmatpush1.msra.mxu0 0.0
  %515 = vmatprep.subr.mxu0 0.0
  %516 = vmatpush1.msra.mxu0 0.0
  %517 = vmatprep.subr.mxu0 0.0
  %518 = vmatpush1.msra.mxu0 0.0
  %519 = vmatprep.subr.mxu0 0.0
  %520 = vmatpush1.msra.mxu0 0.0
  %521 = vmatprep.subr.mxu0 0.0
  %522 = vmatpush1.msra.mxu0 0.0
  %523 = vmatprep.subr.mxu0 0.0
  %524 = vmatpush1.msra.mxu0 0.0
  %525 = vmatprep.subr.mxu0 0.0
  %526 = vmatpush1.msra.mxu0 0.0
  %527 = vmatprep.subr.mxu0 0.0
  %528 = vmatpush1.msra.mxu0 0.0
  %529 = vmatprep.subr.mxu0 0.0
  %530 = vmatpush1.msra.mxu0 0.0
  %531 = vmatprep.subr.mxu0 0.0
  %532 = vmatpush1.msra.mxu0 0.0
  %533 = vmatprep.subr.mxu0 0.0
  %534 = vmatpush1.msra.mxu0 0.0
  %535 = vmatprep.subr.mxu0 0.0
  %536 = vmatpush1.msra.mxu0 0.0
  %537 = vmatprep.subr.mxu0 0.0
  %538 = vmatpush1.msra.mxu0 0.0
  %539 = vmatprep.subr.mxu0 0.0
  %540 = vmatpush1.msra.mxu0 0.0
  %541 = vmatprep.subr.mxu0 0.0
  %542 = vmatpush1.msra.mxu0 0.0
  %543 = vmatprep.subr.mxu0 0.0
  %544 = vmatpush1.msra.mxu0 0.0
  %545 = vmatprep.subr.mxu0 0.0
  %546 = vmatpush1.msra.mxu0 0.0
  %547 = vmatprep.subr.mxu0 0.0
  %548 = vmatpush1.msra.mxu0 0.0
  %549 = vmatprep.mubr.f32.mxu0 0.0
  %550 = vmatmul.mubr.f32.gmra.mrb[0].mxu0 %v483
  %v551 = vpop.f32.mrb[0].mxu0
  %v552 = vadd.f32 0.0, %v551
  %v553 = vpop.f32.mrb[0].mxu0
  %554 = vdwg.mxu0
  %v555 = vld [vmem:[%s3] sm:$0xff]
  %v556 = vld [vmem:[%s3 + $0x8] sm:$0xf]
  %vm557 = vcmask 97280
  %v559 = vsel %vm557, %v552, 0
  %v562 = vsel %vm143, %v556, 0
  %564 = vmatprep.subr.mxu0 0.0
  %565 = vmatpush1.msra.mxu0 %v555
  %566 = vmatprep.subr.mxu0 0.0
  %567 = vmatpush1.msra.mxu0 %v562
  %568 = vmatprep.subr.mxu0 0.0
  %569 = vmatpush1.msra.mxu0 0.0
  %570 = vmatprep.subr.mxu0 0.0
  %571 = vmatpush1.msra.mxu0 0.0
  %572 = vmatprep.subr.mxu0 0.0
  %573 = vmatpush1.msra.mxu0 0.0
  %574 = vmatprep.subr.mxu0 0.0
  %575 = vmatpush1.msra.mxu0 0.0
  %576 = vmatprep.subr.mxu0 0.0
  %577 = vmatpush1.msra.mxu0 0.0
  %578 = vmatprep.subr.mxu0 0.0
  %579 = vmatpush1.msra.mxu0 0.0
  %580 = vmatprep.subr.mxu0 0.0
  %581 = vmatpush1.msra.mxu0 0.0
  %582 = vmatprep.subr.mxu0 0.0
  %583 = vmatpush1.msra.mxu0 0.0
  %584 = vmatprep.subr.mxu0 0.0
  %585 = vmatpush1.msra.mxu0 0.0
  %586 = vmatprep.subr.mxu0 0.0
  %587 = vmatpush1.msra.mxu0 0.0
  %588 = vmatprep.subr.mxu0 0.0
  %589 = vmatpush1.msra.mxu0 0.0
  %590 = vmatprep.subr.mxu0 0.0
  %591 = vmatpush1.msra.mxu0 0.0
  %592 = vmatprep.subr.mxu0 0.0
  %593 = vmatpush1.msra.mxu0 0.0
  %594 = vmatprep.subr.mxu0 0.0
  %595 = vmatpush1.msra.mxu0 0.0
  %596 = vmatprep.subr.mxu0 0.0
  %597 = vmatpush1.msra.mxu0 0.0
  %598 = vmatprep.subr.mxu0 0.0
  %599 = vmatpush1.msra.mxu0 0.0
  %600 = vmatprep.subr.mxu0 0.0
  %601 = vmatpush1.msra.mxu0 0.0
  %602 = vmatprep.subr.mxu0 0.0
  %603 = vmatpush1.msra.mxu0 0.0
  %604 = vmatprep.subr.mxu0 0.0
  %605 = vmatpush1.msra.mxu0 0.0
  %606 = vmatprep.subr.mxu0 0.0
  %607 = vmatpush1.msra.mxu0 0.0
  %608 = vmatprep.subr.mxu0 0.0
  %609 = vmatpush1.msra.mxu0 0.0
  %610 = vmatprep.subr.mxu0 0.0
  %611 = vmatpush1.msra.mxu0 0.0
  %612 = vmatprep.subr.mxu0 0.0
  %613 = vmatpush1.msra.mxu0 0.0
  %614 = vmatprep.subr.mxu0 0.0
  %615 = vmatpush1.msra.mxu0 0.0
  %616 = vmatprep.subr.mxu0 0.0
  %617 = vmatpush1.msra.mxu0 0.0
  %618 = vmatprep.subr.mxu0 0.0
  %619 = vmatpush1.msra.mxu0 0.0
  %620 = vmatprep.subr.mxu0 0.0
  %621 = vmatpush1.msra.mxu0 0.0
  %622 = vmatprep.subr.mxu0 0.0
  %623 = vmatpush1.msra.mxu0 0.0
  %624 = vmatprep.subr.mxu0 0.0
  %625 = vmatpush1.msra.mxu0 0.0
  %626 = vmatprep.subr.mxu0 0.0
  %627 = vmatpush1.msra.mxu0 0.0
  %628 = vmatprep.mubr.f32.mxu0 0.0
  %629 = vmatmul.mubr.f32.gmra.mrb[0].mxu0 %v559
  %v630 = vpop.f32.mrb[0].mxu0
  %v631 = vadd.f32 0.0, %v630
  %v632 = vpop.f32.mrb[0].mxu0
  %633 = vdwg.mxu0
  %v634 = vmul.f32 %v631, 0.0078125
  %v635 = vmul.f32 %v634, %v634
  %v637 = vrot.slane %v635, 7
  %v639 = vsub.f32 %v634, %v637
  %v640 = vld [vmem:[%s7] sm:$0x1]
  %v641 = vadd.f32 %v639, 1e-05
  %v642 = vrsqrt.pop %v641
  %v645 = vunpack.c.l.s4 1966171168
  %v646 = vunpack.c.0.s8 %v645
  %v647 = vlaneseq
  %v648 = vshrl.u32 %v647, 7
  %v649 = vsub.s32 %v646, %v648
  %v650 = vrot.slane %v642, %v649
  %v651 = vcombine.high %v650, %v650
  %v653 = vunpack.c.l.s4 1966171168
  %v654 = vunpack.c.0.s8 %v653
  %v655 = vlaneseq
  %v656 = vshrl.u32 %v655, 7
  %v657 = vsub.s32 %v654, %v656
  %v658 = vrot.slane %v651, %v657
  %v660 = vmul.f32 %v640, %v658
  %v661 = vld [vmem:[%s8] sm:$0x1]
  %v662 = vmul.f32 %v634, %v660
  %v663 = vsub.f32 %v661, %v662
  %v665 = vlaneseq
  %v666 = vshrl.u32 %v665, 7
  %v667 = vsub.s32 0, %v666
  %v668 = vrot.slane %v660, %v667
  %v670 = vmul.f32 %v417, %v668
  %v671 = vmul.f32 %v418, %v668
  %v672 = vmul.f32 %v419, %v668
  %v674 = vlaneseq
  %v675 = vshrl.u32 %v674, 7
  %v676 = vsub.s32 0, %v675
  %v677 = vrot.slane %v663, %v676
  %v679 = vadd.f32 %v670, %v677
  %v680 = vadd.f32 %v671, %v677
  %v681 = vadd.f32 %v672, %v677
  %v682 = vmax.f32 %v679, 0.0
  %v683 = vmax.f32 %v680, 0.0
  %v684 = vmax.f32 %v681, 0.0
  %v685 = vpack.c.bf16 %v683, %v682
  %v686 = vpack.c.bf16 %v684, %v684
  %v687 = vld [vmem:[%s4] sm:$0xf]
  %vm688 = vcmask 146432
  %v690 = vsel %vm688, %v687, 0
  %v693 = vsel %vm468, %v686, 0
  %695 = vmatprep.subr.bf16.mxu0 0
  %696 = vmatpush1.bf16.msra.mxu0 %v685
  %697 = vmatprep.subr.bf16.mxu0 0
  %698 = vmatpush1.bf16.msra.mxu0 %v693
  %699 = vmatprep.subr.bf16.mxu0 0
  %700 = vmatpush1.bf16.msra.mxu0 0
  %701 = vmatprep.subr.bf16.mxu0 0
  %702 = vmatpush1.bf16.msra.mxu0 0
  %703 = vmatprep.subr.bf16.mxu0 0
  %704 = vmatpush1.bf16.msra.mxu0 0
  %705 = vmatprep.subr.bf16.mxu0 0
  %706 = vmatpush1.bf16.msra.mxu0 0
  %707 = vmatprep.subr.bf16.mxu0 0
  %708 = vmatpush1.bf16.msra.mxu0 0
  %709 = vmatprep.subr.bf16.mxu0 0
  %710 = vmatpush1.bf16.msra.mxu0 0
  %711 = vmatprep.subr.bf16.mxu0 0
  %712 = vmatpush1.bf16.msra.mxu0 0
  %713 = vmatprep.subr.bf16.mxu0 0
  %714 = vmatpush1.bf16.msra.mxu0 0
  %715 = vmatprep.subr.bf16.mxu0 0
  %716 = vmatpush1.bf16.msra.mxu0 0
  %717 = vmatprep.subr.bf16.mxu0 0
  %718 = vmatpush1.bf16.msra.mxu0 0
  %719 = vmatprep.subr.bf16.mxu0 0
  %720 = vmatpush1.bf16.msra.mxu0 0
  %721 = vmatprep.subr.bf16.mxu0 0
  %722 = vmatpush1.bf16.msra.mxu0 0
  %723 = vmatprep.subr.bf16.mxu0 0
  %724 = vmatpush1.bf16.msra.mxu0 0
  %725 = vmatprep.subr.bf16.mxu0 0
  %726 = vmatpush1.bf16.msra.mxu0 0
  %727 = vmatprep.mubr.bf16.mxu0 0
  %728 = vmatmul.mubr.bf16.gmra.mrb[0].mxu0 %v690
  %v729 = vpop.f32.mrb[0].mxu0
  %v730 = vadd.f32 0.0, %v729
  %v731 = vpop.f32.mrb[0].mxu0
  %v732 = vpop.f32.mrb[0].mxu0
  %v733 = vpop.f32.mrb[0].mxu0
  %734 = vdwg.mxu0
  %s735 = scalar_lea.vmem %s4, 4
  %v736 = vld [vmem:[%s735] sm:$0xf]
  %v738 = vsel %vm688, %v736, 0
  %740 = vmatprep.subr.bf16.mxu0 0
  %741 = vmatpush1.bf16.msra.mxu0 %v685
  %742 = vmatprep.subr.bf16.mxu0 0
  %743 = vmatpush1.bf16.msra.mxu0 %v693
  %744 = vmatprep.subr.bf16.mxu0 0
  %745 = vmatpush1.bf16.msra.mxu0 0
  %746 = vmatprep.subr.bf16.mxu0 0
  %747 = vmatpush1.bf16.msra.mxu0 0
  %748 = vmatprep.subr.bf16.mxu0 0
  %749 = vmatpush1.bf16.msra.mxu0 0
  %750 = vmatprep.subr.bf16.mxu0 0
  %751 = vmatpush1.bf16.msra.mxu0 0
  %752 = vmatprep.subr.bf16.mxu0 0
  %753 = vmatpush1.bf16.msra.mxu0 0
  %754 = vmatprep.subr.bf16.mxu0 0
  %755 = vmatpush1.bf16.msra.mxu0 0
  %756 = vmatprep.subr.bf16.mxu0 0
  %757 = vmatpush1.bf16.msra.mxu0 0
  %758 = vmatprep.subr.bf16.mxu0 0
  %759 = vmatpush1.bf16.msra.mxu0 0
  %760 = vmatprep.subr.bf16.mxu0 0
  %761 = vmatpush1.bf16.msra.mxu0 0
  %762 = vmatprep.subr.bf16.mxu0 0
  %763 = vmatpush1.bf16.msra.mxu0 0
  %764 = vmatprep.subr.bf16.mxu0 0
  %765 = vmatpush1.bf16.msra.mxu0 0
  %766 = vmatprep.subr.bf16.mxu0 0
  %767 = vmatpush1.bf16.msra.mxu0 0
  %768 = vmatprep.subr.bf16.mxu0 0
  %769 = vmatpush1.bf16.msra.mxu0 0
  %770 = vmatprep.subr.bf16.mxu0 0
  %771 = vmatpush1.bf16.msra.mxu0 0
  %772 = vmatprep.mubr.bf16.mxu0 0
  %773 = vmatmul.mubr.bf16.gmra.mrb[0].mxu0 %v738
  %v774 = vpop.f32.mrb[0].mxu0
  %v775 = vadd.f32 0.0, %v774
  %v776 = vpop.f32.mrb[0].mxu0
  %v777 = vpop.f32.mrb[0].mxu0
  %v778 = vpop.f32.mrb[0].mxu0
  %779 = vdwg.mxu0
  %v780 = vmax.f32 %v730, %v775
  %v781 = vpack.c.bf16 %v780, %v780
  %v782 = vld [vmem:[%s5] sm:$0xf]
  %v783 = vld [vmem:[%s5 + $0x4] sm:$0xf]
  %v784 = vld [vmem:[%s5 + $0x8] sm:$0xf]
  %v785 = vld [vmem:[%s5 + $0xc] sm:$0xf]
  %v786 = vld [vmem:[%s5 + $0x10] sm:$0xf]
  %v787 = vld [vmem:[%s5 + $0x14] sm:$0xf]
  %v788 = vld [vmem:[%s5 + $0x18] sm:$0xf]
  %v789 = vld [vmem:[%s5 + $0x1c] sm:$0xf]
  %v790 = vld [vmem:[%s5 + $0x20] sm:$0xf]
  %v791 = vld [vmem:[%s5 + $0x24] sm:$0xf]
  %v792 = vld [vmem:[%s5 + $0x28] sm:$0xf]
  %v793 = vld [vmem:[%s5 + $0x2c] sm:$0xf]
  %v806 = vunpack.c.l.b16 %v782
  %v807 = vunpack.c.l.b16 %v783
  %v808 = vunpack.c.l.b16 %v784
  %v809 = vunpack.c.l.b16 %v785
  %v810 = vunpack.c.l.b16 %v786
  %v811 = vunpack.c.l.b16 %v787
  %v812 = vunpack.c.l.b16 %v788
  %v813 = vunpack.c.l.b16 %v789
  %v814 = vunpack.c.l.b16 %v790
  %v815 = vunpack.c.l.b16 %v791
  %v816 = vunpack.c.l.b16 %v792
  %v817 = vunpack.c.l.b16 %v793
  %v818 = vpack.c.b16 %v807, %v806
  %v819 = vpack.c.b16 %v809, %v808
  %v820 = vpack.c.b16 %v811, %v810
  %v821 = vpack.c.b16 %v813, %v812
  %v822 = vpack.c.b16 %v815, %v814
  %v823 = vpack.c.b16 %v817, %v816
  %v831 = vsel %vm441, %v781, 0
  %833 = vmatprep.subr.bf16.mxu0 0
  %834 = vmatpush1.bf16.msra.mxu0 %v818
  %835 = vmatprep.subr.bf16.mxu0 0
  %836 = vmatpush1.bf16.msra.mxu0 %v819
  %837 = vmatprep.subr.bf16.mxu0 0
  %838 = vmatpush1.bf16.msra.mxu0 %v820
  %839 = vmatprep.subr.bf16.mxu0 0
  %840 = vmatpush1.bf16.msra.mxu0 %v821
  %841 = vmatprep.subr.bf16.mxu0 0
  %842 = vmatpush1.bf16.msra.mxu0 %v822
  %843 = vmatprep.subr.bf16.mxu0 0
  %844 = vmatpush1.bf16.msra.mxu0 %v823
  %845 = vmatprep.subr.bf16.mxu0 0
  %846 = vmatpush1.bf16.msra.mxu0 0
  %847 = vmatprep.subr.bf16.mxu0 0
  %848 = vmatpush1.bf16.msra.mxu0 0
  %849 = vmatprep.subr.bf16.mxu0 0
  %850 = vmatpush1.bf16.msra.mxu0 0
  %851 = vmatprep.subr.bf16.mxu0 0
  %852 = vmatpush1.bf16.msra.mxu0 0
  %853 = vmatprep.subr.bf16.mxu0 0
  %854 = vmatpush1.bf16.msra.mxu0 0
  %855 = vmatprep.subr.bf16.mxu0 0
  %856 = vmatpush1.bf16.msra.mxu0 0
  %857 = vmatprep.subr.bf16.mxu0 0
  %858 = vmatpush1.bf16.msra.mxu0 0
  %859 = vmatprep.subr.bf16.mxu0 0
  %860 = vmatpush1.bf16.msra.mxu0 0
  %861 = vmatprep.subr.bf16.mxu0 0
  %862 = vmatpush1.bf16.msra.mxu0 0
  %863 = vmatprep.subr.bf16.mxu0 0
  %864 = vmatpush1.bf16.msra.mxu0 0
  %865 = vmatprep.mubr.bf16.mxu0 0
  %866 = vmatmul.mubr.bf16.gmra.mrb[0].mxu0 %v831
  %v867 = vpop.f32.mrb[0].mxu0
  %v868 = vadd.f32 0.0, %v867
  %v869 = vpop.f32.mrb[0].mxu0
  %v870 = vpop.f32.mrb[0].mxu0
  %v871 = vpop.f32.mrb[0].mxu0
  %872 = vdwg.mxu0
  %s873 = scalar_lea.vmem %s5, 48
  %v874 = vld [vmem:[%s873] sm:$0xf]
  %v875 = vld [vmem:[%s873 + $0x4] sm:$0xf]
  %v876 = vld [vmem:[%s873 + $0x8] sm:$0xf]
  %v877 = vld [vmem:[%s873 + $0xc] sm:$0xf]
  %v878 = vld [vmem:[%s873 + $0x10] sm:$0xf]
  %v879 = vld [vmem:[%s873 + $0x14] sm:$0xf]
  %v880 = vld [vmem:[%s873 + $0x18] sm:$0xf]
  %v881 = vld [vmem:[%s873 + $0x1c] sm:$0xf]
  %v882 = vld [vmem:[%s873 + $0x20] sm:$0xf]
  %v883 = vld [vmem:[%s873 + $0x24] sm:$0xf]
  %v884 = vld [vmem:[%s873 + $0x28] sm:$0xf]
  %v885 = vld [vmem:[%s873 + $0x2c] sm:$0xf]
  %v898 = vunpack.c.l.b16 %v874
  %v899 = vunpack.c.l.b16 %v875
  %v900 = vunpack.c.l.b16 %v876
  %v901 = vunpack.c.l.b16 %v877
  %v902 = vunpack.c.l.b16 %v878
  %v903 = vunpack.c.l.b16 %v879
  %v904 = vunpack.c.l.b16 %v880
  %v905 = vunpack.c.l.b16 %v881
  %v906 = vunpack.c.l.b16 %v882
  %v907 = vunpack.c.l.b16 %v883
  %v908 = vunpack.c.l.b16 %v884
  %v909 = vunpack.c.l.b16 %v885
  %v910 = vpack.c.b16 %v899, %v898
  %v911 = vpack.c.b16 %v901, %v900
  %v912 = vpack.c.b16 %v903, %v902
  %v913 = vpack.c.b16 %v905, %v904
  %v914 = vpack.c.b16 %v907, %v906
  %v915 = vpack.c.b16 %v909, %v908
  %922 = vmatprep.subr.bf16.mxu0 0
  %923 = vmatpush1.bf16.msra.mxu0 %v910
  %924 = vmatprep.subr.bf16.mxu0 0
  %925 = vmatpush1.bf16.msra.mxu0 %v911
  %926 = vmatprep.subr.bf16.mxu0 0
  %927 = vmatpush1.bf16.msra.mxu0 %v912
  %928 = vmatprep.subr.bf16.mxu0 0
  %929 = vmatpush1.bf16.msra.mxu0 %v913
  %930 = vmatprep.subr.bf16.mxu0 0
  %931 = vmatpush1.bf16.msra.mxu0 %v914
  %932 = vmatprep.subr.bf16.mxu0 0
  %933 = vmatpush1.bf16.msra.mxu0 %v915
  %934 = vmatprep.subr.bf16.mxu0 0
  %935 = vmatpush1.bf16.msra.mxu0 0
  %936 = vmatprep.subr.bf16.mxu0 0
  %937 = vmatpush1.bf16.msra.mxu0 0
  %938 = vmatprep.subr.bf16.mxu0 0
  %939 = vmatpush1.bf16.msra.mxu0 0
  %940 = vmatprep.subr.bf16.mxu0 0
  %941 = vmatpush1.bf16.msra.mxu0 0
  %942 = vmatprep.subr.bf16.mxu0 0
  %943 = vmatpush1.bf16.msra.mxu0 0
  %944 = vmatprep.subr.bf16.mxu0 0
  %945 = vmatpush1.bf16.msra.mxu0 0
  %946 = vmatprep.subr.bf16.mxu0 0
  %947 = vmatpush1.bf16.msra.mxu0 0
  %948 = vmatprep.subr.bf16.mxu0 0
  %949 = vmatpush1.bf16.msra.mxu0 0
  %950 = vmatprep.subr.bf16.mxu0 0
  %951 = vmatpush1.bf16.msra.mxu0 0
  %952 = vmatprep.subr.bf16.mxu0 0
  %953 = vmatpush1.bf16.msra.mxu0 0
  %954 = vmatprep.mubr.bf16.mxu0 0
  %955 = vmatmul.mubr.bf16.gmra.mrb[0].mxu0 %v831
  %v956 = vpop.f32.mrb[0].mxu0
  %v957 = vadd.f32 0.0, %v956
  %v958 = vpop.f32.mrb[0].mxu0
  %v959 = vpop.f32.mrb[0].mxu0
  %v960 = vpop.f32.mrb[0].mxu0
  %961 = vdwg.mxu0
  %v962 = vmax.f32 %v868, %v957
  %v963 = vpack.c.bf16 %v962, %v962
  %vm964 = vcmask 388096
  %965 = vst.msk [vmem:[%s9] sm:$0xf] %vm964, %v963
  // Predicated region
  $region38: #{convnet_forward.6} parent=0 // pred_check
    _
  $region39: #{convnet_forward.6} parent=0 // pred_check_branch
    %967 = sbr.rel (0) target = $region41
  $region40: #{convnet_forward.6} parent=0 // pred_region
    _
  $region41: #{convnet_forward.6} parent=0 // pred_fallthru
    _
  // Predicated region
  $region42: #{convnet_forward.6} parent=0 // pred_check
    _
  $region43: #{convnet_forward.6} parent=0 // pred_check_branch
    %969 = sbr.rel (0) target = $region45
  $region44: #{convnet_forward.6} parent=0 // pred_region
    _
  $region45: #{convnet_forward.6} parent=0 // pred_fallthru
    _

</llo_original>
